<compile_context>
chip_gen: v7x
topology: tpu7x:2x2x1
jax: 0.10.0
libtpu: 0.0.40
codegen_flags: <defaults>
</compile_context>

<pallas_src>
import jax
import jax.numpy as jnp
from jax.experimental import pallas as pl
from jax.experimental.pallas import tpu as pltpu


LANE = 128


def _round_up(x, m):
    return ((x + m - 1) // m) * m


def _cdiv(a, b):
    return (a + b - 1) // b


def _device_kind():
    try:
        return jax.devices()[0].device_kind.lower()
    except Exception:
        return ""


# ----------------------------- Pallas kernel ------------------------------- #
def _make_critic_kernel(mm_dtype, ew_dtype):
    """Builds the fused MLP kernel.

    mm_dtype: dtype fed to the MXU (bf16 by default, f32 for the reference path).
    ew_dtype: dtype for bias-add + tanh (bf16 on v6e/v7x, f32 on v5e/older).
    """

    def kernel(x_ref, w1_ref, b1_ref, w2_ref, b2_ref, w3_ref, b3_ref, o_ref):
        # obs arrives as raw f32; the cast to the MXU dtype is in-kernel VPU
        # work hidden under the matmul (no wrapper-side HBM pass).
        x = x_ref[...].astype(mm_dtype)

        # Hidden layer 1: MXU matmul with f32 accumulation, bias + tanh in
        # ew_dtype (bf16 halves EUP pushes / VALU ops on v6e/v7x).
        h = jnp.dot(x, w1_ref[...], preferred_element_type=jnp.float32)
        h = jnp.tanh(h.astype(ew_dtype) + b1_ref[...])

        # Hidden layer 2.
        h = jnp.dot(h.astype(mm_dtype), w2_ref[...],
                    preferred_element_type=jnp.float32)
        h = jnp.tanh(h.astype(ew_dtype) + b2_ref[...])

        # Output layer: the (tb, hp) @ (hp, 1) matvec is a VPU multiply against
        # the f32 (1, hp) w3 row + lane (XLU) reduce -- no MXU push/MRF pop for
        # 1/128 useful columns.  Written lane-major into the (1, tb) output
        # block so the store is a dense vst, not a masked partial store.
        v = jnp.sum(h.astype(jnp.float32) * w3_ref[...], axis=-1) + b3_ref[0]
        o_ref[0, :] = v.astype(o_ref.dtype)

    return kernel


# ------------------------------- wrapper ------------------------------------ #
def critic_forward(obs, params, *, batch_tile=None, use_bf16=True,
                   elementwise_bf16=None):
    """Pallas implementation of BootstrappedContinuousCritic.forward.

    obs: (N, ob_dim * group_size) float32
    params: (w1 (d,h), b1 (h,), w2 (h,h), b2 (h,), w3 (h,1), b3 (1,)) float32
    returns: (N,) float32  (the .squeeze() of the (N, 1) MLP output)
    """
    w1, b1, w2, b2, w3, b3 = params
    n, d = obs.shape
    h = w1.shape[1]

    kind = _device_kind()
    if elementwise_bf16 is None:
        # bf16 VPU/EUP exist on v6e / v7x only; v5e (and older) would pay
        # unpack overhead, so they keep the f32 elementwise path.
        elementwise_bf16 = ("v6" in kind) or ("v7" in kind)

    mm_dtype = jnp.bfloat16 if use_bf16 else jnp.float32
    ew_dtype = jnp.bfloat16 if (use_bf16 and elementwise_bf16) else jnp.float32

    # ---- weight preprocessing (done once offline in production) -------------
    # Zero-pad the hidden width to a lane multiple; exact math (tanh(0)=0
    # hidden units feed zero W2 rows and zero w3 entries).
    hp = _round_up(h, LANE)
    w1p = jnp.pad(w1, ((0, 0), (0, hp - h))).astype(mm_dtype)          # (d, hp)
    b1p = jnp.pad(b1, (0, hp - h)).reshape(1, hp).astype(ew_dtype)     # (1, hp)
    w2p = jnp.pad(w2, ((0, hp - h), (0, hp - h))).astype(mm_dtype)     # (hp, hp)
    b2p = jnp.pad(b2, (0, hp - h)).reshape(1, hp).astype(ew_dtype)     # (1, hp)
    w3row = jnp.pad(w3[:, 0], (0, hp - h)).reshape(1, hp).astype(jnp.float32)
    b3s = b3.reshape(1).astype(jnp.float32)                            # SMEM

    # ---- batch tiling --------------------------------------------------------
    # Per-tile MXU work is tiny, so grid-step overhead and the width of the
    # lane-dense store dominate: default to large tiles, clamped for small N.
    tb = batch_tile if batch_tile is not None else 4096
    tb = min(_round_up(max(tb, 1), LANE), _round_up(n, LANE))
    num_tiles = _cdiv(n, tb)

    # v7x shards the "parallel" grid axis across its 2 TensorCores: prefer an
    # even tile count when auto-sizing so neither core idles.
    if batch_tile is None and "v7" in kind and num_tiles > 1 and num_tiles % 2:
        tb_alt = _round_up(_cdiv(n, num_tiles + 1), LANE)
        if _cdiv(n, tb_alt) % 2 == 0:
            tb = tb_alt
            num_tiles = _cdiv(n, tb)

    # No wrapper-side pad of obs: grid = cdiv(n, tb); the tail block's OOB rows
    # read unspecified data (rows are independent, those outputs are sliced
    # off).  The output alloc IS padded so every (1, tb) store is full.
    n_pad = num_tiles * tb

    # ---- explicit VMEM budget (v7x: 64 MiB physical / 32 MiB default scoped) -
    d_lanes = _round_up(d, LANE)
    mm_bytes = jnp.dtype(mm_dtype).itemsize
    ew_bytes = jnp.dtype(ew_dtype).itemsize
    budget = (
        2 * tb * d_lanes * 4                                  # obs tile, dbl-buffered, lane-padded
        + 2 * tb * 4                                          # output tile, dbl-buffered
        + 2 * ((d + hp) * hp * mm_bytes + 2 * hp * ew_bytes + hp * 4)  # resident weights
        + 4 * tb * hp * 4                                     # activation temporaries (f32)
    )
    vmem_limit = int(min(max(2 * budget, 32 * 1024 * 1024), 48 * 1024 * 1024))

    rep = lambda i: (0, 0)   # weights/biases stay resident in VMEM
    # TODO(synk): for hp >= 1024 also set pipeline_mode=pl.Buffered(1) on the
    # weight BlockSpecs so resident weights are not double-buffered
    # (negligible at hp=128).

    kernel = _make_critic_kernel(mm_dtype, ew_dtype)

    out = pl.pallas_call(
        kernel,
        out_shape=jax.ShapeDtypeStruct((1, n_pad), jnp.float32),
        grid_spec=pltpu.PrefetchScalarGridSpec(
            num_scalar_prefetch=0,
            grid=(num_tiles,),
            in_specs=[
                pl.BlockSpec((tb, d), lambda i: (i, 0)),   # obs tile (streamed, raw f32)
                pl.BlockSpec((d, hp), rep),                # W1
                pl.BlockSpec((1, hp), rep),                # b1
                pl.BlockSpec((hp, hp), rep),               # W2
                pl.BlockSpec((1, hp), rep),                # b2
                pl.BlockSpec((1, hp), rep),                # w3 as a row
                pl.BlockSpec(memory_space=pltpu.MemorySpace.SMEM),  # b3 scalar
            ],
            out_specs=pl.BlockSpec((1, tb), lambda i: (0, i)),  # lane-dense row
        ),
        compiler_params=pltpu.CompilerParams(
            dimension_semantics=("parallel",),   # megacore-shardable on v7x
            vmem_limit_bytes=vmem_limit),
    )(obs, w1p, b1p, w2p, b2p, w3row, b3s)

    # nn.Module.forward does .squeeze() on the (N, 1) output -> (N,)
    return out[0, :n]


# -------------------------- parameter construction ------------------------- #
def init_critic_params(key, input_dim, size):
    """Deterministic init mimicking nn.Linear default (uniform +/- 1/sqrt(fan_in)).

    Weights are stored as (in, out) so the kernel computes y = x @ W + b.
    """
    keys = jax.random.split(key, 6)

    def linear(kw, kb, fan_in, fan_out):
        bound = 1.0 / jnp.sqrt(jnp.float32(fan_in))
        w = jax.random.uniform(kw, (fan_in, fan_out), jnp.float32, -bound, bound)
        b = jax.random.uniform(kb, (fan_out,), jnp.float32, -bound, bound)
        return w, b

    # n_layers = 2 hidden layers of width `size`, then Linear(size, 1).
    w1, b1 = linear(keys[0], keys[1], input_dim, size)
    w2, b2 = linear(keys[2], keys[3], size, size)
    w3, b3 = linear(keys[4], keys[5], size, 1)
    return (w1, b1, w2, b2, w3, b3)


# ------------------------------- reference --------------------------------- #
def critic_forward_ref(obs, params):
    w1, b1, w2, b2, w3, b3 = params
    h = jnp.tanh(obs @ w1 + b1)
    h = jnp.tanh(h @ w2 + b2)
    return jnp.squeeze(h @ w3 + b3[None, :], axis=-1)


# ---------------------------------- main ------------------------------------ #
if __name__ == "__main__":
    # agent_params-consistent small shapes:
    #   ob_dim = 4, group_size = 2 -> input_dim = 8
    #   critic_size = 32, n_critic_layers = 2
    # batch = 300 (not a tile multiple) exercises both the auto single-tile
    # path with an OOB tail and the explicit multi-tile path.
    ob_dim, group_size, size = 4, 2, 32
    input_dim = ob_dim * group_size
    n = 300

    key = jax.random.PRNGKey(0)
    k_obs, k_par = jax.random.split(key)

    obs = jax.random.normal(k_obs, (n, input_dim), jnp.float32)
    params = init_critic_params(k_par, input_dim, size)

    ref = critic_forward_ref(obs, params)

    # Production path: auto (large, clamped) tile, bf16 MXU, chip-dependent
    # bf16/f32 elementwise; single 384-row tile with a sliced-off OOB tail.
    out = jax.block_until_ready(critic_forward(obs, params))
    assert out.shape == (n,), out.shape
    assert jnp.max(jnp.abs(out - ref)) < 5e-2, jnp.max(jnp.abs(out - ref))

    # Multi-tile path: 3 grid steps, partial last input block, lane-dense
    # padded output sliced back to (n,).
    out_tiled = jax.block_until_ready(critic_forward(obs, params, batch_tile=128))
    assert out_tiled.shape == (n,), out_tiled.shape
    assert jnp.max(jnp.abs(out_tiled - ref)) < 5e-2, jnp.max(jnp.abs(out_tiled - ref))

    # f32 path for a tight numerical check of the kernel structure.
    out_f32 = jax.block_until_ready(
        critic_forward(obs, params, batch_tile=128, use_bf16=False))
    assert jnp.allclose(out_f32, ref, atol=1e-4, rtol=1e-4), \
        jnp.max(jnp.abs(out_f32 - ref))

    # TODO(synk): update()/get_v() (MSE loss, Adam step, target bootstrapping)
    # are training-time host logic, not part of the forward kernel.
    print("KERNEL_OK")
</pallas_src>

<mosaic_0001>
module attributes {stable_mosaic.version = 11 : i64} {
  func.func @kernel(%arg0: i32, %arg1: memref<384x8xf32, #tpu.memory_space<vmem>>, %arg2: memref<8x128xbf16, #tpu.memory_space<vmem>>, %arg3: memref<1x128xf32, #tpu.memory_space<vmem>>, %arg4: memref<128x128xbf16, #tpu.memory_space<vmem>>, %arg5: memref<1x128xf32, #tpu.memory_space<vmem>>, %arg6: memref<1x128xf32, #tpu.memory_space<vmem>>, %arg7: memref<1xf32, #tpu.memory_space<smem>>, %arg8: memref<1x384xf32, #tpu.memory_space<vmem>>) attributes {dimension_semantics = [#tpu.dimension_semantics<parallel>], iteration_bounds = array<i64: 1>, scalar_prefetch = 0 : i64, scratch_operands = 0 : i64, tpu.core_type = #tpu.core_type<tc>, window_params = [{transform_indices = @transform_0, window_bounds = array<i64: 384, 8>}, {pipeline_mode = #tpu.pipeline_mode<synchronous>, transform_indices = @transform_1, window_bounds = array<i64: 8, 128>}, {pipeline_mode = #tpu.pipeline_mode<synchronous>, transform_indices = @transform_2, window_bounds = array<i64: 1, 128>}, {pipeline_mode = #tpu.pipeline_mode<synchronous>, transform_indices = @transform_3, window_bounds = array<i64: 128, 128>}, {pipeline_mode = #tpu.pipeline_mode<synchronous>, transform_indices = @transform_4, window_bounds = array<i64: 1, 128>}, {pipeline_mode = #tpu.pipeline_mode<synchronous>, transform_indices = @transform_5, window_bounds = array<i64: 1, 128>}, {transform_indices = @transform_6, window_bounds = array<i64: 1>}, {transform_indices = @transform_7, window_bounds = array<i64: 1, 384>}]} {
    %c0 = arith.constant 0 : index
    %c0_0 = arith.constant 0 : index
    %0 = vector.load %arg1[%c0, %c0_0] : memref<384x8xf32, #tpu.memory_space<vmem>>, vector<384x8xf32>
    %1 = arith.truncf %0 : vector<384x8xf32> to vector<384x8xbf16>
    %c0_1 = arith.constant 0 : index
    %c0_2 = arith.constant 0 : index
    %2 = vector.load %arg2[%c0_1, %c0_2] : memref<8x128xbf16, #tpu.memory_space<vmem>>, vector<8x128xbf16>
    %cst = arith.constant dense<0.000000e+00> : vector<384x128xf32>
    %3 = tpu.matmul %1, %2, %cst {dimension_numbers = #tpu.dot_dimension_numbers<[1], [0], [0], [1], [0, 0, 1, 1], [], []>} : vector<384x8xbf16>, vector<8x128xbf16>, vector<384x128xf32> -> vector<384x128xf32>
    %c0_3 = arith.constant 0 : index
    %c0_4 = arith.constant 0 : index
    %4 = vector.load %arg3[%c0_3, %c0_4] : memref<1x128xf32, #tpu.memory_space<vmem>>, vector<1x128xf32>
    %5 = vector.broadcast %4 : vector<1x128xf32> to vector<384x128xf32>
    %6 = arith.addf %3, %5 : vector<384x128xf32>
    %7 = math.tanh %6 : vector<384x128xf32>
    %8 = arith.truncf %7 : vector<384x128xf32> to vector<384x128xbf16>
    %c0_5 = arith.constant 0 : index
    %c0_6 = arith.constant 0 : index
    %9 = vector.load %arg4[%c0_5, %c0_6] : memref<128x128xbf16, #tpu.memory_space<vmem>>, vector<128x128xbf16>
    %cst_7 = arith.constant dense<0.000000e+00> : vector<384x128xf32>
    %10 = tpu.matmul %8, %9, %cst_7 {dimension_numbers = #tpu.dot_dimension_numbers<[1], [0], [0], [1], [0, 0, 1, 1], [], []>} : vector<384x128xbf16>, vector<128x128xbf16>, vector<384x128xf32> -> vector<384x128xf32>
    %c0_8 = arith.constant 0 : index
    %c0_9 = arith.constant 0 : index
    %11 = vector.load %arg5[%c0_8, %c0_9] : memref<1x128xf32, #tpu.memory_space<vmem>>, vector<1x128xf32>
    %12 = vector.broadcast %11 : vector<1x128xf32> to vector<384x128xf32>
    %13 = arith.addf %10, %12 : vector<384x128xf32>
    %14 = math.tanh %13 : vector<384x128xf32>
    %c0_10 = arith.constant 0 : index
    %c0_11 = arith.constant 0 : index
    %15 = vector.load %arg6[%c0_10, %c0_11] : memref<1x128xf32, #tpu.memory_space<vmem>>, vector<1x128xf32>
    %16 = vector.broadcast %15 : vector<1x128xf32> to vector<384x128xf32>
    %17 = arith.mulf %14, %16 : vector<384x128xf32>
    %cst_12 = arith.constant dense<0.000000e+00> : vector<384xf32>
    %18 = vector.multi_reduction <add>, %17, %cst_12 [1] : vector<384x128xf32> to vector<384xf32>
    %c0_13 = arith.constant 0 : index
    %19 = memref.load %arg7[%c0_13] : memref<1xf32, #tpu.memory_space<smem>>
    %20 = vector.broadcast %19 : f32 to vector<384xf32>
    %21 = arith.addf %18, %20 : vector<384xf32>
    %c0_14 = arith.constant 0 : index
    %c0_15 = arith.constant 0 : index
    %22 = vector.load %arg8[%c0_14, %c0_15] : memref<1x384xf32, #tpu.memory_space<vmem>>, vector<1x384xf32>
    %23 = vector.shape_cast %22 : vector<1x384xf32> to vector<384xf32>
    %24 = vector.shape_cast %21 : vector<384xf32> to vector<1x384xf32>
    tpu.vector_store %arg8[%c0_14, %c0_15], %24 {strides = array<i32>} : memref<1x384xf32, #tpu.memory_space<vmem>>, vector<1x384xf32>,
    return
  }
  func.func @transform_0(%arg0: i32) -> (i32, i32) {
    %c0_i32 = arith.constant 0 : i32
    %c0_i32_0 = arith.constant 0 : i32
    return %arg0, %c0_i32 : i32, i32
  }
  func.func @transform_1(%arg0: i32) -> (i32, i32) {
    %c0_i32 = arith.constant 0 : i32
    %c0_i32_0 = arith.constant 0 : i32
    %c0_i32_1 = arith.constant 0 : i32
    return %c0_i32, %c0_i32_0 : i32, i32
  }
  func.func @transform_2(%arg0: i32) -> (i32, i32) {
    %c0_i32 = arith.constant 0 : i32
    %c0_i32_0 = arith.constant 0 : i32
    %c0_i32_1 = arith.constant 0 : i32
    return %c0_i32, %c0_i32_0 : i32, i32
  }
  func.func @transform_3(%arg0: i32) -> (i32, i32) {
    %c0_i32 = arith.constant 0 : i32
    %c0_i32_0 = arith.constant 0 : i32
    %c0_i32_1 = arith.constant 0 : i32
    return %c0_i32, %c0_i32_0 : i32, i32
  }
  func.func @transform_4(%arg0: i32) -> (i32, i32) {
    %c0_i32 = arith.constant 0 : i32
    %c0_i32_0 = arith.constant 0 : i32
    %c0_i32_1 = arith.constant 0 : i32
    return %c0_i32, %c0_i32_0 : i32, i32
  }
  func.func @transform_5(%arg0: i32) -> (i32, i32) {
    %c0_i32 = arith.constant 0 : i32
    %c0_i32_0 = arith.constant 0 : i32
    %c0_i32_1 = arith.constant 0 : i32
    return %c0_i32, %c0_i32_0 : i32, i32
  }
  func.func @transform_6(%arg0: i32) -> i32 {
    %c0_i32 = arith.constant 0 : i32
    %c0_i32_0 = arith.constant 0 : i32
    return %c0_i32 : i32
  }
  func.func @transform_7(%arg0: i32) -> (i32, i32) {
    %c0_i32 = arith.constant 0 : i32
    %c0_i32_0 = arith.constant 0 : i32
    return %c0_i32, %arg0 : i32, i32
  }
}

</mosaic_0001>

<llo_original>
// kernel: tpu_custom_call.1
$region0: #{tpu_custom_call.1}
  #allocation0 [shape = 'u32[]', space=smem, size = 0x4, offset = 0x4, fixed_abs, tag = 'smem constant byte address 0x4 - core index']
  #allocation1 [shape = 'u32[144,128]{1,0:T(1,128)}', space=vmem, size = 0x12000, scoped, tag = 'internal scratch']
  #allocation2 [shape = 'f32[1]{0:T(128)S(6)}', space=smem, size = 0x200, scoped, tag = 'scoped memory for tpu_custom_call.1']
  %s0 = inlined_call_operand.vmem [shape: f32[300,8], index: 0, kind: input, shape index: {}]
  %s1 = inlined_call_operand.vmem [shape: bf16[8,128], index: 1, kind: input, shape index: {}]
  %s2 = inlined_call_operand.vmem [shape: f32[1,128], index: 2, kind: input, shape index: {}]
  %s3 = inlined_call_operand.vmem [shape: bf16[128,128], index: 3, kind: input, shape index: {}]
  %s4 = inlined_call_operand.vmem [shape: f32[1,128], index: 4, kind: input, shape index: {}]
  %s5 = inlined_call_operand.vmem [shape: f32[1,128], index: 5, kind: input, shape index: {}]
  %s6 = inlined_call_operand.<no memory space> [shape: f32[1], index: 6, kind: input, shape index: {}]
  %s7 = inlined_call_operand.hbm [shape: f32[1,384], index: 7, kind: output, shape index: {}]
  %s8 = sld [smem:[#allocation0]]
  $region38: #{tpu_custom_call.1} parent=0
    _
  %s10 = ssub.s32 1, %s8
  %s11 = scalar_select 0, %s10, %s8
  %12 = sst [smem:[#allocation2]] %s6
  $region1: #{tpu_custom_call.1} parent=0
    #allocation3 [shape = 'u8[1536]{0}', space=vmem, size = 0x800, scoped, tag = 'output window, operand 0, single buffered']
    #allocation4 [shape = 's32[1]{0}', space=sflag, size = 0x4, scoped, tag = 'scoped memory for tpu_custom_call.1']
    %13 = vsyncpa [#allocation4], 0
    // Predicated region
    $region2: #{tpu_custom_call.1} parent=1 // pred_check
      _
    $region3: #{tpu_custom_call.1} parent=1 // pred_check_branch
      %15 = sbr.rel (0) target = $region5
    $region4: #{tpu_custom_call.1} parent=1 // pred_region
      _
    $region5: #{tpu_custom_call.1} parent=1 // pred_fallthru
      _
    // Predicated region
    $region6: #{tpu_custom_call.1} parent=1 // pred_check
      _
    $region7: #{tpu_custom_call.1} parent=1 // pred_check_branch
      %17 = sbr.rel (0) target = $region9
    $region8: #{tpu_custom_call.1} parent=1 // pred_region
      _
    $region9: #{tpu_custom_call.1} parent=1 // pred_fallthru
      _
    // Predicated region
    $region10: #{tpu_custom_call.1} parent=1 // pred_check
      _
    $region11: #{tpu_custom_call.1} parent=1 // pred_check_branch
      %19 = sbr.rel (0) target = $region13
    $region12: #{tpu_custom_call.1} parent=1 // pred_region
      _
    $region13: #{tpu_custom_call.1} parent=1 // pred_fallthru
      _
    // Predicated region
    $region14: #{tpu_custom_call.1} parent=1 // pred_check
      _
    $region15: #{tpu_custom_call.1} parent=1 // pred_check_branch
      %21 = sbr.rel (0) target = $region17
    $region16: #{tpu_custom_call.1} parent=1 // pred_region
      _
    $region17: #{tpu_custom_call.1} parent=1 // pred_fallthru
      _
    // Predicated region
    $region18: #{tpu_custom_call.1} parent=1 // pred_check
      _
    $region19: #{tpu_custom_call.1} parent=1 // pred_check_branch
      %23 = sbr.rel (0) target = $region21
    $region20: #{tpu_custom_call.1} parent=1 // pred_region
      _
    $region21: #{tpu_custom_call.1} parent=1 // pred_fallthru
      _
    // Predicated region
    $region22: #{tpu_custom_call.1} parent=1 // pred_check
      _
    $region23: #{tpu_custom_call.1} parent=1 // pred_check_branch
      %25 = sbr.rel (0) target = $region25
    $region24: #{tpu_custom_call.1} parent=1 // pred_region
      _
    $region25: #{tpu_custom_call.1} parent=1 // pred_fallthru
      _
    // Predicated region
    $region26: #{tpu_custom_call.1} parent=1 // pred_check
      _
    $region27: #{tpu_custom_call.1} parent=1 // pred_check_branch
      %27 = sbr.rel (0) target = $region29
    $region28: #{tpu_custom_call.1} parent=1 // pred_region
      _
    $region29: #{tpu_custom_call.1} parent=1 // pred_fallthru
      _
    %v29 = vld [vmem:[%s0] sm:$0xff]
    %v30 = vld [vmem:[%s0 + $0x8] sm:$0xff]
    %v31 = vld [vmem:[%s0 + $0x10] sm:$0xff]
    %v32 = vld [vmem:[%s0 + $0x18] sm:$0xff]
    %v33 = vld [vmem:[%s0 + $0x20] sm:$0xff]
    %v34 = vld [vmem:[%s0 + $0x28] sm:$0xff]
    %v35 = vld [vmem:[%s0 + $0x30] sm:$0xff]
    %v36 = vld [vmem:[%s0 + $0x38] sm:$0xff]
    %v37 = vld [vmem:[%s0 + $0x40] sm:$0xff]
    %v38 = vld [vmem:[%s0 + $0x48] sm:$0xff]
    %v39 = vld [vmem:[%s0 + $0x50] sm:$0xff]
    %v40 = vld [vmem:[%s0 + $0x58] sm:$0xff]
    %v41 = vld [vmem:[%s0 + $0x60] sm:$0xff]
    %v42 = vld [vmem:[%s0 + $0x68] sm:$0xff]
    %v43 = vld [vmem:[%s0 + $0x70] sm:$0xff]
    %v44 = vld [vmem:[%s0 + $0x78] sm:$0xff]
    %v45 = vld [vmem:[%s0 + $0x80] sm:$0xff]
    %v46 = vld [vmem:[%s0 + $0x88] sm:$0xff]
    %v47 = vld [vmem:[%s0 + $0x90] sm:$0xff]
    %v48 = vld [vmem:[%s0 + $0x98] sm:$0xff]
    %v49 = vld [vmem:[%s0 + $0xa0] sm:$0xff]
    %v50 = vld [vmem:[%s0 + $0xa8] sm:$0xff]
    %v51 = vld [vmem:[%s0 + $0xb0] sm:$0xff]
    %v52 = vld [vmem:[%s0 + $0xb8] sm:$0xff]
    %v53 = vld [vmem:[%s0 + $0xc0] sm:$0xff]
    %v54 = vld [vmem:[%s0 + $0xc8] sm:$0xff]
    %v55 = vld [vmem:[%s0 + $0xd0] sm:$0xff]
    %v56 = vld [vmem:[%s0 + $0xd8] sm:$0xff]
    %v57 = vld [vmem:[%s0 + $0xe0] sm:$0xff]
    %v58 = vld [vmem:[%s0 + $0xe8] sm:$0xff]
    %v59 = vld [vmem:[%s0 + $0xf0] sm:$0xff]
    %v60 = vld [vmem:[%s0 + $0xf8] sm:$0xff]
    %v61 = vld [vmem:[%s0 + $0x100] sm:$0xff]
    %v62 = vld [vmem:[%s0 + $0x108] sm:$0xff]
    %v63 = vld [vmem:[%s0 + $0x110] sm:$0xff]
    %v64 = vld [vmem:[%s0 + $0x118] sm:$0xff]
    %v65 = vld [vmem:[%s0 + $0x120] sm:$0xff]
    %v66 = vld [vmem:[%s0 + $0x128] sm:$0xff]
    %v67 = vld [vmem:[%s0 + $0x130] sm:$0xff]
    %v68 = vld [vmem:[%s0 + $0x138] sm:$0xff]
    %v69 = vld [vmem:[%s0 + $0x140] sm:$0xff]
    %v70 = vld [vmem:[%s0 + $0x148] sm:$0xff]
    %v71 = vld [vmem:[%s0 + $0x150] sm:$0xff]
    %v72 = vld [vmem:[%s0 + $0x158] sm:$0xff]
    %v73 = vld [vmem:[%s0 + $0x160] sm:$0xff]
    %v74 = vld [vmem:[%s0 + $0x168] sm:$0xff]
    %v75 = vld [vmem:[%s0 + $0x170] sm:$0xff]
    %v76 = vld [vmem:[%s0 + $0x178] sm:$0xff]
    %v77 = vpack.c.bf16 %v30, %v29
    %v78 = vpack.c.bf16 %v32, %v31
    %v79 = vpack.c.bf16 %v34, %v33
    %v80 = vpack.c.bf16 %v36, %v35
    %v81 = vpack.c.bf16 %v38, %v37
    %v82 = vpack.c.bf16 %v40, %v39
    %v83 = vpack.c.bf16 %v42, %v41
    %v84 = vpack.c.bf16 %v44, %v43
    %v85 = vpack.c.bf16 %v46, %v45
    %v86 = vpack.c.bf16 %v48, %v47
    %v87 = vpack.c.bf16 %v50, %v49
    %v88 = vpack.c.bf16 %v52, %v51
    %v89 = vpack.c.bf16 %v54, %v53
    %v90 = vpack.c.bf16 %v56, %v55
    %v91 = vpack.c.bf16 %v58, %v57
    %v92 = vpack.c.bf16 %v60, %v59
    %v93 = vpack.c.bf16 %v62, %v61
    %v94 = vpack.c.bf16 %v64, %v63
    %v95 = vpack.c.bf16 %v66, %v65
    %v96 = vpack.c.bf16 %v68, %v67
    %v97 = vpack.c.bf16 %v70, %v69
    %v98 = vpack.c.bf16 %v72, %v71
    %v99 = vpack.c.bf16 %v74, %v73
    %v100 = vpack.c.bf16 %v76, %v75
    %v101 = vld [vmem:[%s1] sm:$0xf]
    %v102 = vld [vmem:[%s2] sm:$0x1]
    %v104 = vlaneseq
    %v105 = vshrl.u32 %v104, 7
    %v106 = vsub.s32 0, %v105
    %v107 = vrot.slane %v102, %v106
    %vm109 = vcmask 64512
    %v111 = vsel %vm109, %v77, 0
    %v114 = vsel %vm109, %v78, 0
    %v117 = vsel %vm109, %v79, 0
    %v120 = vsel %vm109, %v80, 0
    %v123 = vsel %vm109, %v81, 0
    %v126 = vsel %vm109, %v82, 0
    %v129 = vsel %vm109, %v83, 0
    %v132 = vsel %vm109, %v84, 0
    %v135 = vsel %vm109, %v85, 0
    %v138 = vsel %vm109, %v86, 0
    %v141 = vsel %vm109, %v87, 0
    %v144 = vsel %vm109, %v88, 0
    %v147 = vsel %vm109, %v89, 0
    %v150 = vsel %vm109, %v90, 0
    %v153 = vsel %vm109, %v91, 0
    %v156 = vsel %vm109, %v92, 0
    %v159 = vsel %vm109, %v93, 0
    %v162 = vsel %vm109, %v94, 0
    %v165 = vsel %vm109, %v95, 0
    %v168 = vsel %vm109, %v96, 0
    %v171 = vsel %vm109, %v97, 0
    %v174 = vsel %vm109, %v98, 0
    %v177 = vsel %vm109, %v99, 0
    %v180 = vsel %vm109, %v100, 0
    %vm182 = vcmask 1043456
    %v184 = vsel %vm182, %v101, 0
    %186 = vmatprep.subr.bf16.mxu0 0
    %187 = vmatpush1.bf16.msra.mxu0 %v184
    %188 = vmatprep.subr.bf16.mxu0 0
    %189 = vmatpush1.bf16.msra.mxu0 0
    %190 = vmatprep.subr.bf16.mxu0 0
    %191 = vmatpush1.bf16.msra.mxu0 0
    %192 = vmatprep.subr.bf16.mxu0 0
    %193 = vmatpush1.bf16.msra.mxu0 0
    %194 = vmatprep.subr.bf16.mxu0 0
    %195 = vmatpush1.bf16.msra.mxu0 0
    %196 = vmatprep.subr.bf16.mxu0 0
    %197 = vmatpush1.bf16.msra.mxu0 0
    %198 = vmatprep.subr.bf16.mxu0 0
    %199 = vmatpush1.bf16.msra.mxu0 0
    %200 = vmatprep.subr.bf16.mxu0 0
    %201 = vmatpush1.bf16.msra.mxu0 0
    %202 = vmatprep.subr.bf16.mxu0 0
    %203 = vmatpush1.bf16.msra.mxu0 0
    %204 = vmatprep.subr.bf16.mxu0 0
    %205 = vmatpush1.bf16.msra.mxu0 0
    %206 = vmatprep.subr.bf16.mxu0 0
    %207 = vmatpush1.bf16.msra.mxu0 0
    %208 = vmatprep.subr.bf16.mxu0 0
    %209 = vmatpush1.bf16.msra.mxu0 0
    %210 = vmatprep.subr.bf16.mxu0 0
    %211 = vmatpush1.bf16.msra.mxu0 0
    %212 = vmatprep.subr.bf16.mxu0 0
    %213 = vmatpush1.bf16.msra.mxu0 0
    %214 = vmatprep.subr.bf16.mxu0 0
    %215 = vmatpush1.bf16.msra.mxu0 0
    %216 = vmatprep.subr.bf16.mxu0 0
    %217 = vmatpush1.bf16.msra.mxu0 0
    %218 = vmatprep.mubr.bf16.mxu0 0
    %219 = vmatmul.mubr.bf16.gmra.mrb[0].mxu0 %v111
    %v220 = vpop.f32.mrb[0].mxu0
    %v221 = vadd.f32 %v107, %v220
    %v222 = vpop.f32.mrb[0].mxu0
    %v223 = vpop.f32.mrb[0].mxu0
    %v224 = vadd.f32 %v107, %v223
    %v225 = vpop.f32.mrb[0].mxu0
    %226 = vmatprep.mubr.bf16.mxu0 0
    %227 = vmatmul.mubr.bf16.gmra.mrb[0].mxu0 %v114
    %v228 = vpop.f32.mrb[0].mxu0
    %v229 = vadd.f32 %v107, %v228
    %v230 = vpop.f32.mrb[0].mxu0
    %v231 = vpop.f32.mrb[0].mxu0
    %v232 = vadd.f32 %v107, %v231
    %v233 = vpop.f32.mrb[0].mxu0
    %234 = vmatprep.mubr.bf16.mxu0 0
    %235 = vmatmul.mubr.bf16.gmra.mrb[0].mxu0 %v117
    %v236 = vpop.f32.mrb[0].mxu0
    %v237 = vadd.f32 %v107, %v236
    %v238 = vpop.f32.mrb[0].mxu0
    %v239 = vpop.f32.mrb[0].mxu0
    %v240 = vadd.f32 %v107, %v239
    %v241 = vpop.f32.mrb[0].mxu0
    %242 = vmatprep.mubr.bf16.mxu0 0
    %243 = vmatmul.mubr.bf16.gmra.mrb[0].mxu0 %v120
    %v244 = vpop.f32.mrb[0].mxu0
    %v245 = vadd.f32 %v107, %v244
    %v246 = vpop.f32.mrb[0].mxu0
    %v247 = vpop.f32.mrb[0].mxu0
    %v248 = vadd.f32 %v107, %v247
    %v249 = vpop.f32.mrb[0].mxu0
    %250 = vmatprep.mubr.bf16.mxu0 0
    %251 = vmatmul.mubr.bf16.gmra.mrb[0].mxu0 %v123
    %v252 = vpop.f32.mrb[0].mxu0
    %v253 = vadd.f32 %v107, %v252
    %v254 = vpop.f32.mrb[0].mxu0
    %v255 = vpop.f32.mrb[0].mxu0
    %v256 = vadd.f32 %v107, %v255
    %v257 = vpop.f32.mrb[0].mxu0
    %258 = vmatprep.mubr.bf16.mxu0 0
    %259 = vmatmul.mubr.bf16.gmra.mrb[0].mxu0 %v126
    %v260 = vpop.f32.mrb[0].mxu0
    %v261 = vadd.f32 %v107, %v260
    %v262 = vpop.f32.mrb[0].mxu0
    %v263 = vpop.f32.mrb[0].mxu0
    %v264 = vadd.f32 %v107, %v263
    %v265 = vpop.f32.mrb[0].mxu0
    %266 = vmatprep.mubr.bf16.mxu0 0
    %267 = vmatmul.mubr.bf16.gmra.mrb[0].mxu0 %v129
    %v268 = vpop.f32.mrb[0].mxu0
    %v269 = vadd.f32 %v107, %v268
    %v270 = vpop.f32.mrb[0].mxu0
    %v271 = vpop.f32.mrb[0].mxu0
    %v272 = vadd.f32 %v107, %v271
    %v273 = vpop.f32.mrb[0].mxu0
    %274 = vmatprep.mubr.bf16.mxu0 0
    %275 = vmatmul.mubr.bf16.gmra.mrb[0].mxu0 %v132
    %v276 = vpop.f32.mrb[0].mxu0
    %v277 = vadd.f32 %v107, %v276
    %v278 = vpop.f32.mrb[0].mxu0
    %v279 = vpop.f32.mrb[0].mxu0
    %v280 = vadd.f32 %v107, %v279
    %v281 = vpop.f32.mrb[0].mxu0
    %282 = vmatprep.mubr.bf16.mxu0 0
    %283 = vmatmul.mubr.bf16.gmra.mrb[0].mxu0 %v135
    %v284 = vpop.f32.mrb[0].mxu0
    %v285 = vadd.f32 %v107, %v284
    %v286 = vpop.f32.mrb[0].mxu0
    %v287 = vpop.f32.mrb[0].mxu0
    %v288 = vadd.f32 %v107, %v287
    %v289 = vpop.f32.mrb[0].mxu0
    %290 = vmatprep.mubr.bf16.mxu0 0
    %291 = vmatmul.mubr.bf16.gmra.mrb[0].mxu0 %v138
    %v292 = vpop.f32.mrb[0].mxu0
    %v293 = vadd.f32 %v107, %v292
    %v294 = vpop.f32.mrb[0].mxu0
    %v295 = vpop.f32.mrb[0].mxu0
    %v296 = vadd.f32 %v107, %v295
    %v297 = vpop.f32.mrb[0].mxu0
    %298 = vmatprep.mubr.bf16.mxu0 0
    %299 = vmatmul.mubr.bf16.gmra.mrb[0].mxu0 %v141
    %v300 = vpop.f32.mrb[0].mxu0
    %v301 = vadd.f32 %v107, %v300
    %v302 = vpop.f32.mrb[0].mxu0
    %v303 = vpop.f32.mrb[0].mxu0
    %v304 = vadd.f32 %v107, %v303
    %v305 = vpop.f32.mrb[0].mxu0
    %306 = vmatprep.mubr.bf16.mxu0 0
    %307 = vmatmul.mubr.bf16.gmra.mrb[0].mxu0 %v144
    %v308 = vpop.f32.mrb[0].mxu0
    %v309 = vadd.f32 %v107, %v308
    %v310 = vpop.f32.mrb[0].mxu0
    %v311 = vpop.f32.mrb[0].mxu0
    %v312 = vadd.f32 %v107, %v311
    %v313 = vpop.f32.mrb[0].mxu0
    %314 = vmatprep.mubr.bf16.mxu0 0
    %315 = vmatmul.mubr.bf16.gmra.mrb[0].mxu0 %v147
    %v316 = vpop.f32.mrb[0].mxu0
    %v317 = vadd.f32 %v107, %v316
    %v318 = vpop.f32.mrb[0].mxu0
    %v319 = vpop.f32.mrb[0].mxu0
    %v320 = vadd.f32 %v107, %v319
    %v321 = vpop.f32.mrb[0].mxu0
    %322 = vmatprep.mubr.bf16.mxu0 0
    %323 = vmatmul.mubr.bf16.gmra.mrb[0].mxu0 %v150
    %v324 = vpop.f32.mrb[0].mxu0
    %v325 = vadd.f32 %v107, %v324
    %v326 = vpop.f32.mrb[0].mxu0
    %v327 = vpop.f32.mrb[0].mxu0
    %v328 = vadd.f32 %v107, %v327
    %v329 = vpop.f32.mrb[0].mxu0
    %330 = vmatprep.mubr.bf16.mxu0 0
    %331 = vmatmul.mubr.bf16.gmra.mrb[0].mxu0 %v153
    %v332 = vpop.f32.mrb[0].mxu0
    %v333 = vadd.f32 %v107, %v332
    %v334 = vpop.f32.mrb[0].mxu0
    %v335 = vpop.f32.mrb[0].mxu0
    %v336 = vadd.f32 %v107, %v335
    %v337 = vpop.f32.mrb[0].mxu0
    %338 = vmatprep.mubr.bf16.mxu0 0
    %339 = vmatmul.mubr.bf16.gmra.mrb[0].mxu0 %v156
    %v340 = vpop.f32.mrb[0].mxu0
    %v341 = vadd.f32 %v107, %v340
    %v342 = vpop.f32.mrb[0].mxu0
    %v343 = vpop.f32.mrb[0].mxu0
    %v344 = vadd.f32 %v107, %v343
    %v345 = vpop.f32.mrb[0].mxu0
    %346 = vmatprep.mubr.bf16.mxu0 0
    %347 = vmatmul.mubr.bf16.gmra.mrb[0].mxu0 %v159
    %v348 = vpop.f32.mrb[0].mxu0
    %v349 = vadd.f32 %v107, %v348
    %v350 = vpop.f32.mrb[0].mxu0
    %v351 = vpop.f32.mrb[0].mxu0
    %v352 = vadd.f32 %v107, %v351
    %v353 = vpop.f32.mrb[0].mxu0
    %354 = vmatprep.mubr.bf16.mxu0 0
    %355 = vmatmul.mubr.bf16.gmra.mrb[0].mxu0 %v162
    %v356 = vpop.f32.mrb[0].mxu0
    %v357 = vadd.f32 %v107, %v356
    %v358 = vpop.f32.mrb[0].mxu0
    %v359 = vpop.f32.mrb[0].mxu0
    %v360 = vadd.f32 %v107, %v359
    %v361 = vpop.f32.mrb[0].mxu0
    %362 = vmatprep.mubr.bf16.mxu0 0
    %363 = vmatmul.mubr.bf16.gmra.mrb[0].mxu0 %v165
    %v364 = vpop.f32.mrb[0].mxu0
    %v365 = vadd.f32 %v107, %v364
    %v366 = vpop.f32.mrb[0].mxu0
    %v367 = vpop.f32.mrb[0].mxu0
    %v368 = vadd.f32 %v107, %v367
    %v369 = vpop.f32.mrb[0].mxu0
    %370 = vmatprep.mubr.bf16.mxu0 0
    %371 = vmatmul.mubr.bf16.gmra.mrb[0].mxu0 %v168
    %v372 = vpop.f32.mrb[0].mxu0
    %v373 = vadd.f32 %v107, %v372
    %v374 = vpop.f32.mrb[0].mxu0
    %v375 = vpop.f32.mrb[0].mxu0
    %v376 = vadd.f32 %v107, %v375
    %v377 = vpop.f32.mrb[0].mxu0
    %378 = vmatprep.mubr.bf16.mxu0 0
    %379 = vmatmul.mubr.bf16.gmra.mrb[0].mxu0 %v171
    %v380 = vpop.f32.mrb[0].mxu0
    %v381 = vadd.f32 %v107, %v380
    %v382 = vpop.f32.mrb[0].mxu0
    %v383 = vpop.f32.mrb[0].mxu0
    %v384 = vadd.f32 %v107, %v383
    %v385 = vpop.f32.mrb[0].mxu0
    %386 = vmatprep.mubr.bf16.mxu0 0
    %387 = vmatmul.mubr.bf16.gmra.mrb[0].mxu0 %v174
    %v388 = vpop.f32.mrb[0].mxu0
    %v389 = vadd.f32 %v107, %v388
    %v390 = vpop.f32.mrb[0].mxu0
    %v391 = vpop.f32.mrb[0].mxu0
    %v392 = vadd.f32 %v107, %v391
    %v393 = vpop.f32.mrb[0].mxu0
    %394 = vmatprep.mubr.bf16.mxu0 0
    %395 = vmatmul.mubr.bf16.gmra.mrb[0].mxu0 %v177
    %v396 = vpop.f32.mrb[0].mxu0
    %v397 = vadd.f32 %v107, %v396
    %v398 = vpop.f32.mrb[0].mxu0
    %v399 = vpop.f32.mrb[0].mxu0
    %v400 = vadd.f32 %v107, %v399
    %v401 = vpop.f32.mrb[0].mxu0
    %402 = vmatprep.mubr.bf16.mxu0 0
    %403 = vmatmul.mubr.bf16.gmra.mrb[0].mxu0 %v180
    %v404 = vpop.f32.mrb[0].mxu0
    %v405 = vadd.f32 %v107, %v404
    %v406 = vpop.f32.mrb[0].mxu0
    %v407 = vpop.f32.mrb[0].mxu0
    %v408 = vadd.f32 %v107, %v407
    %v409 = vpop.f32.mrb[0].mxu0
    %410 = vdwg.mxu0
    %v411 = vtanh.pop %v221
    %v412 = vtanh.pop %v224
    %v413 = vtanh.pop %v229
    %v414 = vtanh.pop %v232
    %v415 = vtanh.pop %v237
    %v416 = vtanh.pop %v240
    %v417 = vtanh.pop %v245
    %v418 = vtanh.pop %v248
    %v419 = vtanh.pop %v253
    %v420 = vtanh.pop %v256
    %v421 = vtanh.pop %v261
    %v422 = vtanh.pop %v264
    %v423 = vtanh.pop %v269
    %v424 = vtanh.pop %v272
    %v425 = vtanh.pop %v277
    %v426 = vtanh.pop %v280
    %v427 = vtanh.pop %v285
    %v428 = vtanh.pop %v288
    %v429 = vtanh.pop %v293
    %v430 = vtanh.pop %v296
    %v431 = vtanh.pop %v301
    %v432 = vtanh.pop %v304
    %v433 = vtanh.pop %v309
    %v434 = vtanh.pop %v312
    %v435 = vtanh.pop %v317
    %v436 = vtanh.pop %v320
    %v437 = vtanh.pop %v325
    %v438 = vtanh.pop %v328
    %v439 = vtanh.pop %v333
    %v440 = vtanh.pop %v336
    %v441 = vtanh.pop %v341
    %v442 = vtanh.pop %v344
    %v443 = vtanh.pop %v349
    %v444 = vtanh.pop %v352
    %v445 = vtanh.pop %v357
    %v446 = vtanh.pop %v360
    %v447 = vtanh.pop %v365
    %v448 = vtanh.pop %v368
    %v449 = vtanh.pop %v373
    %v450 = vtanh.pop %v376
    %v451 = vtanh.pop %v381
    %v452 = vtanh.pop %v384
    %v453 = vtanh.pop %v389
    %v454 = vtanh.pop %v392
    %v455 = vtanh.pop %v397
    %v456 = vtanh.pop %v400
    %v457 = vtanh.pop %v405
    %v458 = vtanh.pop %v408
    %v459 = vpack.c.bf16 %v412, %v411
    %v460 = vpack.c.bf16 %v414, %v413
    %v461 = vpack.c.bf16 %v416, %v415
    %v462 = vpack.c.bf16 %v418, %v417
    %v463 = vpack.c.bf16 %v420, %v419
    %v464 = vpack.c.bf16 %v422, %v421
    %v465 = vpack.c.bf16 %v424, %v423
    %v466 = vpack.c.bf16 %v426, %v425
    %v467 = vpack.c.bf16 %v428, %v427
    %v468 = vpack.c.bf16 %v430, %v429
    %v469 = vpack.c.bf16 %v432, %v431
    %v470 = vpack.c.bf16 %v434, %v433
    %v471 = vpack.c.bf16 %v436, %v435
    %v472 = vpack.c.bf16 %v438, %v437
    %v473 = vpack.c.bf16 %v440, %v439
    %v474 = vpack.c.bf16 %v442, %v441
    %v475 = vpack.c.bf16 %v444, %v443
    %v476 = vpack.c.bf16 %v446, %v445
    %v477 = vpack.c.bf16 %v448, %v447
    %v478 = vpack.c.bf16 %v450, %v449
    %v479 = vpack.c.bf16 %v452, %v451
    %v480 = vpack.c.bf16 %v454, %v453
    %v481 = vpack.c.bf16 %v456, %v455
    %v482 = vpack.c.bf16 %v458, %v457
    %v483 = vld [vmem:[%s3] sm:$0xf]
    %v484 = vld [vmem:[%s3 + $0x4] sm:$0xf]
    %v485 = vld [vmem:[%s3 + $0x8] sm:$0xf]
    %v486 = vld [vmem:[%s3 + $0xc] sm:$0xf]
    %v487 = vld [vmem:[%s3 + $0x10] sm:$0xf]
    %v488 = vld [vmem:[%s3 + $0x14] sm:$0xf]
    %v489 = vld [vmem:[%s3 + $0x18] sm:$0xf]
    %v490 = vld [vmem:[%s3 + $0x1c] sm:$0xf]
    %v491 = vld [vmem:[%s3 + $0x20] sm:$0xf]
    %v492 = vld [vmem:[%s3 + $0x24] sm:$0xf]
    %v493 = vld [vmem:[%s3 + $0x28] sm:$0xf]
    %v494 = vld [vmem:[%s3 + $0x2c] sm:$0xf]
    %v495 = vld [vmem:[%s3 + $0x30] sm:$0xf]
    %v496 = vld [vmem:[%s3 + $0x34] sm:$0xf]
    %v497 = vld [vmem:[%s3 + $0x38] sm:$0xf]
    %v498 = vld [vmem:[%s3 + $0x3c] sm:$0xf]
    %v499 = vld [vmem:[%s4] sm:$0x1]
    %v501 = vlaneseq
    %v502 = vshrl.u32 %v501, 7
    %v503 = vsub.s32 0, %v502
    %v504 = vrot.slane %v499, %v503
    %v522 = vunpack.c.l.b16 %v483
    %v523 = vunpack.c.l.b16 %v484
    %v524 = vunpack.c.l.b16 %v485
    %v525 = vunpack.c.l.b16 %v486
    %v526 = vunpack.c.l.b16 %v487
    %v527 = vunpack.c.l.b16 %v488
    %v528 = vunpack.c.l.b16 %v489
    %v529 = vunpack.c.l.b16 %v490
    %v530 = vunpack.c.l.b16 %v491
    %v531 = vunpack.c.l.b16 %v492
    %v532 = vunpack.c.l.b16 %v493
    %v533 = vunpack.c.l.b16 %v494
    %v534 = vunpack.c.l.b16 %v495
    %v535 = vunpack.c.l.b16 %v496
    %v536 = vunpack.c.l.b16 %v497
    %v537 = vunpack.c.l.b16 %v498
    %v538 = vpack.c.b16 %v523, %v522
    %v539 = vpack.c.b16 %v525, %v524
    %v540 = vpack.c.b16 %v527, %v526
    %v541 = vpack.c.b16 %v529, %v528
    %v542 = vpack.c.b16 %v531, %v530
    %v543 = vpack.c.b16 %v533, %v532
    %v544 = vpack.c.b16 %v535, %v534
    %v545 = vpack.c.b16 %v537, %v536
    %554 = vmatprep.subr.bf16.mxu0 0
    %555 = vmatpush1.bf16.msra.mxu0 %v538
    %556 = vmatprep.subr.bf16.mxu0 0
    %557 = vmatpush1.bf16.msra.mxu0 %v539
    %558 = vmatprep.subr.bf16.mxu0 0
    %559 = vmatpush1.bf16.msra.mxu0 %v540
    %560 = vmatprep.subr.bf16.mxu0 0
    %561 = vmatpush1.bf16.msra.mxu0 %v541
    %562 = vmatprep.subr.bf16.mxu0 0
    %563 = vmatpush1.bf16.msra.mxu0 %v542
    %564 = vmatprep.subr.bf16.mxu0 0
    %565 = vmatpush1.bf16.msra.mxu0 %v543
    %566 = vmatprep.subr.bf16.mxu0 0
    %567 = vmatpush1.bf16.msra.mxu0 %v544
    %568 = vmatprep.subr.bf16.mxu0 0
    %569 = vmatpush1.bf16.msra.mxu0 %v545
    %570 = vmatprep.subr.bf16.mxu0 0
    %571 = vmatpush1.bf16.msra.mxu0 0
    %572 = vmatprep.subr.bf16.mxu0 0
    %573 = vmatpush1.bf16.msra.mxu0 0
    %574 = vmatprep.subr.bf16.mxu0 0
    %575 = vmatpush1.bf16.msra.mxu0 0
    %576 = vmatprep.subr.bf16.mxu0 0
    %577 = vmatpush1.bf16.msra.mxu0 0
    %578 = vmatprep.subr.bf16.mxu0 0
    %579 = vmatpush1.bf16.msra.mxu0 0
    %580 = vmatprep.subr.bf16.mxu0 0
    %581 = vmatpush1.bf16.msra.mxu0 0
    %582 = vmatprep.subr.bf16.mxu0 0
    %583 = vmatpush1.bf16.msra.mxu0 0
    %584 = vmatprep.subr.bf16.mxu0 0
    %585 = vmatpush1.bf16.msra.mxu0 0
    %586 = vmatprep.mubr.bf16.mxu0 0
    %587 = vmatmul.mubr.bf16.gmra.mrb[0].mxu0 %v459
    %v588 = vpop.f32.mrb[0].mxu0
    %v589 = vadd.f32 %v504, %v588
    %v590 = vpop.f32.mrb[0].mxu0
    %v591 = vpop.f32.mrb[0].mxu0
    %v592 = vadd.f32 %v504, %v591
    %v593 = vpop.f32.mrb[0].mxu0
    %594 = vmatprep.mubr.bf16.mxu0 0
    %595 = vmatmul.mubr.bf16.gmra.mrb[0].mxu0 %v460
    %v596 = vpop.f32.mrb[0].mxu0
    %v597 = vadd.f32 %v504, %v596
    %v598 = vpop.f32.mrb[0].mxu0
    %v599 = vpop.f32.mrb[0].mxu0
    %v600 = vadd.f32 %v504, %v599
    %v601 = vpop.f32.mrb[0].mxu0
    %602 = vmatprep.mubr.bf16.mxu0 0
    %603 = vmatmul.mubr.bf16.gmra.mrb[0].mxu0 %v461
    %v604 = vpop.f32.mrb[0].mxu0
    %v605 = vadd.f32 %v504, %v604
    %v606 = vpop.f32.mrb[0].mxu0
    %v607 = vpop.f32.mrb[0].mxu0
    %v608 = vadd.f32 %v504, %v607
    %v609 = vpop.f32.mrb[0].mxu0
    %610 = vmatprep.mubr.bf16.mxu0 0
    %611 = vmatmul.mubr.bf16.gmra.mrb[0].mxu0 %v462
    %v612 = vpop.f32.mrb[0].mxu0
    %v613 = vadd.f32 %v504, %v612
    %v614 = vpop.f32.mrb[0].mxu0
    %v615 = vpop.f32.mrb[0].mxu0
    %v616 = vadd.f32 %v504, %v615
    %v617 = vpop.f32.mrb[0].mxu0
    %618 = vmatprep.mubr.bf16.mxu0 0
    %619 = vmatmul.mubr.bf16.gmra.mrb[0].mxu0 %v463
    %v620 = vpop.f32.mrb[0].mxu0
    %v621 = vadd.f32 %v504, %v620
    %v622 = vpop.f32.mrb[0].mxu0
    %v623 = vpop.f32.mrb[0].mxu0
    %v624 = vadd.f32 %v504, %v623
    %v625 = vpop.f32.mrb[0].mxu0
    %626 = vmatprep.mubr.bf16.mxu0 0
    %627 = vmatmul.mubr.bf16.gmra.mrb[0].mxu0 %v464
    %v628 = vpop.f32.mrb[0].mxu0
    %v629 = vadd.f32 %v504, %v628
    %v630 = vpop.f32.mrb[0].mxu0
    %v631 = vpop.f32.mrb[0].mxu0
    %v632 = vadd.f32 %v504, %v631
    %v633 = vpop.f32.mrb[0].mxu0
    %634 = vmatprep.mubr.bf16.mxu0 0
    %635 = vmatmul.mubr.bf16.gmra.mrb[0].mxu0 %v465
    %v636 = vpop.f32.mrb[0].mxu0
    %v637 = vadd.f32 %v504, %v636
    %v638 = vpop.f32.mrb[0].mxu0
    %v639 = vpop.f32.mrb[0].mxu0
    %v640 = vadd.f32 %v504, %v639
    %v641 = vpop.f32.mrb[0].mxu0
    %642 = vmatprep.mubr.bf16.mxu0 0
    %643 = vmatmul.mubr.bf16.gmra.mrb[0].mxu0 %v466
    %v644 = vpop.f32.mrb[0].mxu0
    %v645 = vadd.f32 %v504, %v644
    %v646 = vpop.f32.mrb[0].mxu0
    %v647 = vpop.f32.mrb[0].mxu0
    %v648 = vadd.f32 %v504, %v647
    %v649 = vpop.f32.mrb[0].mxu0
    %650 = vmatprep.mubr.bf16.mxu0 0
    %651 = vmatmul.mubr.bf16.gmra.mrb[0].mxu0 %v467
    %v652 = vpop.f32.mrb[0].mxu0
    %v653 = vadd.f32 %v504, %v652
    %v654 = vpop.f32.mrb[0].mxu0
    %v655 = vpop.f32.mrb[0].mxu0
    %v656 = vadd.f32 %v504, %v655
    %v657 = vpop.f32.mrb[0].mxu0
    %658 = vmatprep.mubr.bf16.mxu0 0
    %659 = vmatmul.mubr.bf16.gmra.mrb[0].mxu0 %v468
    %v660 = vpop.f32.mrb[0].mxu0
    %v661 = vadd.f32 %v504, %v660
    %v662 = vpop.f32.mrb[0].mxu0
    %v663 = vpop.f32.mrb[0].mxu0
    %v664 = vadd.f32 %v504, %v663
    %v665 = vpop.f32.mrb[0].mxu0
    %666 = vmatprep.mubr.bf16.mxu0 0
    %667 = vmatmul.mubr.bf16.gmra.mrb[0].mxu0 %v469
    %v668 = vpop.f32.mrb[0].mxu0
    %v669 = vadd.f32 %v504, %v668
    %v670 = vpop.f32.mrb[0].mxu0
    %v671 = vpop.f32.mrb[0].mxu0
    %v672 = vadd.f32 %v504, %v671
    %v673 = vpop.f32.mrb[0].mxu0
    %674 = vmatprep.mubr.bf16.mxu0 0
    %675 = vmatmul.mubr.bf16.gmra.mrb[0].mxu0 %v470
    %v676 = vpop.f32.mrb[0].mxu0
    %v677 = vadd.f32 %v504, %v676
    %v678 = vpop.f32.mrb[0].mxu0
    %v679 = vpop.f32.mrb[0].mxu0
    %v680 = vadd.f32 %v504, %v679
    %v681 = vpop.f32.mrb[0].mxu0
    %682 = vmatprep.mubr.bf16.mxu0 0
    %683 = vmatmul.mubr.bf16.gmra.mrb[0].mxu0 %v471
    %v684 = vpop.f32.mrb[0].mxu0
    %v685 = vadd.f32 %v504, %v684
    %v686 = vpop.f32.mrb[0].mxu0
    %v687 = vpop.f32.mrb[0].mxu0
    %v688 = vadd.f32 %v504, %v687
    %v689 = vpop.f32.mrb[0].mxu0
    %690 = vmatprep.mubr.bf16.mxu0 0
    %691 = vmatmul.mubr.bf16.gmra.mrb[0].mxu0 %v472
    %v692 = vpop.f32.mrb[0].mxu0
    %v693 = vadd.f32 %v504, %v692
    %v694 = vpop.f32.mrb[0].mxu0
    %v695 = vpop.f32.mrb[0].mxu0
    %v696 = vadd.f32 %v504, %v695
    %v697 = vpop.f32.mrb[0].mxu0
    %698 = vmatprep.mubr.bf16.mxu0 0
    %699 = vmatmul.mubr.bf16.gmra.mrb[0].mxu0 %v473
    %v700 = vpop.f32.mrb[0].mxu0
    %v701 = vadd.f32 %v504, %v700
    %v702 = vpop.f32.mrb[0].mxu0
    %v703 = vpop.f32.mrb[0].mxu0
    %v704 = vadd.f32 %v504, %v703
    %v705 = vpop.f32.mrb[0].mxu0
    %706 = vmatprep.mubr.bf16.mxu0 0
    %707 = vmatmul.mubr.bf16.gmra.mrb[0].mxu0 %v474
    %v708 = vpop.f32.mrb[0].mxu0
    %v709 = vadd.f32 %v504, %v708
    %v710 = vpop.f32.mrb[0].mxu0
    %v711 = vpop.f32.mrb[0].mxu0
    %v712 = vadd.f32 %v504, %v711
    %v713 = vpop.f32.mrb[0].mxu0
    %714 = vmatprep.mubr.bf16.mxu0 0
    %715 = vmatmul.mubr.bf16.gmra.mrb[0].mxu0 %v475
    %v716 = vpop.f32.mrb[0].mxu0
    %v717 = vadd.f32 %v504, %v716
    %v718 = vpop.f32.mrb[0].mxu0
    %v719 = vpop.f32.mrb[0].mxu0
    %v720 = vadd.f32 %v504, %v719
    %v721 = vpop.f32.mrb[0].mxu0
    %722 = vmatprep.mubr.bf16.mxu0 0
    %723 = vmatmul.mubr.bf16.gmra.mrb[0].mxu0 %v476
    %v724 = vpop.f32.mrb[0].mxu0
    %v725 = vadd.f32 %v504, %v724
    %v726 = vpop.f32.mrb[0].mxu0
    %v727 = vpop.f32.mrb[0].mxu0
    %v728 = vadd.f32 %v504, %v727
    %v729 = vpop.f32.mrb[0].mxu0
    %730 = vmatprep.mubr.bf16.mxu0 0
    %731 = vmatmul.mubr.bf16.gmra.mrb[0].mxu0 %v477
    %v732 = vpop.f32.mrb[0].mxu0
    %v733 = vadd.f32 %v504, %v732
    %v734 = vpop.f32.mrb[0].mxu0
    %v735 = vpop.f32.mrb[0].mxu0
    %v736 = vadd.f32 %v504, %v735
    %v737 = vpop.f32.mrb[0].mxu0
    %738 = vmatprep.mubr.bf16.mxu0 0
    %739 = vmatmul.mubr.bf16.gmra.mrb[0].mxu0 %v478
    %v740 = vpop.f32.mrb[0].mxu0
    %v741 = vadd.f32 %v504, %v740
    %v742 = vpop.f32.mrb[0].mxu0
    %v743 = vpop.f32.mrb[0].mxu0
    %v744 = vadd.f32 %v504, %v743
    %v745 = vpop.f32.mrb[0].mxu0
    %746 = vmatprep.mubr.bf16.mxu0 0
    %747 = vmatmul.mubr.bf16.gmra.mrb[0].mxu0 %v479
    %v748 = vpop.f32.mrb[0].mxu0
    %v749 = vadd.f32 %v504, %v748
    %v750 = vpop.f32.mrb[0].mxu0
    %v751 = vpop.f32.mrb[0].mxu0
    %v752 = vadd.f32 %v504, %v751
    %v753 = vpop.f32.mrb[0].mxu0
    %754 = vmatprep.mubr.bf16.mxu0 0
    %755 = vmatmul.mubr.bf16.gmra.mrb[0].mxu0 %v480
    %v756 = vpop.f32.mrb[0].mxu0
    %v757 = vadd.f32 %v504, %v756
    %v758 = vpop.f32.mrb[0].mxu0
    %v759 = vpop.f32.mrb[0].mxu0
    %v760 = vadd.f32 %v504, %v759
    %v761 = vpop.f32.mrb[0].mxu0
    %762 = vmatprep.mubr.bf16.mxu0 0
    %763 = vmatmul.mubr.bf16.gmra.mrb[0].mxu0 %v481
    %v764 = vpop.f32.mrb[0].mxu0
    %v765 = vadd.f32 %v504, %v764
    %v766 = vpop.f32.mrb[0].mxu0
    %v767 = vpop.f32.mrb[0].mxu0
    %v768 = vadd.f32 %v504, %v767
    %v769 = vpop.f32.mrb[0].mxu0
    %770 = vmatprep.mubr.bf16.mxu0 0
    %771 = vmatmul.mubr.bf16.gmra.mrb[0].mxu0 %v482
    %v772 = vpop.f32.mrb[0].mxu0
    %v773 = vadd.f32 %v504, %v772
    %v774 = vpop.f32.mrb[0].mxu0
    %v775 = vpop.f32.mrb[0].mxu0
    %v776 = vadd.f32 %v504, %v775
    %v777 = vpop.f32.mrb[0].mxu0
    %778 = vdwg.mxu0
    %v779 = vtanh.pop %v589
    %v780 = vtanh.pop %v592
    %v781 = vtanh.pop %v597
    %v782 = vtanh.pop %v600
    %v783 = vtanh.pop %v605
    %v784 = vtanh.pop %v608
    %v785 = vtanh.pop %v613
    %v786 = vtanh.pop %v616
    %v787 = vtanh.pop %v621
    %v788 = vtanh.pop %v624
    %v789 = vtanh.pop %v629
    %v790 = vtanh.pop %v632
    %v791 = vtanh.pop %v637
    %v792 = vtanh.pop %v640
    %v793 = vtanh.pop %v645
    %v794 = vtanh.pop %v648
    %v795 = vtanh.pop %v653
    %v796 = vtanh.pop %v656
    %v797 = vtanh.pop %v661
    %v798 = vtanh.pop %v664
    %v799 = vtanh.pop %v669
    %v800 = vtanh.pop %v672
    %v801 = vtanh.pop %v677
    %v802 = vtanh.pop %v680
    %v803 = vtanh.pop %v685
    %v804 = vtanh.pop %v688
    %v805 = vtanh.pop %v693
    %v806 = vtanh.pop %v696
    %v807 = vtanh.pop %v701
    %v808 = vtanh.pop %v704
    %v809 = vtanh.pop %v709
    %v810 = vtanh.pop %v712
    %v811 = vtanh.pop %v717
    %v812 = vtanh.pop %v720
    %v813 = vtanh.pop %v725
    %v814 = vtanh.pop %v728
    %v815 = vtanh.pop %v733
    %v816 = vtanh.pop %v736
    %v817 = vtanh.pop %v741
    %v818 = vtanh.pop %v744
    %v819 = vtanh.pop %v749
    %v820 = vtanh.pop %v752
    %v821 = vtanh.pop %v757
    %v822 = vtanh.pop %v760
    %v823 = vtanh.pop %v765
    %v824 = vtanh.pop %v768
    %v825 = vtanh.pop %v773
    %v826 = vtanh.pop %v776
    %v827 = vld [vmem:[%s5] sm:$0x1]
    %v829 = vlaneseq
    %v830 = vshrl.u32 %v829, 7
    %v831 = vsub.s32 0, %v830
    %v832 = vrot.slane %v827, %v831
    %v834 = vmul.f32 %v779, %v832
    %v835 = vmul.f32 %v780, %v832
    %v836 = vmul.f32 %v781, %v832
    %v837 = vmul.f32 %v782, %v832
    %v838 = vmul.f32 %v783, %v832
    %v839 = vmul.f32 %v784, %v832
    %v840 = vmul.f32 %v785, %v832
    %v841 = vmul.f32 %v786, %v832
    %v842 = vmul.f32 %v787, %v832
    %v843 = vmul.f32 %v788, %v832
    %v844 = vmul.f32 %v789, %v832
    %v845 = vmul.f32 %v790, %v832
    %v846 = vmul.f32 %v791, %v832
    %v847 = vmul.f32 %v792, %v832
    %v848 = vmul.f32 %v793, %v832
    %v849 = vmul.f32 %v794, %v832
    %v850 = vmul.f32 %v795, %v832
    %v851 = vmul.f32 %v796, %v832
    %v852 = vmul.f32 %v797, %v832
    %v853 = vmul.f32 %v798, %v832
    %v854 = vmul.f32 %v799, %v832
    %v855 = vmul.f32 %v800, %v832
    %v856 = vmul.f32 %v801, %v832
    %v857 = vmul.f32 %v802, %v832
    %v858 = vmul.f32 %v803, %v832
    %v859 = vmul.f32 %v804, %v832
    %v860 = vmul.f32 %v805, %v832
    %v861 = vmul.f32 %v806, %v832
    %v862 = vmul.f32 %v807, %v832
    %v863 = vmul.f32 %v808, %v832
    %v864 = vmul.f32 %v809, %v832
    %v865 = vmul.f32 %v810, %v832
    %v866 = vmul.f32 %v811, %v832
    %v867 = vmul.f32 %v812, %v832
    %v868 = vmul.f32 %v813, %v832
    %v869 = vmul.f32 %v814, %v832
    %v870 = vmul.f32 %v815, %v832
    %v871 = vmul.f32 %v816, %v832
    %v872 = vmul.f32 %v817, %v832
    %v873 = vmul.f32 %v818, %v832
    %v874 = vmul.f32 %v819, %v832
    %v875 = vmul.f32 %v820, %v832
    %v876 = vmul.f32 %v821, %v832
    %v877 = vmul.f32 %v822, %v832
    %v878 = vmul.f32 %v823, %v832
    %v879 = vmul.f32 %v824, %v832
    %v880 = vmul.f32 %v825, %v832
    %v881 = vmul.f32 %v826, %v832
    %882 = vadd.xlane.f32.xlu0 %v834
    %v883 = vpop.xlane.xlu0 %882
    %884 = vadd.xlane.f32.xlu0 %v835
    %v885 = vpop.xlane.xlu0 %884
    %886 = vadd.xlane.f32.xlu0 %v836
    %v887 = vpop.xlane.xlu0 %886
    %888 = vadd.xlane.f32.xlu0 %v837
    %v889 = vpop.xlane.xlu0 %888
    %890 = vadd.xlane.f32.xlu0 %v838
    %v891 = vpop.xlane.xlu0 %890
    %892 = vadd.xlane.f32.xlu0 %v839
    %v893 = vpop.xlane.xlu0 %892
    %894 = vadd.xlane.f32.xlu0 %v840
    %v895 = vpop.xlane.xlu0 %894
    %896 = vadd.xlane.f32.xlu0 %v841
    %v897 = vpop.xlane.xlu0 %896
    %898 = vadd.xlane.f32.xlu0 %v842
    %v899 = vpop.xlane.xlu0 %898
    %900 = vadd.xlane.f32.xlu0 %v843
    %v901 = vpop.xlane.xlu0 %900
    %902 = vadd.xlane.f32.xlu0 %v844
    %v903 = vpop.xlane.xlu0 %902
    %904 = vadd.xlane.f32.xlu0 %v845
    %v905 = vpop.xlane.xlu0 %904
    %906 = vadd.xlane.f32.xlu0 %v846
    %v907 = vpop.xlane.xlu0 %906
    %908 = vadd.xlane.f32.xlu0 %v847
    %v909 = vpop.xlane.xlu0 %908
    %910 = vadd.xlane.f32.xlu0 %v848
    %v911 = vpop.xlane.xlu0 %910
    %912 = vadd.xlane.f32.xlu0 %v849
    %v913 = vpop.xlane.xlu0 %912
    %914 = vadd.xlane.f32.xlu0 %v850
    %v915 = vpop.xlane.xlu0 %914
    %916 = vadd.xlane.f32.xlu0 %v851
    %v917 = vpop.xlane.xlu0 %916
    %918 = vadd.xlane.f32.xlu0 %v852
    %v919 = vpop.xlane.xlu0 %918
    %920 = vadd.xlane.f32.xlu0 %v853
    %v921 = vpop.xlane.xlu0 %920
    %922 = vadd.xlane.f32.xlu0 %v854
    %v923 = vpop.xlane.xlu0 %922
    %924 = vadd.xlane.f32.xlu0 %v855
    %v925 = vpop.xlane.xlu0 %924
    %926 = vadd.xlane.f32.xlu0 %v856
    %v927 = vpop.xlane.xlu0 %926
    %928 = vadd.xlane.f32.xlu0 %v857
    %v929 = vpop.xlane.xlu0 %928
    %930 = vadd.xlane.f32.xlu0 %v858
    %v931 = vpop.xlane.xlu0 %930
    %932 = vadd.xlane.f32.xlu0 %v859
    %v933 = vpop.xlane.xlu0 %932
    %934 = vadd.xlane.f32.xlu0 %v860
    %v935 = vpop.xlane.xlu0 %934
    %936 = vadd.xlane.f32.xlu0 %v861
    %v937 = vpop.xlane.xlu0 %936
    %938 = vadd.xlane.f32.xlu0 %v862
    %v939 = vpop.xlane.xlu0 %938
    %940 = vadd.xlane.f32.xlu0 %v863
    %v941 = vpop.xlane.xlu0 %940
    %942 = vadd.xlane.f32.xlu0 %v864
    %v943 = vpop.xlane.xlu0 %942
    %944 = vadd.xlane.f32.xlu0 %v865
    %v945 = vpop.xlane.xlu0 %944
    %946 = vadd.xlane.f32.xlu0 %v866
    %v947 = vpop.xlane.xlu0 %946
    %948 = vadd.xlane.f32.xlu0 %v867
    %v949 = vpop.xlane.xlu0 %948
    %950 = vadd.xlane.f32.xlu0 %v868
    %v951 = vpop.xlane.xlu0 %950
    %952 = vadd.xlane.f32.xlu0 %v869
    %v953 = vpop.xlane.xlu0 %952
    %954 = vadd.xlane.f32.xlu0 %v870
    %v955 = vpop.xlane.xlu0 %954
    %956 = vadd.xlane.f32.xlu0 %v871
    %v957 = vpop.xlane.xlu0 %956
    %958 = vadd.xlane.f32.xlu0 %v872
    %v959 = vpop.xlane.xlu0 %958
    %960 = vadd.xlane.f32.xlu0 %v873
    %v961 = vpop.xlane.xlu0 %960
    %962 = vadd.xlane.f32.xlu0 %v874
    %v963 = vpop.xlane.xlu0 %962
    %964 = vadd.xlane.f32.xlu0 %v875
    %v965 = vpop.xlane.xlu0 %964
    %966 = vadd.xlane.f32.xlu0 %v876
    %v967 = vpop.xlane.xlu0 %966
    %968 = vadd.xlane.f32.xlu0 %v877
    %v969 = vpop.xlane.xlu0 %968
    %970 = vadd.xlane.f32.xlu0 %v878
    %v971 = vpop.xlane.xlu0 %970
    %972 = vadd.xlane.f32.xlu0 %v879
    %v973 = vpop.xlane.xlu0 %972
    %974 = vadd.xlane.f32.xlu0 %v880
    %v975 = vpop.xlane.xlu0 %974
    %976 = vadd.xlane.f32.xlu0 %v881
    %v977 = vpop.xlane.xlu0 %976
    %s978 = sld [smem:[#allocation2]]
    %v979 = vstv %s978
    %v980 = vadd.f32 %v883, %v979
    %v981 = vadd.f32 %v885, %v979
    %v982 = vadd.f32 %v887, %v979
    %v983 = vadd.f32 %v889, %v979
    %v984 = vadd.f32 %v891, %v979
    %v985 = vadd.f32 %v893, %v979
    %v986 = vadd.f32 %v895, %v979
    %v987 = vadd.f32 %v897, %v979
    %v988 = vadd.f32 %v899, %v979
    %v989 = vadd.f32 %v901, %v979
    %v990 = vadd.f32 %v903, %v979
    %v991 = vadd.f32 %v905, %v979
    %v992 = vadd.f32 %v907, %v979
    %v993 = vadd.f32 %v909, %v979
    %v994 = vadd.f32 %v911, %v979
    %v995 = vadd.f32 %v913, %v979
    %v996 = vadd.f32 %v915, %v979
    %v997 = vadd.f32 %v917, %v979
    %v998 = vadd.f32 %v919, %v979
    %v999 = vadd.f32 %v921, %v979
    %v1000 = vadd.f32 %v923, %v979
    %v1001 = vadd.f32 %v925, %v979
    %v1002 = vadd.f32 %v927, %v979
    %v1003 = vadd.f32 %v929, %v979
    %v1004 = vadd.f32 %v931, %v979
    %v1005 = vadd.f32 %v933, %v979
    %v1006 = vadd.f32 %v935, %v979
    %v1007 = vadd.f32 %v937, %v979
    %v1008 = vadd.f32 %v939, %v979
    %v1009 = vadd.f32 %v941, %v979
    %v1010 = vadd.f32 %v943, %v979
    %v1011 = vadd.f32 %v945, %v979
    %v1012 = vadd.f32 %v947, %v979
    %v1013 = vadd.f32 %v949, %v979
    %v1014 = vadd.f32 %v951, %v979
    %v1015 = vadd.f32 %v953, %v979
    %v1016 = vadd.f32 %v955, %v979
    %v1017 = vadd.f32 %v957, %v979
    %v1018 = vadd.f32 %v959, %v979
    %v1019 = vadd.f32 %v961, %v979
    %v1020 = vadd.f32 %v963, %v979
    %v1021 = vadd.f32 %v965, %v979
    %v1022 = vadd.f32 %v967, %v979
    %v1023 = vadd.f32 %v969, %v979
    %v1024 = vadd.f32 %v971, %v979
    %v1025 = vadd.f32 %v973, %v979
    %v1026 = vadd.f32 %v975, %v979
    %v1027 = vadd.f32 %v977, %v979
    %v1076 = vlaneseq
    %v1077 = vshrl.u32 %v1076, 7
    %v1078 = vsub.s32 0, %v1077
    %v1079 = vrot.slane %v980, %v1078
    %v1080 = vlaneseq
    %v1081 = vshrl.u32 %v1080, 7
    %v1082 = vsub.s32 1, %v1081
    %v1083 = vrot.slane %v980, %v1082
    %v1084 = vlaneseq
    %v1085 = vshrl.u32 %v1084, 7
    %v1086 = vsub.s32 2, %v1085
    %v1087 = vrot.slane %v980, %v1086
    %v1088 = vlaneseq
    %v1089 = vshrl.u32 %v1088, 7
    %v1090 = vsub.s32 3, %v1089
    %v1091 = vrot.slane %v980, %v1090
    %v1092 = vlaneseq
    %v1093 = vshrl.u32 %v1092, 7
    %v1094 = vsub.s32 4, %v1093
    %v1095 = vrot.slane %v980, %v1094
    %v1096 = vlaneseq
    %v1097 = vshrl.u32 %v1096, 7
    %v1098 = vsub.s32 5, %v1097
    %v1099 = vrot.slane %v980, %v1098
    %v1100 = vlaneseq
    %v1101 = vshrl.u32 %v1100, 7
    %v1102 = vsub.s32 6, %v1101
    %v1103 = vrot.slane %v980, %v1102
    %v1104 = vlaneseq
    %v1105 = vshrl.u32 %v1104, 7
    %v1106 = vsub.s32 7, %v1105
    %v1107 = vrot.slane %v980, %v1106
    %v1108 = vlaneseq
    %v1109 = vshrl.u32 %v1108, 7
    %v1110 = vsub.s32 0, %v1109
    %v1111 = vrot.slane %v981, %v1110
    %v1112 = vlaneseq
    %v1113 = vshrl.u32 %v1112, 7
    %v1114 = vsub.s32 1, %v1113
    %v1115 = vrot.slane %v981, %v1114
    %v1116 = vlaneseq
    %v1117 = vshrl.u32 %v1116, 7
    %v1118 = vsub.s32 2, %v1117
    %v1119 = vrot.slane %v981, %v1118
    %v1120 = vlaneseq
    %v1121 = vshrl.u32 %v1120, 7
    %v1122 = vsub.s32 3, %v1121
    %v1123 = vrot.slane %v981, %v1122
    %v1124 = vlaneseq
    %v1125 = vshrl.u32 %v1124, 7
    %v1126 = vsub.s32 4, %v1125
    %v1127 = vrot.slane %v981, %v1126
    %v1128 = vlaneseq
    %v1129 = vshrl.u32 %v1128, 7
    %v1130 = vsub.s32 5, %v1129
    %v1131 = vrot.slane %v981, %v1130
    %v1132 = vlaneseq
    %v1133 = vshrl.u32 %v1132, 7
    %v1134 = vsub.s32 6, %v1133
    %v1135 = vrot.slane %v981, %v1134
    %v1136 = vlaneseq
    %v1137 = vshrl.u32 %v1136, 7
    %v1138 = vsub.s32 7, %v1137
    %v1139 = vrot.slane %v981, %v1138
    %v1140 = vlaneseq
    %v1141 = vshrl.u32 %v1140, 7
    %v1142 = vsub.s32 0, %v1141
    %v1143 = vrot.slane %v982, %v1142
    %v1144 = vlaneseq
    %v1145 = vshrl.u32 %v1144, 7
    %v1146 = vsub.s32 1, %v1145
    %v1147 = vrot.slane %v982, %v1146
    %v1148 = vlaneseq
    %v1149 = vshrl.u32 %v1148, 7
    %v1150 = vsub.s32 2, %v1149
    %v1151 = vrot.slane %v982, %v1150
    %v1152 = vlaneseq
    %v1153 = vshrl.u32 %v1152, 7
    %v1154 = vsub.s32 3, %v1153
    %v1155 = vrot.slane %v982, %v1154
    %v1156 = vlaneseq
    %v1157 = vshrl.u32 %v1156, 7
    %v1158 = vsub.s32 4, %v1157
    %v1159 = vrot.slane %v982, %v1158
    %v1160 = vlaneseq
    %v1161 = vshrl.u32 %v1160, 7
    %v1162 = vsub.s32 5, %v1161
    %v1163 = vrot.slane %v982, %v1162
    %v1164 = vlaneseq
    %v1165 = vshrl.u32 %v1164, 7
    %v1166 = vsub.s32 6, %v1165
    %v1167 = vrot.slane %v982, %v1166
    %v1168 = vlaneseq
    %v1169 = vshrl.u32 %v1168, 7
    %v1170 = vsub.s32 7, %v1169
    %v1171 = vrot.slane %v982, %v1170
    %v1172 = vlaneseq
    %v1173 = vshrl.u32 %v1172, 7
    %v1174 = vsub.s32 0, %v1173
    %v1175 = vrot.slane %v983, %v1174
    %v1176 = vlaneseq
    %v1177 = vshrl.u32 %v1176, 7
    %v1178 = vsub.s32 1, %v1177
    %v1179 = vrot.slane %v983, %v1178
    %v1180 = vlaneseq
    %v1181 = vshrl.u32 %v1180, 7
    %v1182 = vsub.s32 2, %v1181
    %v1183 = vrot.slane %v983, %v1182
    %v1184 = vlaneseq
    %v1185 = vshrl.u32 %v1184, 7
    %v1186 = vsub.s32 3, %v1185
    %v1187 = vrot.slane %v983, %v1186
    %v1188 = vlaneseq
    %v1189 = vshrl.u32 %v1188, 7
    %v1190 = vsub.s32 4, %v1189
    %v1191 = vrot.slane %v983, %v1190
    %v1192 = vlaneseq
    %v1193 = vshrl.u32 %v1192, 7
    %v1194 = vsub.s32 5, %v1193
    %v1195 = vrot.slane %v983, %v1194
    %v1196 = vlaneseq
    %v1197 = vshrl.u32 %v1196, 7
    %v1198 = vsub.s32 6, %v1197
    %v1199 = vrot.slane %v983, %v1198
    %v1200 = vlaneseq
    %v1201 = vshrl.u32 %v1200, 7
    %v1202 = vsub.s32 7, %v1201
    %v1203 = vrot.slane %v983, %v1202
    %v1204 = vlaneseq
    %v1205 = vshrl.u32 %v1204, 7
    %v1206 = vsub.s32 0, %v1205
    %v1207 = vrot.slane %v984, %v1206
    %v1208 = vlaneseq
    %v1209 = vshrl.u32 %v1208, 7
    %v1210 = vsub.s32 1, %v1209
    %v1211 = vrot.slane %v984, %v1210
    %v1212 = vlaneseq
    %v1213 = vshrl.u32 %v1212, 7
    %v1214 = vsub.s32 2, %v1213
    %v1215 = vrot.slane %v984, %v1214
    %v1216 = vlaneseq
    %v1217 = vshrl.u32 %v1216, 7
    %v1218 = vsub.s32 3, %v1217
    %v1219 = vrot.slane %v984, %v1218
    %v1220 = vlaneseq
    %v1221 = vshrl.u32 %v1220, 7
    %v1222 = vsub.s32 4, %v1221
    %v1223 = vrot.slane %v984, %v1222
    %v1224 = vlaneseq
    %v1225 = vshrl.u32 %v1224, 7
    %v1226 = vsub.s32 5, %v1225
    %v1227 = vrot.slane %v984, %v1226
    %v1228 = vlaneseq
    %v1229 = vshrl.u32 %v1228, 7
    %v1230 = vsub.s32 6, %v1229
    %v1231 = vrot.slane %v984, %v1230
    %v1232 = vlaneseq
    %v1233 = vshrl.u32 %v1232, 7
    %v1234 = vsub.s32 7, %v1233
    %v1235 = vrot.slane %v984, %v1234
    %v1236 = vlaneseq
    %v1237 = vshrl.u32 %v1236, 7
    %v1238 = vsub.s32 0, %v1237
    %v1239 = vrot.slane %v985, %v1238
    %v1240 = vlaneseq
    %v1241 = vshrl.u32 %v1240, 7
    %v1242 = vsub.s32 1, %v1241
    %v1243 = vrot.slane %v985, %v1242
    %v1244 = vlaneseq
    %v1245 = vshrl.u32 %v1244, 7
    %v1246 = vsub.s32 2, %v1245
    %v1247 = vrot.slane %v985, %v1246
    %v1248 = vlaneseq
    %v1249 = vshrl.u32 %v1248, 7
    %v1250 = vsub.s32 3, %v1249
    %v1251 = vrot.slane %v985, %v1250
    %v1252 = vlaneseq
    %v1253 = vshrl.u32 %v1252, 7
    %v1254 = vsub.s32 4, %v1253
    %v1255 = vrot.slane %v985, %v1254
    %v1256 = vlaneseq
    %v1257 = vshrl.u32 %v1256, 7
    %v1258 = vsub.s32 5, %v1257
    %v1259 = vrot.slane %v985, %v1258
    %v1260 = vlaneseq
    %v1261 = vshrl.u32 %v1260, 7
    %v1262 = vsub.s32 6, %v1261
    %v1263 = vrot.slane %v985, %v1262
    %v1264 = vlaneseq
    %v1265 = vshrl.u32 %v1264, 7
    %v1266 = vsub.s32 7, %v1265
    %v1267 = vrot.slane %v985, %v1266
    %v1268 = vlaneseq
    %v1269 = vshrl.u32 %v1268, 7
    %v1270 = vsub.s32 0, %v1269
    %v1271 = vrot.slane %v986, %v1270
    %v1272 = vlaneseq
    %v1273 = vshrl.u32 %v1272, 7
    %v1274 = vsub.s32 1, %v1273
    %v1275 = vrot.slane %v986, %v1274
    %v1276 = vlaneseq
    %v1277 = vshrl.u32 %v1276, 7
    %v1278 = vsub.s32 2, %v1277
    %v1279 = vrot.slane %v986, %v1278
    %v1280 = vlaneseq
    %v1281 = vshrl.u32 %v1280, 7
    %v1282 = vsub.s32 3, %v1281
    %v1283 = vrot.slane %v986, %v1282
    %v1284 = vlaneseq
    %v1285 = vshrl.u32 %v1284, 7
    %v1286 = vsub.s32 4, %v1285
    %v1287 = vrot.slane %v986, %v1286
    %v1288 = vlaneseq
    %v1289 = vshrl.u32 %v1288, 7
    %v1290 = vsub.s32 5, %v1289
    %v1291 = vrot.slane %v986, %v1290
    %v1292 = vlaneseq
    %v1293 = vshrl.u32 %v1292, 7
    %v1294 = vsub.s32 6, %v1293
    %v1295 = vrot.slane %v986, %v1294
    %v1296 = vlaneseq
    %v1297 = vshrl.u32 %v1296, 7
    %v1298 = vsub.s32 7, %v1297
    %v1299 = vrot.slane %v986, %v1298
    %v1300 = vlaneseq
    %v1301 = vshrl.u32 %v1300, 7
    %v1302 = vsub.s32 0, %v1301
    %v1303 = vrot.slane %v987, %v1302
    %v1304 = vlaneseq
    %v1305 = vshrl.u32 %v1304, 7
    %v1306 = vsub.s32 1, %v1305
    %v1307 = vrot.slane %v987, %v1306
    %v1308 = vlaneseq
    %v1309 = vshrl.u32 %v1308, 7
    %v1310 = vsub.s32 2, %v1309
    %v1311 = vrot.slane %v987, %v1310
    %v1312 = vlaneseq
    %v1313 = vshrl.u32 %v1312, 7
    %v1314 = vsub.s32 3, %v1313
    %v1315 = vrot.slane %v987, %v1314
    %v1316 = vlaneseq
    %v1317 = vshrl.u32 %v1316, 7
    %v1318 = vsub.s32 4, %v1317
    %v1319 = vrot.slane %v987, %v1318
    %v1320 = vlaneseq
    %v1321 = vshrl.u32 %v1320, 7
    %v1322 = vsub.s32 5, %v1321
    %v1323 = vrot.slane %v987, %v1322
    %v1324 = vlaneseq
    %v1325 = vshrl.u32 %v1324, 7
    %v1326 = vsub.s32 6, %v1325
    %v1327 = vrot.slane %v987, %v1326
    %v1328 = vlaneseq
    %v1329 = vshrl.u32 %v1328, 7
    %v1330 = vsub.s32 7, %v1329
    %v1331 = vrot.slane %v987, %v1330
    %v1332 = vlaneseq
    %v1333 = vshrl.u32 %v1332, 7
    %v1334 = vsub.s32 0, %v1333
    %v1335 = vrot.slane %v988, %v1334
    %v1336 = vlaneseq
    %v1337 = vshrl.u32 %v1336, 7
    %v1338 = vsub.s32 1, %v1337
    %v1339 = vrot.slane %v988, %v1338
    %v1340 = vlaneseq
    %v1341 = vshrl.u32 %v1340, 7
    %v1342 = vsub.s32 2, %v1341
    %v1343 = vrot.slane %v988, %v1342
    %v1344 = vlaneseq
    %v1345 = vshrl.u32 %v1344, 7
    %v1346 = vsub.s32 3, %v1345
    %v1347 = vrot.slane %v988, %v1346
    %v1348 = vlaneseq
    %v1349 = vshrl.u32 %v1348, 7
    %v1350 = vsub.s32 4, %v1349
    %v1351 = vrot.slane %v988, %v1350
    %v1352 = vlaneseq
    %v1353 = vshrl.u32 %v1352, 7
    %v1354 = vsub.s32 5, %v1353
    %v1355 = vrot.slane %v988, %v1354
    %v1356 = vlaneseq
    %v1357 = vshrl.u32 %v1356, 7
    %v1358 = vsub.s32 6, %v1357
    %v1359 = vrot.slane %v988, %v1358
    %v1360 = vlaneseq
    %v1361 = vshrl.u32 %v1360, 7
    %v1362 = vsub.s32 7, %v1361
    %v1363 = vrot.slane %v988, %v1362
    %v1364 = vlaneseq
    %v1365 = vshrl.u32 %v1364, 7
    %v1366 = vsub.s32 0, %v1365
    %v1367 = vrot.slane %v989, %v1366
    %v1368 = vlaneseq
    %v1369 = vshrl.u32 %v1368, 7
    %v1370 = vsub.s32 1, %v1369
    %v1371 = vrot.slane %v989, %v1370
    %v1372 = vlaneseq
    %v1373 = vshrl.u32 %v1372, 7
    %v1374 = vsub.s32 2, %v1373
    %v1375 = vrot.slane %v989, %v1374
    %v1376 = vlaneseq
    %v1377 = vshrl.u32 %v1376, 7
    %v1378 = vsub.s32 3, %v1377
    %v1379 = vrot.slane %v989, %v1378
    %v1380 = vlaneseq
    %v1381 = vshrl.u32 %v1380, 7
    %v1382 = vsub.s32 4, %v1381
    %v1383 = vrot.slane %v989, %v1382
    %v1384 = vlaneseq
    %v1385 = vshrl.u32 %v1384, 7
    %v1386 = vsub.s32 5, %v1385
    %v1387 = vrot.slane %v989, %v1386
    %v1388 = vlaneseq
    %v1389 = vshrl.u32 %v1388, 7
    %v1390 = vsub.s32 6, %v1389
    %v1391 = vrot.slane %v989, %v1390
    %v1392 = vlaneseq
    %v1393 = vshrl.u32 %v1392, 7
    %v1394 = vsub.s32 7, %v1393
    %v1395 = vrot.slane %v989, %v1394
    %v1396 = vlaneseq
    %v1397 = vshrl.u32 %v1396, 7
    %v1398 = vsub.s32 0, %v1397
    %v1399 = vrot.slane %v990, %v1398
    %v1400 = vlaneseq
    %v1401 = vshrl.u32 %v1400, 7
    %v1402 = vsub.s32 1, %v1401
    %v1403 = vrot.slane %v990, %v1402
    %v1404 = vlaneseq
    %v1405 = vshrl.u32 %v1404, 7
    %v1406 = vsub.s32 2, %v1405
    %v1407 = vrot.slane %v990, %v1406
    %v1408 = vlaneseq
    %v1409 = vshrl.u32 %v1408, 7
    %v1410 = vsub.s32 3, %v1409
    %v1411 = vrot.slane %v990, %v1410
    %v1412 = vlaneseq
    %v1413 = vshrl.u32 %v1412, 7
    %v1414 = vsub.s32 4, %v1413
    %v1415 = vrot.slane %v990, %v1414
    %v1416 = vlaneseq
    %v1417 = vshrl.u32 %v1416, 7
    %v1418 = vsub.s32 5, %v1417
    %v1419 = vrot.slane %v990, %v1418
    %v1420 = vlaneseq
    %v1421 = vshrl.u32 %v1420, 7
    %v1422 = vsub.s32 6, %v1421
    %v1423 = vrot.slane %v990, %v1422
    %v1424 = vlaneseq
    %v1425 = vshrl.u32 %v1424, 7
    %v1426 = vsub.s32 7, %v1425
    %v1427 = vrot.slane %v990, %v1426
    %v1428 = vlaneseq
    %v1429 = vshrl.u32 %v1428, 7
    %v1430 = vsub.s32 0, %v1429
    %v1431 = vrot.slane %v991, %v1430
    %v1432 = vlaneseq
    %v1433 = vshrl.u32 %v1432, 7
    %v1434 = vsub.s32 1, %v1433
    %v1435 = vrot.slane %v991, %v1434
    %v1436 = vlaneseq
    %v1437 = vshrl.u32 %v1436, 7
    %v1438 = vsub.s32 2, %v1437
    %v1439 = vrot.slane %v991, %v1438
    %v1440 = vlaneseq
    %v1441 = vshrl.u32 %v1440, 7
    %v1442 = vsub.s32 3, %v1441
    %v1443 = vrot.slane %v991, %v1442
    %v1444 = vlaneseq
    %v1445 = vshrl.u32 %v1444, 7
    %v1446 = vsub.s32 4, %v1445
    %v1447 = vrot.slane %v991, %v1446
    %v1448 = vlaneseq
    %v1449 = vshrl.u32 %v1448, 7
    %v1450 = vsub.s32 5, %v1449
    %v1451 = vrot.slane %v991, %v1450
    %v1452 = vlaneseq
    %v1453 = vshrl.u32 %v1452, 7
    %v1454 = vsub.s32 6, %v1453
    %v1455 = vrot.slane %v991, %v1454
    %v1456 = vlaneseq
    %v1457 = vshrl.u32 %v1456, 7
    %v1458 = vsub.s32 7, %v1457
    %v1459 = vrot.slane %v991, %v1458
    %v1460 = vlaneseq
    %v1461 = vshrl.u32 %v1460, 7
    %v1462 = vsub.s32 0, %v1461
    %v1463 = vrot.slane %v992, %v1462
    %v1464 = vlaneseq
    %v1465 = vshrl.u32 %v1464, 7
    %v1466 = vsub.s32 1, %v1465
    %v1467 = vrot.slane %v992, %v1466
    %v1468 = vlaneseq
    %v1469 = vshrl.u32 %v1468, 7
    %v1470 = vsub.s32 2, %v1469
    %v1471 = vrot.slane %v992, %v1470
    %v1472 = vlaneseq
    %v1473 = vshrl.u32 %v1472, 7
    %v1474 = vsub.s32 3, %v1473
    %v1475 = vrot.slane %v992, %v1474
    %v1476 = vlaneseq
    %v1477 = vshrl.u32 %v1476, 7
    %v1478 = vsub.s32 4, %v1477
    %v1479 = vrot.slane %v992, %v1478
    %v1480 = vlaneseq
    %v1481 = vshrl.u32 %v1480, 7
    %v1482 = vsub.s32 5, %v1481
    %v1483 = vrot.slane %v992, %v1482
    %v1484 = vlaneseq
    %v1485 = vshrl.u32 %v1484, 7
    %v1486 = vsub.s32 6, %v1485
    %v1487 = vrot.slane %v992, %v1486
    %v1488 = vlaneseq
    %v1489 = vshrl.u32 %v1488, 7
    %v1490 = vsub.s32 7, %v1489
    %v1491 = vrot.slane %v992, %v1490
    %v1492 = vlaneseq
    %v1493 = vshrl.u32 %v1492, 7
    %v1494 = vsub.s32 0, %v1493
    %v1495 = vrot.slane %v993, %v1494
    %v1496 = vlaneseq
    %v1497 = vshrl.u32 %v1496, 7
    %v1498 = vsub.s32 1, %v1497
    %v1499 = vrot.slane %v993, %v1498
    %v1500 = vlaneseq
    %v1501 = vshrl.u32 %v1500, 7
    %v1502 = vsub.s32 2, %v1501
    %v1503 = vrot.slane %v993, %v1502
    %v1504 = vlaneseq
    %v1505 = vshrl.u32 %v1504, 7
    %v1506 = vsub.s32 3, %v1505
    %v1507 = vrot.slane %v993, %v1506
    %v1508 = vlaneseq
    %v1509 = vshrl.u32 %v1508, 7
    %v1510 = vsub.s32 4, %v1509
    %v1511 = vrot.slane %v993, %v1510
    %v1512 = vlaneseq
    %v1513 = vshrl.u32 %v1512, 7
    %v1514 = vsub.s32 5, %v1513
    %v1515 = vrot.slane %v993, %v1514
    %v1516 = vlaneseq
    %v1517 = vshrl.u32 %v1516, 7
    %v1518 = vsub.s32 6, %v1517
    %v1519 = vrot.slane %v993, %v1518
    %v1520 = vlaneseq
    %v1521 = vshrl.u32 %v1520, 7
    %v1522 = vsub.s32 7, %v1521
    %v1523 = vrot.slane %v993, %v1522
    %v1524 = vlaneseq
    %v1525 = vshrl.u32 %v1524, 7
    %v1526 = vsub.s32 0, %v1525
    %v1527 = vrot.slane %v994, %v1526
    %v1528 = vlaneseq
    %v1529 = vshrl.u32 %v1528, 7
    %v1530 = vsub.s32 1, %v1529
    %v1531 = vrot.slane %v994, %v1530
    %v1532 = vlaneseq
    %v1533 = vshrl.u32 %v1532, 7
    %v1534 = vsub.s32 2, %v1533
    %v1535 = vrot.slane %v994, %v1534
    %v1536 = vlaneseq
    %v1537 = vshrl.u32 %v1536, 7
    %v1538 = vsub.s32 3, %v1537
    %v1539 = vrot.slane %v994, %v1538
    %v1540 = vlaneseq
    %v1541 = vshrl.u32 %v1540, 7
    %v1542 = vsub.s32 4, %v1541
    %v1543 = vrot.slane %v994, %v1542
    %v1544 = vlaneseq
    %v1545 = vshrl.u32 %v1544, 7
    %v1546 = vsub.s32 5, %v1545
    %v1547 = vrot.slane %v994, %v1546
    %v1548 = vlaneseq
    %v1549 = vshrl.u32 %v1548, 7
    %v1550 = vsub.s32 6, %v1549
    %v1551 = vrot.slane %v994, %v1550
    %v1552 = vlaneseq
    %v1553 = vshrl.u32 %v1552, 7
    %v1554 = vsub.s32 7, %v1553
    %v1555 = vrot.slane %v994, %v1554
    %v1556 = vlaneseq
    %v1557 = vshrl.u32 %v1556, 7
    %v1558 = vsub.s32 0, %v1557
    %v1559 = vrot.slane %v995, %v1558
    %v1560 = vlaneseq
    %v1561 = vshrl.u32 %v1560, 7
    %v1562 = vsub.s32 1, %v1561
    %v1563 = vrot.slane %v995, %v1562
    %v1564 = vlaneseq
    %v1565 = vshrl.u32 %v1564, 7
    %v1566 = vsub.s32 2, %v1565
    %v1567 = vrot.slane %v995, %v1566
    %v1568 = vlaneseq
    %v1569 = vshrl.u32 %v1568, 7
    %v1570 = vsub.s32 3, %v1569
    %v1571 = vrot.slane %v995, %v1570
    %v1572 = vlaneseq
    %v1573 = vshrl.u32 %v1572, 7
    %v1574 = vsub.s32 4, %v1573
    %v1575 = vrot.slane %v995, %v1574
    %v1576 = vlaneseq
    %v1577 = vshrl.u32 %v1576, 7
    %v1578 = vsub.s32 5, %v1577
    %v1579 = vrot.slane %v995, %v1578
    %v1580 = vlaneseq
    %v1581 = vshrl.u32 %v1580, 7
    %v1582 = vsub.s32 6, %v1581
    %v1583 = vrot.slane %v995, %v1582
    %v1584 = vlaneseq
    %v1585 = vshrl.u32 %v1584, 7
    %v1586 = vsub.s32 7, %v1585
    %v1587 = vrot.slane %v995, %v1586
    %v1588 = vlaneseq
    %v1589 = vshrl.u32 %v1588, 7
    %v1590 = vsub.s32 0, %v1589
    %v1591 = vrot.slane %v996, %v1590
    %v1592 = vlaneseq
    %v1593 = vshrl.u32 %v1592, 7
    %v1594 = vsub.s32 1, %v1593
    %v1595 = vrot.slane %v996, %v1594
    %v1596 = vlaneseq
    %v1597 = vshrl.u32 %v1596, 7
    %v1598 = vsub.s32 2, %v1597
    %v1599 = vrot.slane %v996, %v1598
    %v1600 = vlaneseq
    %v1601 = vshrl.u32 %v1600, 7
    %v1602 = vsub.s32 3, %v1601
    %v1603 = vrot.slane %v996, %v1602
    %v1604 = vlaneseq
    %v1605 = vshrl.u32 %v1604, 7
    %v1606 = vsub.s32 4, %v1605
    %v1607 = vrot.slane %v996, %v1606
    %v1608 = vlaneseq
    %v1609 = vshrl.u32 %v1608, 7
    %v1610 = vsub.s32 5, %v1609
    %v1611 = vrot.slane %v996, %v1610
    %v1612 = vlaneseq
    %v1613 = vshrl.u32 %v1612, 7
    %v1614 = vsub.s32 6, %v1613
    %v1615 = vrot.slane %v996, %v1614
    %v1616 = vlaneseq
    %v1617 = vshrl.u32 %v1616, 7
    %v1618 = vsub.s32 7, %v1617
    %v1619 = vrot.slane %v996, %v1618
    %v1620 = vlaneseq
    %v1621 = vshrl.u32 %v1620, 7
    %v1622 = vsub.s32 0, %v1621
    %v1623 = vrot.slane %v997, %v1622
    %v1624 = vlaneseq
    %v1625 = vshrl.u32 %v1624, 7
    %v1626 = vsub.s32 1, %v1625
    %v1627 = vrot.slane %v997, %v1626
    %v1628 = vlaneseq
    %v1629 = vshrl.u32 %v1628, 7
    %v1630 = vsub.s32 2, %v1629
    %v1631 = vrot.slane %v997, %v1630
    %v1632 = vlaneseq
    %v1633 = vshrl.u32 %v1632, 7
    %v1634 = vsub.s32 3, %v1633
    %v1635 = vrot.slane %v997, %v1634
    %v1636 = vlaneseq
    %v1637 = vshrl.u32 %v1636, 7
    %v1638 = vsub.s32 4, %v1637
    %v1639 = vrot.slane %v997, %v1638
    %v1640 = vlaneseq
    %v1641 = vshrl.u32 %v1640, 7
    %v1642 = vsub.s32 5, %v1641
    %v1643 = vrot.slane %v997, %v1642
    %v1644 = vlaneseq
    %v1645 = vshrl.u32 %v1644, 7
    %v1646 = vsub.s32 6, %v1645
    %v1647 = vrot.slane %v997, %v1646
    %v1648 = vlaneseq
    %v1649 = vshrl.u32 %v1648, 7
    %v1650 = vsub.s32 7, %v1649
    %v1651 = vrot.slane %v997, %v1650
    %v1652 = vlaneseq
    %v1653 = vshrl.u32 %v1652, 7
    %v1654 = vsub.s32 0, %v1653
    %v1655 = vrot.slane %v998, %v1654
    %v1656 = vlaneseq
    %v1657 = vshrl.u32 %v1656, 7
    %v1658 = vsub.s32 1, %v1657
    %v1659 = vrot.slane %v998, %v1658
    %v1660 = vlaneseq
    %v1661 = vshrl.u32 %v1660, 7
    %v1662 = vsub.s32 2, %v1661
    %v1663 = vrot.slane %v998, %v1662
    %v1664 = vlaneseq
    %v1665 = vshrl.u32 %v1664, 7
    %v1666 = vsub.s32 3, %v1665
    %v1667 = vrot.slane %v998, %v1666
    %v1668 = vlaneseq
    %v1669 = vshrl.u32 %v1668, 7
    %v1670 = vsub.s32 4, %v1669
    %v1671 = vrot.slane %v998, %v1670
    %v1672 = vlaneseq
    %v1673 = vshrl.u32 %v1672, 7
    %v1674 = vsub.s32 5, %v1673
    %v1675 = vrot.slane %v998, %v1674
    %v1676 = vlaneseq
    %v1677 = vshrl.u32 %v1676, 7
    %v1678 = vsub.s32 6, %v1677
    %v1679 = vrot.slane %v998, %v1678
    %v1680 = vlaneseq
    %v1681 = vshrl.u32 %v1680, 7
    %v1682 = vsub.s32 7, %v1681
    %v1683 = vrot.slane %v998, %v1682
    %v1684 = vlaneseq
    %v1685 = vshrl.u32 %v1684, 7
    %v1686 = vsub.s32 0, %v1685
    %v1687 = vrot.slane %v999, %v1686
    %v1688 = vlaneseq
    %v1689 = vshrl.u32 %v1688, 7
    %v1690 = vsub.s32 1, %v1689
    %v1691 = vrot.slane %v999, %v1690
    %v1692 = vlaneseq
    %v1693 = vshrl.u32 %v1692, 7
    %v1694 = vsub.s32 2, %v1693
    %v1695 = vrot.slane %v999, %v1694
    %v1696 = vlaneseq
    %v1697 = vshrl.u32 %v1696, 7
    %v1698 = vsub.s32 3, %v1697
    %v1699 = vrot.slane %v999, %v1698
    %v1700 = vlaneseq
    %v1701 = vshrl.u32 %v1700, 7
    %v1702 = vsub.s32 4, %v1701
    %v1703 = vrot.slane %v999, %v1702
    %v1704 = vlaneseq
    %v1705 = vshrl.u32 %v1704, 7
    %v1706 = vsub.s32 5, %v1705
    %v1707 = vrot.slane %v999, %v1706
    %v1708 = vlaneseq
    %v1709 = vshrl.u32 %v1708, 7
    %v1710 = vsub.s32 6, %v1709
    %v1711 = vrot.slane %v999, %v1710
    %v1712 = vlaneseq
    %v1713 = vshrl.u32 %v1712, 7
    %v1714 = vsub.s32 7, %v1713
    %v1715 = vrot.slane %v999, %v1714
    %v1716 = vlaneseq
    %v1717 = vshrl.u32 %v1716, 7
    %v1718 = vsub.s32 0, %v1717
    %v1719 = vrot.slane %v1000, %v1718
    %v1720 = vlaneseq
    %v1721 = vshrl.u32 %v1720, 7
    %v1722 = vsub.s32 1, %v1721
    %v1723 = vrot.slane %v1000, %v1722
    %v1724 = vlaneseq
    %v1725 = vshrl.u32 %v1724, 7
    %v1726 = vsub.s32 2, %v1725
    %v1727 = vrot.slane %v1000, %v1726
    %v1728 = vlaneseq
    %v1729 = vshrl.u32 %v1728, 7
    %v1730 = vsub.s32 3, %v1729
    %v1731 = vrot.slane %v1000, %v1730
    %v1732 = vlaneseq
    %v1733 = vshrl.u32 %v1732, 7
    %v1734 = vsub.s32 4, %v1733
    %v1735 = vrot.slane %v1000, %v1734
    %v1736 = vlaneseq
    %v1737 = vshrl.u32 %v1736, 7
    %v1738 = vsub.s32 5, %v1737
    %v1739 = vrot.slane %v1000, %v1738
    %v1740 = vlaneseq
    %v1741 = vshrl.u32 %v1740, 7
    %v1742 = vsub.s32 6, %v1741
    %v1743 = vrot.slane %v1000, %v1742
    %v1744 = vlaneseq
    %v1745 = vshrl.u32 %v1744, 7
    %v1746 = vsub.s32 7, %v1745
    %v1747 = vrot.slane %v1000, %v1746
    %v1748 = vlaneseq
    %v1749 = vshrl.u32 %v1748, 7
    %v1750 = vsub.s32 0, %v1749
    %v1751 = vrot.slane %v1001, %v1750
    %v1752 = vlaneseq
    %v1753 = vshrl.u32 %v1752, 7
    %v1754 = vsub.s32 1, %v1753
    %v1755 = vrot.slane %v1001, %v1754
    %v1756 = vlaneseq
    %v1757 = vshrl.u32 %v1756, 7
    %v1758 = vsub.s32 2, %v1757
    %v1759 = vrot.slane %v1001, %v1758
    %v1760 = vlaneseq
    %v1761 = vshrl.u32 %v1760, 7
    %v1762 = vsub.s32 3, %v1761
    %v1763 = vrot.slane %v1001, %v1762
    %v1764 = vlaneseq
    %v1765 = vshrl.u32 %v1764, 7
    %v1766 = vsub.s32 4, %v1765
    %v1767 = vrot.slane %v1001, %v1766
    %v1768 = vlaneseq
    %v1769 = vshrl.u32 %v1768, 7
    %v1770 = vsub.s32 5, %v1769
    %v1771 = vrot.slane %v1001, %v1770
    %v1772 = vlaneseq
    %v1773 = vshrl.u32 %v1772, 7
    %v1774 = vsub.s32 6, %v1773
    %v1775 = vrot.slane %v1001, %v1774
    %v1776 = vlaneseq
    %v1777 = vshrl.u32 %v1776, 7
    %v1778 = vsub.s32 7, %v1777
    %v1779 = vrot.slane %v1001, %v1778
    %v1780 = vlaneseq
    %v1781 = vshrl.u32 %v1780, 7
    %v1782 = vsub.s32 0, %v1781
    %v1783 = vrot.slane %v1002, %v1782
    %v1784 = vlaneseq
    %v1785 = vshrl.u32 %v1784, 7
    %v1786 = vsub.s32 1, %v1785
    %v1787 = vrot.slane %v1002, %v1786
    %v1788 = vlaneseq
    %v1789 = vshrl.u32 %v1788, 7
    %v1790 = vsub.s32 2, %v1789
    %v1791 = vrot.slane %v1002, %v1790
    %v1792 = vlaneseq
    %v1793 = vshrl.u32 %v1792, 7
    %v1794 = vsub.s32 3, %v1793
    %v1795 = vrot.slane %v1002, %v1794
    %v1796 = vlaneseq
    %v1797 = vshrl.u32 %v1796, 7
    %v1798 = vsub.s32 4, %v1797
    %v1799 = vrot.slane %v1002, %v1798
    %v1800 = vlaneseq
    %v1801 = vshrl.u32 %v1800, 7
    %v1802 = vsub.s32 5, %v1801
    %v1803 = vrot.slane %v1002, %v1802
    %v1804 = vlaneseq
    %v1805 = vshrl.u32 %v1804, 7
    %v1806 = vsub.s32 6, %v1805
    %v1807 = vrot.slane %v1002, %v1806
    %v1808 = vlaneseq
    %v1809 = vshrl.u32 %v1808, 7
    %v1810 = vsub.s32 7, %v1809
    %v1811 = vrot.slane %v1002, %v1810
    %v1812 = vlaneseq
    %v1813 = vshrl.u32 %v1812, 7
    %v1814 = vsub.s32 0, %v1813
    %v1815 = vrot.slane %v1003, %v1814
    %v1816 = vlaneseq
    %v1817 = vshrl.u32 %v1816, 7
    %v1818 = vsub.s32 1, %v1817
    %v1819 = vrot.slane %v1003, %v1818
    %v1820 = vlaneseq
    %v1821 = vshrl.u32 %v1820, 7
    %v1822 = vsub.s32 2, %v1821
    %v1823 = vrot.slane %v1003, %v1822
    %v1824 = vlaneseq
    %v1825 = vshrl.u32 %v1824, 7
    %v1826 = vsub.s32 3, %v1825
    %v1827 = vrot.slane %v1003, %v1826
    %v1828 = vlaneseq
    %v1829 = vshrl.u32 %v1828, 7
    %v1830 = vsub.s32 4, %v1829
    %v1831 = vrot.slane %v1003, %v1830
    %v1832 = vlaneseq
    %v1833 = vshrl.u32 %v1832, 7
    %v1834 = vsub.s32 5, %v1833
    %v1835 = vrot.slane %v1003, %v1834
    %v1836 = vlaneseq
    %v1837 = vshrl.u32 %v1836, 7
    %v1838 = vsub.s32 6, %v1837
    %v1839 = vrot.slane %v1003, %v1838
    %v1840 = vlaneseq
    %v1841 = vshrl.u32 %v1840, 7
    %v1842 = vsub.s32 7, %v1841
    %v1843 = vrot.slane %v1003, %v1842
    %v1844 = vlaneseq
    %v1845 = vshrl.u32 %v1844, 7
    %v1846 = vsub.s32 0, %v1845
    %v1847 = vrot.slane %v1004, %v1846
    %v1848 = vlaneseq
    %v1849 = vshrl.u32 %v1848, 7
    %v1850 = vsub.s32 1, %v1849
    %v1851 = vrot.slane %v1004, %v1850
    %v1852 = vlaneseq
    %v1853 = vshrl.u32 %v1852, 7
    %v1854 = vsub.s32 2, %v1853
    %v1855 = vrot.slane %v1004, %v1854
    %v1856 = vlaneseq
    %v1857 = vshrl.u32 %v1856, 7
    %v1858 = vsub.s32 3, %v1857
    %v1859 = vrot.slane %v1004, %v1858
    %v1860 = vlaneseq
    %v1861 = vshrl.u32 %v1860, 7
    %v1862 = vsub.s32 4, %v1861
    %v1863 = vrot.slane %v1004, %v1862
    %v1864 = vlaneseq
    %v1865 = vshrl.u32 %v1864, 7
    %v1866 = vsub.s32 5, %v1865
    %v1867 = vrot.slane %v1004, %v1866
    %v1868 = vlaneseq
    %v1869 = vshrl.u32 %v1868, 7
    %v1870 = vsub.s32 6, %v1869
    %v1871 = vrot.slane %v1004, %v1870
    %v1872 = vlaneseq
    %v1873 = vshrl.u32 %v1872, 7
    %v1874 = vsub.s32 7, %v1873
    %v1875 = vrot.slane %v1004, %v1874
    %v1876 = vlaneseq
    %v1877 = vshrl.u32 %v1876, 7
    %v1878 = vsub.s32 0, %v1877
    %v1879 = vrot.slane %v1005, %v1878
    %v1880 = vlaneseq
    %v1881 = vshrl.u32 %v1880, 7
    %v1882 = vsub.s32 1, %v1881
    %v1883 = vrot.slane %v1005, %v1882
    %v1884 = vlaneseq
    %v1885 = vshrl.u32 %v1884, 7
    %v1886 = vsub.s32 2, %v1885
    %v1887 = vrot.slane %v1005, %v1886
    %v1888 = vlaneseq
    %v1889 = vshrl.u32 %v1888, 7
    %v1890 = vsub.s32 3, %v1889
    %v1891 = vrot.slane %v1005, %v1890
    %v1892 = vlaneseq
    %v1893 = vshrl.u32 %v1892, 7
    %v1894 = vsub.s32 4, %v1893
    %v1895 = vrot.slane %v1005, %v1894
    %v1896 = vlaneseq
    %v1897 = vshrl.u32 %v1896, 7
    %v1898 = vsub.s32 5, %v1897
    %v1899 = vrot.slane %v1005, %v1898
    %v1900 = vlaneseq
    %v1901 = vshrl.u32 %v1900, 7
    %v1902 = vsub.s32 6, %v1901
    %v1903 = vrot.slane %v1005, %v1902
    %v1904 = vlaneseq
    %v1905 = vshrl.u32 %v1904, 7
    %v1906 = vsub.s32 7, %v1905
    %v1907 = vrot.slane %v1005, %v1906
    %v1908 = vlaneseq
    %v1909 = vshrl.u32 %v1908, 7
    %v1910 = vsub.s32 0, %v1909
    %v1911 = vrot.slane %v1006, %v1910
    %v1912 = vlaneseq
    %v1913 = vshrl.u32 %v1912, 7
    %v1914 = vsub.s32 1, %v1913
    %v1915 = vrot.slane %v1006, %v1914
    %v1916 = vlaneseq
    %v1917 = vshrl.u32 %v1916, 7
    %v1918 = vsub.s32 2, %v1917
    %v1919 = vrot.slane %v1006, %v1918
    %v1920 = vlaneseq
    %v1921 = vshrl.u32 %v1920, 7
    %v1922 = vsub.s32 3, %v1921
    %v1923 = vrot.slane %v1006, %v1922
    %v1924 = vlaneseq
    %v1925 = vshrl.u32 %v1924, 7
    %v1926 = vsub.s32 4, %v1925
    %v1927 = vrot.slane %v1006, %v1926
    %v1928 = vlaneseq
    %v1929 = vshrl.u32 %v1928, 7
    %v1930 = vsub.s32 5, %v1929
    %v1931 = vrot.slane %v1006, %v1930
    %v1932 = vlaneseq
    %v1933 = vshrl.u32 %v1932, 7
    %v1934 = vsub.s32 6, %v1933
    %v1935 = vrot.slane %v1006, %v1934
    %v1936 = vlaneseq
    %v1937 = vshrl.u32 %v1936, 7
    %v1938 = vsub.s32 7, %v1937
    %v1939 = vrot.slane %v1006, %v1938
    %v1940 = vlaneseq
    %v1941 = vshrl.u32 %v1940, 7
    %v1942 = vsub.s32 0, %v1941
    %v1943 = vrot.slane %v1007, %v1942
    %v1944 = vlaneseq
    %v1945 = vshrl.u32 %v1944, 7
    %v1946 = vsub.s32 1, %v1945
    %v1947 = vrot.slane %v1007, %v1946
    %v1948 = vlaneseq
    %v1949 = vshrl.u32 %v1948, 7
    %v1950 = vsub.s32 2, %v1949
    %v1951 = vrot.slane %v1007, %v1950
    %v1952 = vlaneseq
    %v1953 = vshrl.u32 %v1952, 7
    %v1954 = vsub.s32 3, %v1953
    %v1955 = vrot.slane %v1007, %v1954
    %v1956 = vlaneseq
    %v1957 = vshrl.u32 %v1956, 7
    %v1958 = vsub.s32 4, %v1957
    %v1959 = vrot.slane %v1007, %v1958
    %v1960 = vlaneseq
    %v1961 = vshrl.u32 %v1960, 7
    %v1962 = vsub.s32 5, %v1961
    %v1963 = vrot.slane %v1007, %v1962
    %v1964 = vlaneseq
    %v1965 = vshrl.u32 %v1964, 7
    %v1966 = vsub.s32 6, %v1965
    %v1967 = vrot.slane %v1007, %v1966
    %v1968 = vlaneseq
    %v1969 = vshrl.u32 %v1968, 7
    %v1970 = vsub.s32 7, %v1969
    %v1971 = vrot.slane %v1007, %v1970
    %v1972 = vlaneseq
    %v1973 = vshrl.u32 %v1972, 7
    %v1974 = vsub.s32 0, %v1973
    %v1975 = vrot.slane %v1008, %v1974
    %v1976 = vlaneseq
    %v1977 = vshrl.u32 %v1976, 7
    %v1978 = vsub.s32 1, %v1977
    %v1979 = vrot.slane %v1008, %v1978
    %v1980 = vlaneseq
    %v1981 = vshrl.u32 %v1980, 7
    %v1982 = vsub.s32 2, %v1981
    %v1983 = vrot.slane %v1008, %v1982
    %v1984 = vlaneseq
    %v1985 = vshrl.u32 %v1984, 7
    %v1986 = vsub.s32 3, %v1985
    %v1987 = vrot.slane %v1008, %v1986
    %v1988 = vlaneseq
    %v1989 = vshrl.u32 %v1988, 7
    %v1990 = vsub.s32 4, %v1989
    %v1991 = vrot.slane %v1008, %v1990
    %v1992 = vlaneseq
    %v1993 = vshrl.u32 %v1992, 7
    %v1994 = vsub.s32 5, %v1993
    %v1995 = vrot.slane %v1008, %v1994
    %v1996 = vlaneseq
    %v1997 = vshrl.u32 %v1996, 7
    %v1998 = vsub.s32 6, %v1997
    %v1999 = vrot.slane %v1008, %v1998
    %v2000 = vlaneseq
    %v2001 = vshrl.u32 %v2000, 7
    %v2002 = vsub.s32 7, %v2001
    %v2003 = vrot.slane %v1008, %v2002
    %v2004 = vlaneseq
    %v2005 = vshrl.u32 %v2004, 7
    %v2006 = vsub.s32 0, %v2005
    %v2007 = vrot.slane %v1009, %v2006
    %v2008 = vlaneseq
    %v2009 = vshrl.u32 %v2008, 7
    %v2010 = vsub.s32 1, %v2009
    %v2011 = vrot.slane %v1009, %v2010
    %v2012 = vlaneseq
    %v2013 = vshrl.u32 %v2012, 7
    %v2014 = vsub.s32 2, %v2013
    %v2015 = vrot.slane %v1009, %v2014
    %v2016 = vlaneseq
    %v2017 = vshrl.u32 %v2016, 7
    %v2018 = vsub.s32 3, %v2017
    %v2019 = vrot.slane %v1009, %v2018
    %v2020 = vlaneseq
    %v2021 = vshrl.u32 %v2020, 7
    %v2022 = vsub.s32 4, %v2021
    %v2023 = vrot.slane %v1009, %v2022
    %v2024 = vlaneseq
    %v2025 = vshrl.u32 %v2024, 7
    %v2026 = vsub.s32 5, %v2025
    %v2027 = vrot.slane %v1009, %v2026
    %v2028 = vlaneseq
    %v2029 = vshrl.u32 %v2028, 7
    %v2030 = vsub.s32 6, %v2029
    %v2031 = vrot.slane %v1009, %v2030
    %v2032 = vlaneseq
    %v2033 = vshrl.u32 %v2032, 7
    %v2034 = vsub.s32 7, %v2033
    %v2035 = vrot.slane %v1009, %v2034
    %v2036 = vlaneseq
    %v2037 = vshrl.u32 %v2036, 7
    %v2038 = vsub.s32 0, %v2037
    %v2039 = vrot.slane %v1010, %v2038
    %v2040 = vlaneseq
    %v2041 = vshrl.u32 %v2040, 7
    %v2042 = vsub.s32 1, %v2041
    %v2043 = vrot.slane %v1010, %v2042
    %v2044 = vlaneseq
    %v2045 = vshrl.u32 %v2044, 7
    %v2046 = vsub.s32 2, %v2045
    %v2047 = vrot.slane %v1010, %v2046
    %v2048 = vlaneseq
    %v2049 = vshrl.u32 %v2048, 7
    %v2050 = vsub.s32 3, %v2049
    %v2051 = vrot.slane %v1010, %v2050
    %v2052 = vlaneseq
    %v2053 = vshrl.u32 %v2052, 7
    %v2054 = vsub.s32 4, %v2053
    %v2055 = vrot.slane %v1010, %v2054
    %v2056 = vlaneseq
    %v2057 = vshrl.u32 %v2056, 7
    %v2058 = vsub.s32 5, %v2057
    %v2059 = vrot.slane %v1010, %v2058
    %v2060 = vlaneseq
    %v2061 = vshrl.u32 %v2060, 7
    %v2062 = vsub.s32 6, %v2061
    %v2063 = vrot.slane %v1010, %v2062
    %v2064 = vlaneseq
    %v2065 = vshrl.u32 %v2064, 7
    %v2066 = vsub.s32 7, %v2065
    %v2067 = vrot.slane %v1010, %v2066
    %v2068 = vlaneseq
    %v2069 = vshrl.u32 %v2068, 7
    %v2070 = vsub.s32 0, %v2069
    %v2071 = vrot.slane %v1011, %v2070
    %v2072 = vlaneseq
    %v2073 = vshrl.u32 %v2072, 7
    %v2074 = vsub.s32 1, %v2073
    %v2075 = vrot.slane %v1011, %v2074
    %v2076 = vlaneseq
    %v2077 = vshrl.u32 %v2076, 7
    %v2078 = vsub.s32 2, %v2077
    %v2079 = vrot.slane %v1011, %v2078
    %v2080 = vlaneseq
    %v2081 = vshrl.u32 %v2080, 7
    %v2082 = vsub.s32 3, %v2081
    %v2083 = vrot.slane %v1011, %v2082
    %v2084 = vlaneseq
    %v2085 = vshrl.u32 %v2084, 7
    %v2086 = vsub.s32 4, %v2085
    %v2087 = vrot.slane %v1011, %v2086
    %v2088 = vlaneseq
    %v2089 = vshrl.u32 %v2088, 7
    %v2090 = vsub.s32 5, %v2089
    %v2091 = vrot.slane %v1011, %v2090
    %v2092 = vlaneseq
    %v2093 = vshrl.u32 %v2092, 7
    %v2094 = vsub.s32 6, %v2093
    %v2095 = vrot.slane %v1011, %v2094
    %v2096 = vlaneseq
    %v2097 = vshrl.u32 %v2096, 7
    %v2098 = vsub.s32 7, %v2097
    %v2099 = vrot.slane %v1011, %v2098
    %v2100 = vlaneseq
    %v2101 = vshrl.u32 %v2100, 7
    %v2102 = vsub.s32 0, %v2101
    %v2103 = vrot.slane %v1012, %v2102
    %v2104 = vlaneseq
    %v2105 = vshrl.u32 %v2104, 7
    %v2106 = vsub.s32 1, %v2105
    %v2107 = vrot.slane %v1012, %v2106
    %v2108 = vlaneseq
    %v2109 = vshrl.u32 %v2108, 7
    %v2110 = vsub.s32 2, %v2109
    %v2111 = vrot.slane %v1012, %v2110
    %v2112 = vlaneseq
    %v2113 = vshrl.u32 %v2112, 7
    %v2114 = vsub.s32 3, %v2113
    %v2115 = vrot.slane %v1012, %v2114
    %v2116 = vlaneseq
    %v2117 = vshrl.u32 %v2116, 7
    %v2118 = vsub.s32 4, %v2117
    %v2119 = vrot.slane %v1012, %v2118
    %v2120 = vlaneseq
    %v2121 = vshrl.u32 %v2120, 7
    %v2122 = vsub.s32 5, %v2121
    %v2123 = vrot.slane %v1012, %v2122
    %v2124 = vlaneseq
    %v2125 = vshrl.u32 %v2124, 7
    %v2126 = vsub.s32 6, %v2125
    %v2127 = vrot.slane %v1012, %v2126
    %v2128 = vlaneseq
    %v2129 = vshrl.u32 %v2128, 7
    %v2130 = vsub.s32 7, %v2129
    %v2131 = vrot.slane %v1012, %v2130
    %v2132 = vlaneseq
    %v2133 = vshrl.u32 %v2132, 7
    %v2134 = vsub.s32 0, %v2133
    %v2135 = vrot.slane %v1013, %v2134
    %v2136 = vlaneseq
    %v2137 = vshrl.u32 %v2136, 7
    %v2138 = vsub.s32 1, %v2137
    %v2139 = vrot.slane %v1013, %v2138
    %v2140 = vlaneseq
    %v2141 = vshrl.u32 %v2140, 7
    %v2142 = vsub.s32 2, %v2141
    %v2143 = vrot.slane %v1013, %v2142
    %v2144 = vlaneseq
    %v2145 = vshrl.u32 %v2144, 7
    %v2146 = vsub.s32 3, %v2145
    %v2147 = vrot.slane %v1013, %v2146
    %v2148 = vlaneseq
    %v2149 = vshrl.u32 %v2148, 7
    %v2150 = vsub.s32 4, %v2149
    %v2151 = vrot.slane %v1013, %v2150
    %v2152 = vlaneseq
    %v2153 = vshrl.u32 %v2152, 7
    %v2154 = vsub.s32 5, %v2153
    %v2155 = vrot.slane %v1013, %v2154
    %v2156 = vlaneseq
    %v2157 = vshrl.u32 %v2156, 7
    %v2158 = vsub.s32 6, %v2157
    %v2159 = vrot.slane %v1013, %v2158
    %v2160 = vlaneseq
    %v2161 = vshrl.u32 %v2160, 7
    %v2162 = vsub.s32 7, %v2161
    %v2163 = vrot.slane %v1013, %v2162
    %v2164 = vlaneseq
    %v2165 = vshrl.u32 %v2164, 7
    %v2166 = vsub.s32 0, %v2165
    %v2167 = vrot.slane %v1014, %v2166
    %v2168 = vlaneseq
    %v2169 = vshrl.u32 %v2168, 7
    %v2170 = vsub.s32 1, %v2169
    %v2171 = vrot.slane %v1014, %v2170
    %v2172 = vlaneseq
    %v2173 = vshrl.u32 %v2172, 7
    %v2174 = vsub.s32 2, %v2173
    %v2175 = vrot.slane %v1014, %v2174
    %v2176 = vlaneseq
    %v2177 = vshrl.u32 %v2176, 7
    %v2178 = vsub.s32 3, %v2177
    %v2179 = vrot.slane %v1014, %v2178
    %v2180 = vlaneseq
    %v2181 = vshrl.u32 %v2180, 7
    %v2182 = vsub.s32 4, %v2181
    %v2183 = vrot.slane %v1014, %v2182
    %v2184 = vlaneseq
    %v2185 = vshrl.u32 %v2184, 7
    %v2186 = vsub.s32 5, %v2185
    %v2187 = vrot.slane %v1014, %v2186
    %v2188 = vlaneseq
    %v2189 = vshrl.u32 %v2188, 7
    %v2190 = vsub.s32 6, %v2189
    %v2191 = vrot.slane %v1014, %v2190
    %v2192 = vlaneseq
    %v2193 = vshrl.u32 %v2192, 7
    %v2194 = vsub.s32 7, %v2193
    %v2195 = vrot.slane %v1014, %v2194
    %v2196 = vlaneseq
    %v2197 = vshrl.u32 %v2196, 7
    %v2198 = vsub.s32 0, %v2197
    %v2199 = vrot.slane %v1015, %v2198
    %v2200 = vlaneseq
    %v2201 = vshrl.u32 %v2200, 7
    %v2202 = vsub.s32 1, %v2201
    %v2203 = vrot.slane %v1015, %v2202
    %v2204 = vlaneseq
    %v2205 = vshrl.u32 %v2204, 7
    %v2206 = vsub.s32 2, %v2205
    %v2207 = vrot.slane %v1015, %v2206
    %v2208 = vlaneseq
    %v2209 = vshrl.u32 %v2208, 7
    %v2210 = vsub.s32 3, %v2209
    %v2211 = vrot.slane %v1015, %v2210
    %v2212 = vlaneseq
    %v2213 = vshrl.u32 %v2212, 7
    %v2214 = vsub.s32 4, %v2213
    %v2215 = vrot.slane %v1015, %v2214
    %v2216 = vlaneseq
    %v2217 = vshrl.u32 %v2216, 7
    %v2218 = vsub.s32 5, %v2217
    %v2219 = vrot.slane %v1015, %v2218
    %v2220 = vlaneseq
    %v2221 = vshrl.u32 %v2220, 7
    %v2222 = vsub.s32 6, %v2221
    %v2223 = vrot.slane %v1015, %v2222
    %v2224 = vlaneseq
    %v2225 = vshrl.u32 %v2224, 7
    %v2226 = vsub.s32 7, %v2225
    %v2227 = vrot.slane %v1015, %v2226
    %v2228 = vlaneseq
    %v2229 = vshrl.u32 %v2228, 7
    %v2230 = vsub.s32 0, %v2229
    %v2231 = vrot.slane %v1016, %v2230
    %v2232 = vlaneseq
    %v2233 = vshrl.u32 %v2232, 7
    %v2234 = vsub.s32 1, %v2233
    %v2235 = vrot.slane %v1016, %v2234
    %v2236 = vlaneseq
    %v2237 = vshrl.u32 %v2236, 7
    %v2238 = vsub.s32 2, %v2237
    %v2239 = vrot.slane %v1016, %v2238
    %v2240 = vlaneseq
    %v2241 = vshrl.u32 %v2240, 7
    %v2242 = vsub.s32 3, %v2241
    %v2243 = vrot.slane %v1016, %v2242
    %v2244 = vlaneseq
    %v2245 = vshrl.u32 %v2244, 7
    %v2246 = vsub.s32 4, %v2245
    %v2247 = vrot.slane %v1016, %v2246
    %v2248 = vlaneseq
    %v2249 = vshrl.u32 %v2248, 7
    %v2250 = vsub.s32 5, %v2249
    %v2251 = vrot.slane %v1016, %v2250
    %v2252 = vlaneseq
    %v2253 = vshrl.u32 %v2252, 7
    %v2254 = vsub.s32 6, %v2253
    %v2255 = vrot.slane %v1016, %v2254
    %v2256 = vlaneseq
    %v2257 = vshrl.u32 %v2256, 7
    %v2258 = vsub.s32 7, %v2257
    %v2259 = vrot.slane %v1016, %v2258
    %v2260 = vlaneseq
    %v2261 = vshrl.u32 %v2260, 7
    %v2262 = vsub.s32 0, %v2261
    %v2263 = vrot.slane %v1017, %v2262
    %v2264 = vlaneseq
    %v2265 = vshrl.u32 %v2264, 7
    %v2266 = vsub.s32 1, %v2265
    %v2267 = vrot.slane %v1017, %v2266
    %v2268 = vlaneseq
    %v2269 = vshrl.u32 %v2268, 7
    %v2270 = vsub.s32 2, %v2269
    %v2271 = vrot.slane %v1017, %v2270
    %v2272 = vlaneseq
    %v2273 = vshrl.u32 %v2272, 7
    %v2274 = vsub.s32 3, %v2273
    %v2275 = vrot.slane %v1017, %v2274
    %v2276 = vlaneseq
    %v2277 = vshrl.u32 %v2276, 7
    %v2278 = vsub.s32 4, %v2277
    %v2279 = vrot.slane %v1017, %v2278
    %v2280 = vlaneseq
    %v2281 = vshrl.u32 %v2280, 7
    %v2282 = vsub.s32 5, %v2281
    %v2283 = vrot.slane %v1017, %v2282
    %v2284 = vlaneseq
    %v2285 = vshrl.u32 %v2284, 7
    %v2286 = vsub.s32 6, %v2285
    %v2287 = vrot.slane %v1017, %v2286
    %v2288 = vlaneseq
    %v2289 = vshrl.u32 %v2288, 7
    %v2290 = vsub.s32 7, %v2289
    %v2291 = vrot.slane %v1017, %v2290
    %v2292 = vlaneseq
    %v2293 = vshrl.u32 %v2292, 7
    %v2294 = vsub.s32 0, %v2293
    %v2295 = vrot.slane %v1018, %v2294
    %v2296 = vlaneseq
    %v2297 = vshrl.u32 %v2296, 7
    %v2298 = vsub.s32 1, %v2297
    %v2299 = vrot.slane %v1018, %v2298
    %v2300 = vlaneseq
    %v2301 = vshrl.u32 %v2300, 7
    %v2302 = vsub.s32 2, %v2301
    %v2303 = vrot.slane %v1018, %v2302
    %v2304 = vlaneseq
    %v2305 = vshrl.u32 %v2304, 7
    %v2306 = vsub.s32 3, %v2305
    %v2307 = vrot.slane %v1018, %v2306
    %v2308 = vlaneseq
    %v2309 = vshrl.u32 %v2308, 7
    %v2310 = vsub.s32 4, %v2309
    %v2311 = vrot.slane %v1018, %v2310
    %v2312 = vlaneseq
    %v2313 = vshrl.u32 %v2312, 7
    %v2314 = vsub.s32 5, %v2313
    %v2315 = vrot.slane %v1018, %v2314
    %v2316 = vlaneseq
    %v2317 = vshrl.u32 %v2316, 7
    %v2318 = vsub.s32 6, %v2317
    %v2319 = vrot.slane %v1018, %v2318
    %v2320 = vlaneseq
    %v2321 = vshrl.u32 %v2320, 7
    %v2322 = vsub.s32 7, %v2321
    %v2323 = vrot.slane %v1018, %v2322
    %v2324 = vlaneseq
    %v2325 = vshrl.u32 %v2324, 7
    %v2326 = vsub.s32 0, %v2325
    %v2327 = vrot.slane %v1019, %v2326
    %v2328 = vlaneseq
    %v2329 = vshrl.u32 %v2328, 7
    %v2330 = vsub.s32 1, %v2329
    %v2331 = vrot.slane %v1019, %v2330
    %v2332 = vlaneseq
    %v2333 = vshrl.u32 %v2332, 7
    %v2334 = vsub.s32 2, %v2333
    %v2335 = vrot.slane %v1019, %v2334
    %v2336 = vlaneseq
    %v2337 = vshrl.u32 %v2336, 7
    %v2338 = vsub.s32 3, %v2337
    %v2339 = vrot.slane %v1019, %v2338
    %v2340 = vlaneseq
    %v2341 = vshrl.u32 %v2340, 7
    %v2342 = vsub.s32 4, %v2341
    %v2343 = vrot.slane %v1019, %v2342
    %v2344 = vlaneseq
    %v2345 = vshrl.u32 %v2344, 7
    %v2346 = vsub.s32 5, %v2345
    %v2347 = vrot.slane %v1019, %v2346
    %v2348 = vlaneseq
    %v2349 = vshrl.u32 %v2348, 7
    %v2350 = vsub.s32 6, %v2349
    %v2351 = vrot.slane %v1019, %v2350
    %v2352 = vlaneseq
    %v2353 = vshrl.u32 %v2352, 7
    %v2354 = vsub.s32 7, %v2353
    %v2355 = vrot.slane %v1019, %v2354
    %v2356 = vlaneseq
    %v2357 = vshrl.u32 %v2356, 7
    %v2358 = vsub.s32 0, %v2357
    %v2359 = vrot.slane %v1020, %v2358
    %v2360 = vlaneseq
    %v2361 = vshrl.u32 %v2360, 7
    %v2362 = vsub.s32 1, %v2361
    %v2363 = vrot.slane %v1020, %v2362
    %v2364 = vlaneseq
    %v2365 = vshrl.u32 %v2364, 7
    %v2366 = vsub.s32 2, %v2365
    %v2367 = vrot.slane %v1020, %v2366
    %v2368 = vlaneseq
    %v2369 = vshrl.u32 %v2368, 7
    %v2370 = vsub.s32 3, %v2369
    %v2371 = vrot.slane %v1020, %v2370
    %v2372 = vlaneseq
    %v2373 = vshrl.u32 %v2372, 7
    %v2374 = vsub.s32 4, %v2373
    %v2375 = vrot.slane %v1020, %v2374
    %v2376 = vlaneseq
    %v2377 = vshrl.u32 %v2376, 7
    %v2378 = vsub.s32 5, %v2377
    %v2379 = vrot.slane %v1020, %v2378
    %v2380 = vlaneseq
    %v2381 = vshrl.u32 %v2380, 7
    %v2382 = vsub.s32 6, %v2381
    %v2383 = vrot.slane %v1020, %v2382
    %v2384 = vlaneseq
    %v2385 = vshrl.u32 %v2384, 7
    %v2386 = vsub.s32 7, %v2385
    %v2387 = vrot.slane %v1020, %v2386
    %v2388 = vlaneseq
    %v2389 = vshrl.u32 %v2388, 7
    %v2390 = vsub.s32 0, %v2389
    %v2391 = vrot.slane %v1021, %v2390
    %v2392 = vlaneseq
    %v2393 = vshrl.u32 %v2392, 7
    %v2394 = vsub.s32 1, %v2393
    %v2395 = vrot.slane %v1021, %v2394
    %v2396 = vlaneseq
    %v2397 = vshrl.u32 %v2396, 7
    %v2398 = vsub.s32 2, %v2397
    %v2399 = vrot.slane %v1021, %v2398
    %v2400 = vlaneseq
    %v2401 = vshrl.u32 %v2400, 7
    %v2402 = vsub.s32 3, %v2401
    %v2403 = vrot.slane %v1021, %v2402
    %v2404 = vlaneseq
    %v2405 = vshrl.u32 %v2404, 7
    %v2406 = vsub.s32 4, %v2405
    %v2407 = vrot.slane %v1021, %v2406
    %v2408 = vlaneseq
    %v2409 = vshrl.u32 %v2408, 7
    %v2410 = vsub.s32 5, %v2409
    %v2411 = vrot.slane %v1021, %v2410
    %v2412 = vlaneseq
    %v2413 = vshrl.u32 %v2412, 7
    %v2414 = vsub.s32 6, %v2413
    %v2415 = vrot.slane %v1021, %v2414
    %v2416 = vlaneseq
    %v2417 = vshrl.u32 %v2416, 7
    %v2418 = vsub.s32 7, %v2417
    %v2419 = vrot.slane %v1021, %v2418
    %v2420 = vlaneseq
    %v2421 = vshrl.u32 %v2420, 7
    %v2422 = vsub.s32 0, %v2421
    %v2423 = vrot.slane %v1022, %v2422
    %v2424 = vlaneseq
    %v2425 = vshrl.u32 %v2424, 7
    %v2426 = vsub.s32 1, %v2425
    %v2427 = vrot.slane %v1022, %v2426
    %v2428 = vlaneseq
    %v2429 = vshrl.u32 %v2428, 7
    %v2430 = vsub.s32 2, %v2429
    %v2431 = vrot.slane %v1022, %v2430
    %v2432 = vlaneseq
    %v2433 = vshrl.u32 %v2432, 7
    %v2434 = vsub.s32 3, %v2433
    %v2435 = vrot.slane %v1022, %v2434
    %v2436 = vlaneseq
    %v2437 = vshrl.u32 %v2436, 7
    %v2438 = vsub.s32 4, %v2437
    %v2439 = vrot.slane %v1022, %v2438
    %v2440 = vlaneseq
    %v2441 = vshrl.u32 %v2440, 7
    %v2442 = vsub.s32 5, %v2441
    %v2443 = vrot.slane %v1022, %v2442
    %v2444 = vlaneseq
    %v2445 = vshrl.u32 %v2444, 7
    %v2446 = vsub.s32 6, %v2445
    %v2447 = vrot.slane %v1022, %v2446
    %v2448 = vlaneseq
    %v2449 = vshrl.u32 %v2448, 7
    %v2450 = vsub.s32 7, %v2449
    %v2451 = vrot.slane %v1022, %v2450
    %v2452 = vlaneseq
    %v2453 = vshrl.u32 %v2452, 7
    %v2454 = vsub.s32 0, %v2453
    %v2455 = vrot.slane %v1023, %v2454
    %v2456 = vlaneseq
    %v2457 = vshrl.u32 %v2456, 7
    %v2458 = vsub.s32 1, %v2457
    %v2459 = vrot.slane %v1023, %v2458
    %v2460 = vlaneseq
    %v2461 = vshrl.u32 %v2460, 7
    %v2462 = vsub.s32 2, %v2461
    %v2463 = vrot.slane %v1023, %v2462
    %v2464 = vlaneseq
    %v2465 = vshrl.u32 %v2464, 7
    %v2466 = vsub.s32 3, %v2465
    %v2467 = vrot.slane %v1023, %v2466
    %v2468 = vlaneseq
    %v2469 = vshrl.u32 %v2468, 7
    %v2470 = vsub.s32 4, %v2469
    %v2471 = vrot.slane %v1023, %v2470
    %v2472 = vlaneseq
    %v2473 = vshrl.u32 %v2472, 7
    %v2474 = vsub.s32 5, %v2473
    %v2475 = vrot.slane %v1023, %v2474
    %v2476 = vlaneseq
    %v2477 = vshrl.u32 %v2476, 7
    %v2478 = vsub.s32 6, %v2477
    %v2479 = vrot.slane %v1023, %v2478
    %v2480 = vlaneseq
    %v2481 = vshrl.u32 %v2480, 7
    %v2482 = vsub.s32 7, %v2481
    %v2483 = vrot.slane %v1023, %v2482
    %v2484 = vlaneseq
    %v2485 = vshrl.u32 %v2484, 7
    %v2486 = vsub.s32 0, %v2485
    %v2487 = vrot.slane %v1024, %v2486
    %v2488 = vlaneseq
    %v2489 = vshrl.u32 %v2488, 7
    %v2490 = vsub.s32 1, %v2489
    %v2491 = vrot.slane %v1024, %v2490
    %v2492 = vlaneseq
    %v2493 = vshrl.u32 %v2492, 7
    %v2494 = vsub.s32 2, %v2493
    %v2495 = vrot.slane %v1024, %v2494
    %v2496 = vlaneseq
    %v2497 = vshrl.u32 %v2496, 7
    %v2498 = vsub.s32 3, %v2497
    %v2499 = vrot.slane %v1024, %v2498
    %v2500 = vlaneseq
    %v2501 = vshrl.u32 %v2500, 7
    %v2502 = vsub.s32 4, %v2501
    %v2503 = vrot.slane %v1024, %v2502
    %v2504 = vlaneseq
    %v2505 = vshrl.u32 %v2504, 7
    %v2506 = vsub.s32 5, %v2505
    %v2507 = vrot.slane %v1024, %v2506
    %v2508 = vlaneseq
    %v2509 = vshrl.u32 %v2508, 7
    %v2510 = vsub.s32 6, %v2509
    %v2511 = vrot.slane %v1024, %v2510
    %v2512 = vlaneseq
    %v2513 = vshrl.u32 %v2512, 7
    %v2514 = vsub.s32 7, %v2513
    %v2515 = vrot.slane %v1024, %v2514
    %v2516 = vlaneseq
    %v2517 = vshrl.u32 %v2516, 7
    %v2518 = vsub.s32 0, %v2517
    %v2519 = vrot.slane %v1025, %v2518
    %v2520 = vlaneseq
    %v2521 = vshrl.u32 %v2520, 7
    %v2522 = vsub.s32 1, %v2521
    %v2523 = vrot.slane %v1025, %v2522
    %v2524 = vlaneseq
    %v2525 = vshrl.u32 %v2524, 7
    %v2526 = vsub.s32 2, %v2525
    %v2527 = vrot.slane %v1025, %v2526
    %v2528 = vlaneseq
    %v2529 = vshrl.u32 %v2528, 7
    %v2530 = vsub.s32 3, %v2529
    %v2531 = vrot.slane %v1025, %v2530
    %v2532 = vlaneseq
    %v2533 = vshrl.u32 %v2532, 7
    %v2534 = vsub.s32 4, %v2533
    %v2535 = vrot.slane %v1025, %v2534
    %v2536 = vlaneseq
    %v2537 = vshrl.u32 %v2536, 7
    %v2538 = vsub.s32 5, %v2537
    %v2539 = vrot.slane %v1025, %v2538
    %v2540 = vlaneseq
    %v2541 = vshrl.u32 %v2540, 7
    %v2542 = vsub.s32 6, %v2541
    %v2543 = vrot.slane %v1025, %v2542
    %v2544 = vlaneseq
    %v2545 = vshrl.u32 %v2544, 7
    %v2546 = vsub.s32 7, %v2545
    %v2547 = vrot.slane %v1025, %v2546
    %v2548 = vlaneseq
    %v2549 = vshrl.u32 %v2548, 7
    %v2550 = vsub.s32 0, %v2549
    %v2551 = vrot.slane %v1026, %v2550
    %v2552 = vlaneseq
    %v2553 = vshrl.u32 %v2552, 7
    %v2554 = vsub.s32 1, %v2553
    %v2555 = vrot.slane %v1026, %v2554
    %v2556 = vlaneseq
    %v2557 = vshrl.u32 %v2556, 7
    %v2558 = vsub.s32 2, %v2557
    %v2559 = vrot.slane %v1026, %v2558
    %v2560 = vlaneseq
    %v2561 = vshrl.u32 %v2560, 7
    %v2562 = vsub.s32 3, %v2561
    %v2563 = vrot.slane %v1026, %v2562
    %v2564 = vlaneseq
    %v2565 = vshrl.u32 %v2564, 7
    %v2566 = vsub.s32 4, %v2565
    %v2567 = vrot.slane %v1026, %v2566
    %v2568 = vlaneseq
    %v2569 = vshrl.u32 %v2568, 7
    %v2570 = vsub.s32 5, %v2569
    %v2571 = vrot.slane %v1026, %v2570
    %v2572 = vlaneseq
    %v2573 = vshrl.u32 %v2572, 7
    %v2574 = vsub.s32 6, %v2573
    %v2575 = vrot.slane %v1026, %v2574
    %v2576 = vlaneseq
    %v2577 = vshrl.u32 %v2576, 7
    %v2578 = vsub.s32 7, %v2577
    %v2579 = vrot.slane %v1026, %v2578
    %v2580 = vlaneseq
    %v2581 = vshrl.u32 %v2580, 7
    %v2582 = vsub.s32 0, %v2581
    %v2583 = vrot.slane %v1027, %v2582
    %v2584 = vlaneseq
    %v2585 = vshrl.u32 %v2584, 7
    %v2586 = vsub.s32 1, %v2585
    %v2587 = vrot.slane %v1027, %v2586
    %v2588 = vlaneseq
    %v2589 = vshrl.u32 %v2588, 7
    %v2590 = vsub.s32 2, %v2589
    %v2591 = vrot.slane %v1027, %v2590
    %v2592 = vlaneseq
    %v2593 = vshrl.u32 %v2592, 7
    %v2594 = vsub.s32 3, %v2593
    %v2595 = vrot.slane %v1027, %v2594
    %v2596 = vlaneseq
    %v2597 = vshrl.u32 %v2596, 7
    %v2598 = vsub.s32 4, %v2597
    %v2599 = vrot.slane %v1027, %v2598
    %v2600 = vlaneseq
    %v2601 = vshrl.u32 %v2600, 7
    %v2602 = vsub.s32 5, %v2601
    %v2603 = vrot.slane %v1027, %v2602
    %v2604 = vlaneseq
    %v2605 = vshrl.u32 %v2604, 7
    %v2606 = vsub.s32 6, %v2605
    %v2607 = vrot.slane %v1027, %v2606
    %v2608 = vlaneseq
    %v2609 = vshrl.u32 %v2608, 7
    %v2610 = vsub.s32 7, %v2609
    %v2611 = vrot.slane %v1027, %v2610
    %v2612 = vcombine.low %v1079, %v1083
    %v2613 = vcombine.low %v1087, %v1091
    %v2614 = vcombine.low %v1095, %v1099
    %v2615 = vcombine.low %v1103, %v1107
    %v2617 = vunpack.c.l.s4 1966171168
    %v2618 = vunpack.c.0.s8 %v2617
    %v2619 = vlaneseq
    %v2620 = vshrl.u32 %v2619, 7
    %v2621 = vsub.s32 %v2618, %v2620
    %v2622 = vrot.slane %v2612, %v2621
    %v2624 = vunpack.c.l.s4 1966171168
    %v2625 = vunpack.c.0.s8 %v2624
    %v2626 = vlaneseq
    %v2627 = vshrl.u32 %v2626, 7
    %v2628 = vsub.s32 %v2625, %v2627
    %v2629 = vrot.slane %v2613, %v2628
    %v2631 = vunpack.c.l.s4 1966171168
    %v2632 = vunpack.c.0.s8 %v2631
    %v2633 = vlaneseq
    %v2634 = vshrl.u32 %v2633, 7
    %v2635 = vsub.s32 %v2632, %v2634
    %v2636 = vrot.slane %v2614, %v2635
    %v2638 = vunpack.c.l.s4 1966171168
    %v2639 = vunpack.c.0.s8 %v2638
    %v2640 = vlaneseq
    %v2641 = vshrl.u32 %v2640, 7
    %v2642 = vsub.s32 %v2639, %v2641
    %v2643 = vrot.slane %v2615, %v2642
    %v2644 = vcombine.low %v2622, %v2629
    %v2645 = vcombine.low %v2636, %v2643
    %v2647 = vunpack.c.l.s4 1966171168
    %v2648 = vunpack.c.0.s8 %v2647
    %v2649 = vlaneseq
    %v2650 = vshrl.u32 %v2649, 7
    %v2651 = vsub.s32 %v2648, %v2650
    %v2652 = vrot.slane %v2644, %v2651
    %v2654 = vunpack.c.l.s4 1966171168
    %v2655 = vunpack.c.0.s8 %v2654
    %v2656 = vlaneseq
    %v2657 = vshrl.u32 %v2656, 7
    %v2658 = vsub.s32 %v2655, %v2657
    %v2659 = vrot.slane %v2645, %v2658
    %v2660 = vcombine.low %v2652, %v2659
    %v2661 = vcombine.low %v1111, %v1115
    %v2662 = vcombine.low %v1119, %v1123
    %v2663 = vcombine.low %v1127, %v1131
    %v2664 = vcombine.low %v1135, %v1139
    %v2666 = vunpack.c.l.s4 1966171168
    %v2667 = vunpack.c.0.s8 %v2666
    %v2668 = vlaneseq
    %v2669 = vshrl.u32 %v2668, 7
    %v2670 = vsub.s32 %v2667, %v2669
    %v2671 = vrot.slane %v2661, %v2670
    %v2673 = vunpack.c.l.s4 1966171168
    %v2674 = vunpack.c.0.s8 %v2673
    %v2675 = vlaneseq
    %v2676 = vshrl.u32 %v2675, 7
    %v2677 = vsub.s32 %v2674, %v2676
    %v2678 = vrot.slane %v2662, %v2677
    %v2680 = vunpack.c.l.s4 1966171168
    %v2681 = vunpack.c.0.s8 %v2680
    %v2682 = vlaneseq
    %v2683 = vshrl.u32 %v2682, 7
    %v2684 = vsub.s32 %v2681, %v2683
    %v2685 = vrot.slane %v2663, %v2684
    %v2687 = vunpack.c.l.s4 1966171168
    %v2688 = vunpack.c.0.s8 %v2687
    %v2689 = vlaneseq
    %v2690 = vshrl.u32 %v2689, 7
    %v2691 = vsub.s32 %v2688, %v2690
    %v2692 = vrot.slane %v2664, %v2691
    %v2693 = vcombine.low %v2671, %v2678
    %v2694 = vcombine.low %v2685, %v2692
    %v2696 = vunpack.c.l.s4 1966171168
    %v2697 = vunpack.c.0.s8 %v2696
    %v2698 = vlaneseq
    %v2699 = vshrl.u32 %v2698, 7
    %v2700 = vsub.s32 %v2697, %v2699
    %v2701 = vrot.slane %v2693, %v2700
    %v2703 = vunpack.c.l.s4 1966171168
    %v2704 = vunpack.c.0.s8 %v2703
    %v2705 = vlaneseq
    %v2706 = vshrl.u32 %v2705, 7
    %v2707 = vsub.s32 %v2704, %v2706
    %v2708 = vrot.slane %v2694, %v2707
    %v2709 = vcombine.low %v2701, %v2708
    %v2710 = vcombine.low %v1143, %v1147
    %v2711 = vcombine.low %v1151, %v1155
    %v2712 = vcombine.low %v1159, %v1163
    %v2713 = vcombine.low %v1167, %v1171
    %v2715 = vunpack.c.l.s4 1966171168
    %v2716 = vunpack.c.0.s8 %v2715
    %v2717 = vlaneseq
    %v2718 = vshrl.u32 %v2717, 7
    %v2719 = vsub.s32 %v2716, %v2718
    %v2720 = vrot.slane %v2710, %v2719
    %v2722 = vunpack.c.l.s4 1966171168
    %v2723 = vunpack.c.0.s8 %v2722
    %v2724 = vlaneseq
    %v2725 = vshrl.u32 %v2724, 7
    %v2726 = vsub.s32 %v2723, %v2725
    %v2727 = vrot.slane %v2711, %v2726
    %v2729 = vunpack.c.l.s4 1966171168
    %v2730 = vunpack.c.0.s8 %v2729
    %v2731 = vlaneseq
    %v2732 = vshrl.u32 %v2731, 7
    %v2733 = vsub.s32 %v2730, %v2732
    %v2734 = vrot.slane %v2712, %v2733
    %v2736 = vunpack.c.l.s4 1966171168
    %v2737 = vunpack.c.0.s8 %v2736
    %v2738 = vlaneseq
    %v2739 = vshrl.u32 %v2738, 7
    %v2740 = vsub.s32 %v2737, %v2739
    %v2741 = vrot.slane %v2713, %v2740
    %v2742 = vcombine.low %v2720, %v2727
    %v2743 = vcombine.low %v2734, %v2741
    %v2745 = vunpack.c.l.s4 1966171168
    %v2746 = vunpack.c.0.s8 %v2745
    %v2747 = vlaneseq
    %v2748 = vshrl.u32 %v2747, 7
    %v2749 = vsub.s32 %v2746, %v2748
    %v2750 = vrot.slane %v2742, %v2749
    %v2752 = vunpack.c.l.s4 1966171168
    %v2753 = vunpack.c.0.s8 %v2752
    %v2754 = vlaneseq
    %v2755 = vshrl.u32 %v2754, 7
    %v2756 = vsub.s32 %v2753, %v2755
    %v2757 = vrot.slane %v2743, %v2756
    %v2758 = vcombine.low %v2750, %v2757
    %v2759 = vcombine.low %v1175, %v1179
    %v2760 = vcombine.low %v1183, %v1187
    %v2761 = vcombine.low %v1191, %v1195
    %v2762 = vcombine.low %v1199, %v1203
    %v2764 = vunpack.c.l.s4 1966171168
    %v2765 = vunpack.c.0.s8 %v2764
    %v2766 = vlaneseq
    %v2767 = vshrl.u32 %v2766, 7
    %v2768 = vsub.s32 %v2765, %v2767
    %v2769 = vrot.slane %v2759, %v2768
    %v2771 = vunpack.c.l.s4 1966171168
    %v2772 = vunpack.c.0.s8 %v2771
    %v2773 = vlaneseq
    %v2774 = vshrl.u32 %v2773, 7
    %v2775 = vsub.s32 %v2772, %v2774
    %v2776 = vrot.slane %v2760, %v2775
    %v2778 = vunpack.c.l.s4 1966171168
    %v2779 = vunpack.c.0.s8 %v2778
    %v2780 = vlaneseq
    %v2781 = vshrl.u32 %v2780, 7
    %v2782 = vsub.s32 %v2779, %v2781
    %v2783 = vrot.slane %v2761, %v2782
    %v2785 = vunpack.c.l.s4 1966171168
    %v2786 = vunpack.c.0.s8 %v2785
    %v2787 = vlaneseq
    %v2788 = vshrl.u32 %v2787, 7
    %v2789 = vsub.s32 %v2786, %v2788
    %v2790 = vrot.slane %v2762, %v2789
    %v2791 = vcombine.low %v2769, %v2776
    %v2792 = vcombine.low %v2783, %v2790
    %v2794 = vunpack.c.l.s4 1966171168
    %v2795 = vunpack.c.0.s8 %v2794
    %v2796 = vlaneseq
    %v2797 = vshrl.u32 %v2796, 7
    %v2798 = vsub.s32 %v2795, %v2797
    %v2799 = vrot.slane %v2791, %v2798
    %v2801 = vunpack.c.l.s4 1966171168
    %v2802 = vunpack.c.0.s8 %v2801
    %v2803 = vlaneseq
    %v2804 = vshrl.u32 %v2803, 7
    %v2805 = vsub.s32 %v2802, %v2804
    %v2806 = vrot.slane %v2792, %v2805
    %v2807 = vcombine.low %v2799, %v2806
    %v2808 = vcombine.low %v1207, %v1211
    %v2809 = vcombine.low %v1215, %v1219
    %v2810 = vcombine.low %v1223, %v1227
    %v2811 = vcombine.low %v1231, %v1235
    %v2813 = vunpack.c.l.s4 1966171168
    %v2814 = vunpack.c.0.s8 %v2813
    %v2815 = vlaneseq
    %v2816 = vshrl.u32 %v2815, 7
    %v2817 = vsub.s32 %v2814, %v2816
    %v2818 = vrot.slane %v2808, %v2817
    %v2820 = vunpack.c.l.s4 1966171168
    %v2821 = vunpack.c.0.s8 %v2820
    %v2822 = vlaneseq
    %v2823 = vshrl.u32 %v2822, 7
    %v2824 = vsub.s32 %v2821, %v2823
    %v2825 = vrot.slane %v2809, %v2824
    %v2827 = vunpack.c.l.s4 1966171168
    %v2828 = vunpack.c.0.s8 %v2827
    %v2829 = vlaneseq
    %v2830 = vshrl.u32 %v2829, 7
    %v2831 = vsub.s32 %v2828, %v2830
    %v2832 = vrot.slane %v2810, %v2831
    %v2834 = vunpack.c.l.s4 1966171168
    %v2835 = vunpack.c.0.s8 %v2834
    %v2836 = vlaneseq
    %v2837 = vshrl.u32 %v2836, 7
    %v2838 = vsub.s32 %v2835, %v2837
    %v2839 = vrot.slane %v2811, %v2838
    %v2840 = vcombine.low %v2818, %v2825
    %v2841 = vcombine.low %v2832, %v2839
    %v2843 = vunpack.c.l.s4 1966171168
    %v2844 = vunpack.c.0.s8 %v2843
    %v2845 = vlaneseq
    %v2846 = vshrl.u32 %v2845, 7
    %v2847 = vsub.s32 %v2844, %v2846
    %v2848 = vrot.slane %v2840, %v2847
    %v2850 = vunpack.c.l.s4 1966171168
    %v2851 = vunpack.c.0.s8 %v2850
    %v2852 = vlaneseq
    %v2853 = vshrl.u32 %v2852, 7
    %v2854 = vsub.s32 %v2851, %v2853
    %v2855 = vrot.slane %v2841, %v2854
    %v2856 = vcombine.low %v2848, %v2855
    %v2857 = vcombine.low %v1239, %v1243
    %v2858 = vcombine.low %v1247, %v1251
    %v2859 = vcombine.low %v1255, %v1259
    %v2860 = vcombine.low %v1263, %v1267
    %v2862 = vunpack.c.l.s4 1966171168
    %v2863 = vunpack.c.0.s8 %v2862
    %v2864 = vlaneseq
    %v2865 = vshrl.u32 %v2864, 7
    %v2866 = vsub.s32 %v2863, %v2865
    %v2867 = vrot.slane %v2857, %v2866
    %v2869 = vunpack.c.l.s4 1966171168
    %v2870 = vunpack.c.0.s8 %v2869
    %v2871 = vlaneseq
    %v2872 = vshrl.u32 %v2871, 7
    %v2873 = vsub.s32 %v2870, %v2872
    %v2874 = vrot.slane %v2858, %v2873
    %v2876 = vunpack.c.l.s4 1966171168
    %v2877 = vunpack.c.0.s8 %v2876
    %v2878 = vlaneseq
    %v2879 = vshrl.u32 %v2878, 7
    %v2880 = vsub.s32 %v2877, %v2879
    %v2881 = vrot.slane %v2859, %v2880
    %v2883 = vunpack.c.l.s4 1966171168
    %v2884 = vunpack.c.0.s8 %v2883
    %v2885 = vlaneseq
    %v2886 = vshrl.u32 %v2885, 7
    %v2887 = vsub.s32 %v2884, %v2886
    %v2888 = vrot.slane %v2860, %v2887
    %v2889 = vcombine.low %v2867, %v2874
    %v2890 = vcombine.low %v2881, %v2888
    %v2892 = vunpack.c.l.s4 1966171168
    %v2893 = vunpack.c.0.s8 %v2892
    %v2894 = vlaneseq
    %v2895 = vshrl.u32 %v2894, 7
    %v2896 = vsub.s32 %v2893, %v2895
    %v2897 = vrot.slane %v2889, %v2896
    %v2899 = vunpack.c.l.s4 1966171168
    %v2900 = vunpack.c.0.s8 %v2899
    %v2901 = vlaneseq
    %v2902 = vshrl.u32 %v2901, 7
    %v2903 = vsub.s32 %v2900, %v2902
    %v2904 = vrot.slane %v2890, %v2903
    %v2905 = vcombine.low %v2897, %v2904
    %v2906 = vcombine.low %v1271, %v1275
    %v2907 = vcombine.low %v1279, %v1283
    %v2908 = vcombine.low %v1287, %v1291
    %v2909 = vcombine.low %v1295, %v1299
    %v2911 = vunpack.c.l.s4 1966171168
    %v2912 = vunpack.c.0.s8 %v2911
    %v2913 = vlaneseq
    %v2914 = vshrl.u32 %v2913, 7
    %v2915 = vsub.s32 %v2912, %v2914
    %v2916 = vrot.slane %v2906, %v2915
    %v2918 = vunpack.c.l.s4 1966171168
    %v2919 = vunpack.c.0.s8 %v2918
    %v2920 = vlaneseq
    %v2921 = vshrl.u32 %v2920, 7
    %v2922 = vsub.s32 %v2919, %v2921
    %v2923 = vrot.slane %v2907, %v2922
    %v2925 = vunpack.c.l.s4 1966171168
    %v2926 = vunpack.c.0.s8 %v2925
    %v2927 = vlaneseq
    %v2928 = vshrl.u32 %v2927, 7
    %v2929 = vsub.s32 %v2926, %v2928
    %v2930 = vrot.slane %v2908, %v2929
    %v2932 = vunpack.c.l.s4 1966171168
    %v2933 = vunpack.c.0.s8 %v2932
    %v2934 = vlaneseq
    %v2935 = vshrl.u32 %v2934, 7
    %v2936 = vsub.s32 %v2933, %v2935
    %v2937 = vrot.slane %v2909, %v2936
    %v2938 = vcombine.low %v2916, %v2923
    %v2939 = vcombine.low %v2930, %v2937
    %v2941 = vunpack.c.l.s4 1966171168
    %v2942 = vunpack.c.0.s8 %v2941
    %v2943 = vlaneseq
    %v2944 = vshrl.u32 %v2943, 7
    %v2945 = vsub.s32 %v2942, %v2944
    %v2946 = vrot.slane %v2938, %v2945
    %v2948 = vunpack.c.l.s4 1966171168
    %v2949 = vunpack.c.0.s8 %v2948
    %v2950 = vlaneseq
    %v2951 = vshrl.u32 %v2950, 7
    %v2952 = vsub.s32 %v2949, %v2951
    %v2953 = vrot.slane %v2939, %v2952
    %v2954 = vcombine.low %v2946, %v2953
    %v2955 = vcombine.low %v1303, %v1307
    %v2956 = vcombine.low %v1311, %v1315
    %v2957 = vcombine.low %v1319, %v1323
    %v2958 = vcombine.low %v1327, %v1331
    %v2960 = vunpack.c.l.s4 1966171168
    %v2961 = vunpack.c.0.s8 %v2960
    %v2962 = vlaneseq
    %v2963 = vshrl.u32 %v2962, 7
    %v2964 = vsub.s32 %v2961, %v2963
    %v2965 = vrot.slane %v2955, %v2964
    %v2967 = vunpack.c.l.s4 1966171168
    %v2968 = vunpack.c.0.s8 %v2967
    %v2969 = vlaneseq
    %v2970 = vshrl.u32 %v2969, 7
    %v2971 = vsub.s32 %v2968, %v2970
    %v2972 = vrot.slane %v2956, %v2971
    %v2974 = vunpack.c.l.s4 1966171168
    %v2975 = vunpack.c.0.s8 %v2974
    %v2976 = vlaneseq
    %v2977 = vshrl.u32 %v2976, 7
    %v2978 = vsub.s32 %v2975, %v2977
    %v2979 = vrot.slane %v2957, %v2978
    %v2981 = vunpack.c.l.s4 1966171168
    %v2982 = vunpack.c.0.s8 %v2981
    %v2983 = vlaneseq
    %v2984 = vshrl.u32 %v2983, 7
    %v2985 = vsub.s32 %v2982, %v2984
    %v2986 = vrot.slane %v2958, %v2985
    %v2987 = vcombine.low %v2965, %v2972
    %v2988 = vcombine.low %v2979, %v2986
    %v2990 = vunpack.c.l.s4 1966171168
    %v2991 = vunpack.c.0.s8 %v2990
    %v2992 = vlaneseq
    %v2993 = vshrl.u32 %v2992, 7
    %v2994 = vsub.s32 %v2991, %v2993
    %v2995 = vrot.slane %v2987, %v2994
    %v2997 = vunpack.c.l.s4 1966171168
    %v2998 = vunpack.c.0.s8 %v2997
    %v2999 = vlaneseq
    %v3000 = vshrl.u32 %v2999, 7
    %v3001 = vsub.s32 %v2998, %v3000
    %v3002 = vrot.slane %v2988, %v3001
    %v3003 = vcombine.low %v2995, %v3002
    %v3004 = vcombine.low %v1335, %v1339
    %v3005 = vcombine.low %v1343, %v1347
    %v3006 = vcombine.low %v1351, %v1355
    %v3007 = vcombine.low %v1359, %v1363
    %v3009 = vunpack.c.l.s4 1966171168
    %v3010 = vunpack.c.0.s8 %v3009
    %v3011 = vlaneseq
    %v3012 = vshrl.u32 %v3011, 7
    %v3013 = vsub.s32 %v3010, %v3012
    %v3014 = vrot.slane %v3004, %v3013
    %v3016 = vunpack.c.l.s4 1966171168
    %v3017 = vunpack.c.0.s8 %v3016
    %v3018 = vlaneseq
    %v3019 = vshrl.u32 %v3018, 7
    %v3020 = vsub.s32 %v3017, %v3019
    %v3021 = vrot.slane %v3005, %v3020
    %v3023 = vunpack.c.l.s4 1966171168
    %v3024 = vunpack.c.0.s8 %v3023
    %v3025 = vlaneseq
    %v3026 = vshrl.u32 %v3025, 7
    %v3027 = vsub.s32 %v3024, %v3026
    %v3028 = vrot.slane %v3006, %v3027
    %v3030 = vunpack.c.l.s4 1966171168
    %v3031 = vunpack.c.0.s8 %v3030
    %v3032 = vlaneseq
    %v3033 = vshrl.u32 %v3032, 7
    %v3034 = vsub.s32 %v3031, %v3033
    %v3035 = vrot.slane %v3007, %v3034
    %v3036 = vcombine.low %v3014, %v3021
    %v3037 = vcombine.low %v3028, %v3035
    %v3039 = vunpack.c.l.s4 1966171168
    %v3040 = vunpack.c.0.s8 %v3039
    %v3041 = vlaneseq
    %v3042 = vshrl.u32 %v3041, 7
    %v3043 = vsub.s32 %v3040, %v3042
    %v3044 = vrot.slane %v3036, %v3043
    %v3046 = vunpack.c.l.s4 1966171168
    %v3047 = vunpack.c.0.s8 %v3046
    %v3048 = vlaneseq
    %v3049 = vshrl.u32 %v3048, 7
    %v3050 = vsub.s32 %v3047, %v3049
    %v3051 = vrot.slane %v3037, %v3050
    %v3052 = vcombine.low %v3044, %v3051
    %v3053 = vcombine.low %v1367, %v1371
    %v3054 = vcombine.low %v1375, %v1379
    %v3055 = vcombine.low %v1383, %v1387
    %v3056 = vcombine.low %v1391, %v1395
    %v3058 = vunpack.c.l.s4 1966171168
    %v3059 = vunpack.c.0.s8 %v3058
    %v3060 = vlaneseq
    %v3061 = vshrl.u32 %v3060, 7
    %v3062 = vsub.s32 %v3059, %v3061
    %v3063 = vrot.slane %v3053, %v3062
    %v3065 = vunpack.c.l.s4 1966171168
    %v3066 = vunpack.c.0.s8 %v3065
    %v3067 = vlaneseq
    %v3068 = vshrl.u32 %v3067, 7
    %v3069 = vsub.s32 %v3066, %v3068
    %v3070 = vrot.slane %v3054, %v3069
    %v3072 = vunpack.c.l.s4 1966171168
    %v3073 = vunpack.c.0.s8 %v3072
    %v3074 = vlaneseq
    %v3075 = vshrl.u32 %v3074, 7
    %v3076 = vsub.s32 %v3073, %v3075
    %v3077 = vrot.slane %v3055, %v3076
    %v3079 = vunpack.c.l.s4 1966171168
    %v3080 = vunpack.c.0.s8 %v3079
    %v3081 = vlaneseq
    %v3082 = vshrl.u32 %v3081, 7
    %v3083 = vsub.s32 %v3080, %v3082
    %v3084 = vrot.slane %v3056, %v3083
    %v3085 = vcombine.low %v3063, %v3070
    %v3086 = vcombine.low %v3077, %v3084
    %v3088 = vunpack.c.l.s4 1966171168
    %v3089 = vunpack.c.0.s8 %v3088
    %v3090 = vlaneseq
    %v3091 = vshrl.u32 %v3090, 7
    %v3092 = vsub.s32 %v3089, %v3091
    %v3093 = vrot.slane %v3085, %v3092
    %v3095 = vunpack.c.l.s4 1966171168
    %v3096 = vunpack.c.0.s8 %v3095
    %v3097 = vlaneseq
    %v3098 = vshrl.u32 %v3097, 7
    %v3099 = vsub.s32 %v3096, %v3098
    %v3100 = vrot.slane %v3086, %v3099
    %v3101 = vcombine.low %v3093, %v3100
    %v3102 = vcombine.low %v1399, %v1403
    %v3103 = vcombine.low %v1407, %v1411
    %v3104 = vcombine.low %v1415, %v1419
    %v3105 = vcombine.low %v1423, %v1427
    %v3107 = vunpack.c.l.s4 1966171168
    %v3108 = vunpack.c.0.s8 %v3107
    %v3109 = vlaneseq
    %v3110 = vshrl.u32 %v3109, 7
    %v3111 = vsub.s32 %v3108, %v3110
    %v3112 = vrot.slane %v3102, %v3111
    %v3114 = vunpack.c.l.s4 1966171168
    %v3115 = vunpack.c.0.s8 %v3114
    %v3116 = vlaneseq
    %v3117 = vshrl.u32 %v3116, 7
    %v3118 = vsub.s32 %v3115, %v3117
    %v3119 = vrot.slane %v3103, %v3118
    %v3121 = vunpack.c.l.s4 1966171168
    %v3122 = vunpack.c.0.s8 %v3121
    %v3123 = vlaneseq
    %v3124 = vshrl.u32 %v3123, 7
    %v3125 = vsub.s32 %v3122, %v3124
    %v3126 = vrot.slane %v3104, %v3125
    %v3128 = vunpack.c.l.s4 1966171168
    %v3129 = vunpack.c.0.s8 %v3128
    %v3130 = vlaneseq
    %v3131 = vshrl.u32 %v3130, 7
    %v3132 = vsub.s32 %v3129, %v3131
    %v3133 = vrot.slane %v3105, %v3132
    %v3134 = vcombine.low %v3112, %v3119
    %v3135 = vcombine.low %v3126, %v3133
    %v3137 = vunpack.c.l.s4 1966171168
    %v3138 = vunpack.c.0.s8 %v3137
    %v3139 = vlaneseq
    %v3140 = vshrl.u32 %v3139, 7
    %v3141 = vsub.s32 %v3138, %v3140
    %v3142 = vrot.slane %v3134, %v3141
    %v3144 = vunpack.c.l.s4 1966171168
    %v3145 = vunpack.c.0.s8 %v3144
    %v3146 = vlaneseq
    %v3147 = vshrl.u32 %v3146, 7
    %v3148 = vsub.s32 %v3145, %v3147
    %v3149 = vrot.slane %v3135, %v3148
    %v3150 = vcombine.low %v3142, %v3149
    %v3151 = vcombine.low %v1431, %v1435
    %v3152 = vcombine.low %v1439, %v1443
    %v3153 = vcombine.low %v1447, %v1451
    %v3154 = vcombine.low %v1455, %v1459
    %v3156 = vunpack.c.l.s4 1966171168
    %v3157 = vunpack.c.0.s8 %v3156
    %v3158 = vlaneseq
    %v3159 = vshrl.u32 %v3158, 7
    %v3160 = vsub.s32 %v3157, %v3159
    %v3161 = vrot.slane %v3151, %v3160
    %v3163 = vunpack.c.l.s4 1966171168
    %v3164 = vunpack.c.0.s8 %v3163
    %v3165 = vlaneseq
    %v3166 = vshrl.u32 %v3165, 7
    %v3167 = vsub.s32 %v3164, %v3166
    %v3168 = vrot.slane %v3152, %v3167
    %v3170 = vunpack.c.l.s4 1966171168
    %v3171 = vunpack.c.0.s8 %v3170
    %v3172 = vlaneseq
    %v3173 = vshrl.u32 %v3172, 7
    %v3174 = vsub.s32 %v3171, %v3173
    %v3175 = vrot.slane %v3153, %v3174
    %v3177 = vunpack.c.l.s4 1966171168
    %v3178 = vunpack.c.0.s8 %v3177
    %v3179 = vlaneseq
    %v3180 = vshrl.u32 %v3179, 7
    %v3181 = vsub.s32 %v3178, %v3180
    %v3182 = vrot.slane %v3154, %v3181
    %v3183 = vcombine.low %v3161, %v3168
    %v3184 = vcombine.low %v3175, %v3182
    %v3186 = vunpack.c.l.s4 1966171168
    %v3187 = vunpack.c.0.s8 %v3186
    %v3188 = vlaneseq
    %v3189 = vshrl.u32 %v3188, 7
    %v3190 = vsub.s32 %v3187, %v3189
    %v3191 = vrot.slane %v3183, %v3190
    %v3193 = vunpack.c.l.s4 1966171168
    %v3194 = vunpack.c.0.s8 %v3193
    %v3195 = vlaneseq
    %v3196 = vshrl.u32 %v3195, 7
    %v3197 = vsub.s32 %v3194, %v3196
    %v3198 = vrot.slane %v3184, %v3197
    %v3199 = vcombine.low %v3191, %v3198
    %v3200 = vcombine.low %v1463, %v1467
    %v3201 = vcombine.low %v1471, %v1475
    %v3202 = vcombine.low %v1479, %v1483
    %v3203 = vcombine.low %v1487, %v1491
    %v3205 = vunpack.c.l.s4 1966171168
    %v3206 = vunpack.c.0.s8 %v3205
    %v3207 = vlaneseq
    %v3208 = vshrl.u32 %v3207, 7
    %v3209 = vsub.s32 %v3206, %v3208
    %v3210 = vrot.slane %v3200, %v3209
    %v3212 = vunpack.c.l.s4 1966171168
    %v3213 = vunpack.c.0.s8 %v3212
    %v3214 = vlaneseq
    %v3215 = vshrl.u32 %v3214, 7
    %v3216 = vsub.s32 %v3213, %v3215
    %v3217 = vrot.slane %v3201, %v3216
    %v3219 = vunpack.c.l.s4 1966171168
    %v3220 = vunpack.c.0.s8 %v3219
    %v3221 = vlaneseq
    %v3222 = vshrl.u32 %v3221, 7
    %v3223 = vsub.s32 %v3220, %v3222
    %v3224 = vrot.slane %v3202, %v3223
    %v3226 = vunpack.c.l.s4 1966171168
    %v3227 = vunpack.c.0.s8 %v3226
    %v3228 = vlaneseq
    %v3229 = vshrl.u32 %v3228, 7
    %v3230 = vsub.s32 %v3227, %v3229
    %v3231 = vrot.slane %v3203, %v3230
    %v3232 = vcombine.low %v3210, %v3217
    %v3233 = vcombine.low %v3224, %v3231
    %v3235 = vunpack.c.l.s4 1966171168
    %v3236 = vunpack.c.0.s8 %v3235
    %v3237 = vlaneseq
    %v3238 = vshrl.u32 %v3237, 7
    %v3239 = vsub.s32 %v3236, %v3238
    %v3240 = vrot.slane %v3232, %v3239
    %v3242 = vunpack.c.l.s4 1966171168
    %v3243 = vunpack.c.0.s8 %v3242
    %v3244 = vlaneseq
    %v3245 = vshrl.u32 %v3244, 7
    %v3246 = vsub.s32 %v3243, %v3245
    %v3247 = vrot.slane %v3233, %v3246
    %v3248 = vcombine.low %v3240, %v3247
    %v3249 = vcombine.low %v1495, %v1499
    %v3250 = vcombine.low %v1503, %v1507
    %v3251 = vcombine.low %v1511, %v1515
    %v3252 = vcombine.low %v1519, %v1523
    %v3254 = vunpack.c.l.s4 1966171168
    %v3255 = vunpack.c.0.s8 %v3254
    %v3256 = vlaneseq
    %v3257 = vshrl.u32 %v3256, 7
    %v3258 = vsub.s32 %v3255, %v3257
    %v3259 = vrot.slane %v3249, %v3258
    %v3261 = vunpack.c.l.s4 1966171168
    %v3262 = vunpack.c.0.s8 %v3261
    %v3263 = vlaneseq
    %v3264 = vshrl.u32 %v3263, 7
    %v3265 = vsub.s32 %v3262, %v3264
    %v3266 = vrot.slane %v3250, %v3265
    %v3268 = vunpack.c.l.s4 1966171168
    %v3269 = vunpack.c.0.s8 %v3268
    %v3270 = vlaneseq
    %v3271 = vshrl.u32 %v3270, 7
    %v3272 = vsub.s32 %v3269, %v3271
    %v3273 = vrot.slane %v3251, %v3272
    %v3275 = vunpack.c.l.s4 1966171168
    %v3276 = vunpack.c.0.s8 %v3275
    %v3277 = vlaneseq
    %v3278 = vshrl.u32 %v3277, 7
    %v3279 = vsub.s32 %v3276, %v3278
    %v3280 = vrot.slane %v3252, %v3279
    %v3281 = vcombine.low %v3259, %v3266
    %v3282 = vcombine.low %v3273, %v3280
    %v3284 = vunpack.c.l.s4 1966171168
    %v3285 = vunpack.c.0.s8 %v3284
    %v3286 = vlaneseq
    %v3287 = vshrl.u32 %v3286, 7
    %v3288 = vsub.s32 %v3285, %v3287
    %v3289 = vrot.slane %v3281, %v3288
    %v3291 = vunpack.c.l.s4 1966171168
    %v3292 = vunpack.c.0.s8 %v3291
    %v3293 = vlaneseq
    %v3294 = vshrl.u32 %v3293, 7
    %v3295 = vsub.s32 %v3292, %v3294
    %v3296 = vrot.slane %v3282, %v3295
    %v3297 = vcombine.low %v3289, %v3296
    %v3298 = vcombine.low %v1527, %v1531
    %v3299 = vcombine.low %v1535, %v1539
    %v3300 = vcombine.low %v1543, %v1547
    %v3301 = vcombine.low %v1551, %v1555
    %v3303 = vunpack.c.l.s4 1966171168
    %v3304 = vunpack.c.0.s8 %v3303
    %v3305 = vlaneseq
    %v3306 = vshrl.u32 %v3305, 7
    %v3307 = vsub.s32 %v3304, %v3306
    %v3308 = vrot.slane %v3298, %v3307
    %v3310 = vunpack.c.l.s4 1966171168
    %v3311 = vunpack.c.0.s8 %v3310
    %v3312 = vlaneseq
    %v3313 = vshrl.u32 %v3312, 7
    %v3314 = vsub.s32 %v3311, %v3313
    %v3315 = vrot.slane %v3299, %v3314
    %v3317 = vunpack.c.l.s4 1966171168
    %v3318 = vunpack.c.0.s8 %v3317
    %v3319 = vlaneseq
    %v3320 = vshrl.u32 %v3319, 7
    %v3321 = vsub.s32 %v3318, %v3320
    %v3322 = vrot.slane %v3300, %v3321
    %v3324 = vunpack.c.l.s4 1966171168
    %v3325 = vunpack.c.0.s8 %v3324
    %v3326 = vlaneseq
    %v3327 = vshrl.u32 %v3326, 7
    %v3328 = vsub.s32 %v3325, %v3327
    %v3329 = vrot.slane %v3301, %v3328
    %v3330 = vcombine.low %v3308, %v3315
    %v3331 = vcombine.low %v3322, %v3329
    %v3333 = vunpack.c.l.s4 1966171168
    %v3334 = vunpack.c.0.s8 %v3333
    %v3335 = vlaneseq
    %v3336 = vshrl.u32 %v3335, 7
    %v3337 = vsub.s32 %v3334, %v3336
    %v3338 = vrot.slane %v3330, %v3337
    %v3340 = vunpack.c.l.s4 1966171168
    %v3341 = vunpack.c.0.s8 %v3340
    %v3342 = vlaneseq
    %v3343 = vshrl.u32 %v3342, 7
    %v3344 = vsub.s32 %v3341, %v3343
    %v3345 = vrot.slane %v3331, %v3344
    %v3346 = vcombine.low %v3338, %v3345
    %v3347 = vcombine.low %v1559, %v1563
    %v3348 = vcombine.low %v1567, %v1571
    %v3349 = vcombine.low %v1575, %v1579
    %v3350 = vcombine.low %v1583, %v1587
    %v3352 = vunpack.c.l.s4 1966171168
    %v3353 = vunpack.c.0.s8 %v3352
    %v3354 = vlaneseq
    %v3355 = vshrl.u32 %v3354, 7
    %v3356 = vsub.s32 %v3353, %v3355
    %v3357 = vrot.slane %v3347, %v3356
    %v3359 = vunpack.c.l.s4 1966171168
    %v3360 = vunpack.c.0.s8 %v3359
    %v3361 = vlaneseq
    %v3362 = vshrl.u32 %v3361, 7
    %v3363 = vsub.s32 %v3360, %v3362
    %v3364 = vrot.slane %v3348, %v3363
    %v3366 = vunpack.c.l.s4 1966171168
    %v3367 = vunpack.c.0.s8 %v3366
    %v3368 = vlaneseq
    %v3369 = vshrl.u32 %v3368, 7
    %v3370 = vsub.s32 %v3367, %v3369
    %v3371 = vrot.slane %v3349, %v3370
    %v3373 = vunpack.c.l.s4 1966171168
    %v3374 = vunpack.c.0.s8 %v3373
    %v3375 = vlaneseq
    %v3376 = vshrl.u32 %v3375, 7
    %v3377 = vsub.s32 %v3374, %v3376
    %v3378 = vrot.slane %v3350, %v3377
    %v3379 = vcombine.low %v3357, %v3364
    %v3380 = vcombine.low %v3371, %v3378
    %v3382 = vunpack.c.l.s4 1966171168
    %v3383 = vunpack.c.0.s8 %v3382
    %v3384 = vlaneseq
    %v3385 = vshrl.u32 %v3384, 7
    %v3386 = vsub.s32 %v3383, %v3385
    %v3387 = vrot.slane %v3379, %v3386
    %v3389 = vunpack.c.l.s4 1966171168
    %v3390 = vunpack.c.0.s8 %v3389
    %v3391 = vlaneseq
    %v3392 = vshrl.u32 %v3391, 7
    %v3393 = vsub.s32 %v3390, %v3392
    %v3394 = vrot.slane %v3380, %v3393
    %v3395 = vcombine.low %v3387, %v3394
    %v3396 = vcombine.low %v1591, %v1595
    %v3397 = vcombine.low %v1599, %v1603
    %v3398 = vcombine.low %v1607, %v1611
    %v3399 = vcombine.low %v1615, %v1619
    %v3401 = vunpack.c.l.s4 1966171168
    %v3402 = vunpack.c.0.s8 %v3401
    %v3403 = vlaneseq
    %v3404 = vshrl.u32 %v3403, 7
    %v3405 = vsub.s32 %v3402, %v3404
    %v3406 = vrot.slane %v3396, %v3405
    %v3408 = vunpack.c.l.s4 1966171168
    %v3409 = vunpack.c.0.s8 %v3408
    %v3410 = vlaneseq
    %v3411 = vshrl.u32 %v3410, 7
    %v3412 = vsub.s32 %v3409, %v3411
    %v3413 = vrot.slane %v3397, %v3412
    %v3415 = vunpack.c.l.s4 1966171168
    %v3416 = vunpack.c.0.s8 %v3415
    %v3417 = vlaneseq
    %v3418 = vshrl.u32 %v3417, 7
    %v3419 = vsub.s32 %v3416, %v3418
    %v3420 = vrot.slane %v3398, %v3419
    %v3422 = vunpack.c.l.s4 1966171168
    %v3423 = vunpack.c.0.s8 %v3422
    %v3424 = vlaneseq
    %v3425 = vshrl.u32 %v3424, 7
    %v3426 = vsub.s32 %v3423, %v3425
    %v3427 = vrot.slane %v3399, %v3426
    %v3428 = vcombine.low %v3406, %v3413
    %v3429 = vcombine.low %v3420, %v3427
    %v3431 = vunpack.c.l.s4 1966171168
    %v3432 = vunpack.c.0.s8 %v3431
    %v3433 = vlaneseq
    %v3434 = vshrl.u32 %v3433, 7
    %v3435 = vsub.s32 %v3432, %v3434
    %v3436 = vrot.slane %v3428, %v3435
    %v3438 = vunpack.c.l.s4 1966171168
    %v3439 = vunpack.c.0.s8 %v3438
    %v3440 = vlaneseq
    %v3441 = vshrl.u32 %v3440, 7
    %v3442 = vsub.s32 %v3439, %v3441
    %v3443 = vrot.slane %v3429, %v3442
    %v3444 = vcombine.low %v3436, %v3443
    %v3445 = vcombine.low %v1623, %v1627
    %v3446 = vcombine.low %v1631, %v1635
    %v3447 = vcombine.low %v1639, %v1643
    %v3448 = vcombine.low %v1647, %v1651
    %v3450 = vunpack.c.l.s4 1966171168
    %v3451 = vunpack.c.0.s8 %v3450
    %v3452 = vlaneseq
    %v3453 = vshrl.u32 %v3452, 7
    %v3454 = vsub.s32 %v3451, %v3453
    %v3455 = vrot.slane %v3445, %v3454
    %v3457 = vunpack.c.l.s4 1966171168
    %v3458 = vunpack.c.0.s8 %v3457
    %v3459 = vlaneseq
    %v3460 = vshrl.u32 %v3459, 7
    %v3461 = vsub.s32 %v3458, %v3460
    %v3462 = vrot.slane %v3446, %v3461
    %v3464 = vunpack.c.l.s4 1966171168
    %v3465 = vunpack.c.0.s8 %v3464
    %v3466 = vlaneseq
    %v3467 = vshrl.u32 %v3466, 7
    %v3468 = vsub.s32 %v3465, %v3467
    %v3469 = vrot.slane %v3447, %v3468
    %v3471 = vunpack.c.l.s4 1966171168
    %v3472 = vunpack.c.0.s8 %v3471
    %v3473 = vlaneseq
    %v3474 = vshrl.u32 %v3473, 7
    %v3475 = vsub.s32 %v3472, %v3474
    %v3476 = vrot.slane %v3448, %v3475
    %v3477 = vcombine.low %v3455, %v3462
    %v3478 = vcombine.low %v3469, %v3476
    %v3480 = vunpack.c.l.s4 1966171168
    %v3481 = vunpack.c.0.s8 %v3480
    %v3482 = vlaneseq
    %v3483 = vshrl.u32 %v3482, 7
    %v3484 = vsub.s32 %v3481, %v3483
    %v3485 = vrot.slane %v3477, %v3484
    %v3487 = vunpack.c.l.s4 1966171168
    %v3488 = vunpack.c.0.s8 %v3487
    %v3489 = vlaneseq
    %v3490 = vshrl.u32 %v3489, 7
    %v3491 = vsub.s32 %v3488, %v3490
    %v3492 = vrot.slane %v3478, %v3491
    %v3493 = vcombine.low %v3485, %v3492
    %v3494 = vcombine.low %v1655, %v1659
    %v3495 = vcombine.low %v1663, %v1667
    %v3496 = vcombine.low %v1671, %v1675
    %v3497 = vcombine.low %v1679, %v1683
    %v3499 = vunpack.c.l.s4 1966171168
    %v3500 = vunpack.c.0.s8 %v3499
    %v3501 = vlaneseq
    %v3502 = vshrl.u32 %v3501, 7
    %v3503 = vsub.s32 %v3500, %v3502
    %v3504 = vrot.slane %v3494, %v3503
    %v3506 = vunpack.c.l.s4 1966171168
    %v3507 = vunpack.c.0.s8 %v3506
    %v3508 = vlaneseq
    %v3509 = vshrl.u32 %v3508, 7
    %v3510 = vsub.s32 %v3507, %v3509
    %v3511 = vrot.slane %v3495, %v3510
    %v3513 = vunpack.c.l.s4 1966171168
    %v3514 = vunpack.c.0.s8 %v3513
    %v3515 = vlaneseq
    %v3516 = vshrl.u32 %v3515, 7
    %v3517 = vsub.s32 %v3514, %v3516
    %v3518 = vrot.slane %v3496, %v3517
    %v3520 = vunpack.c.l.s4 1966171168
    %v3521 = vunpack.c.0.s8 %v3520
    %v3522 = vlaneseq
    %v3523 = vshrl.u32 %v3522, 7
    %v3524 = vsub.s32 %v3521, %v3523
    %v3525 = vrot.slane %v3497, %v3524
    %v3526 = vcombine.low %v3504, %v3511
    %v3527 = vcombine.low %v3518, %v3525
    %v3529 = vunpack.c.l.s4 1966171168
    %v3530 = vunpack.c.0.s8 %v3529
    %v3531 = vlaneseq
    %v3532 = vshrl.u32 %v3531, 7
    %v3533 = vsub.s32 %v3530, %v3532
    %v3534 = vrot.slane %v3526, %v3533
    %v3536 = vunpack.c.l.s4 1966171168
    %v3537 = vunpack.c.0.s8 %v3536
    %v3538 = vlaneseq
    %v3539 = vshrl.u32 %v3538, 7
    %v3540 = vsub.s32 %v3537, %v3539
    %v3541 = vrot.slane %v3527, %v3540
    %v3542 = vcombine.low %v3534, %v3541
    %v3543 = vcombine.low %v1687, %v1691
    %v3544 = vcombine.low %v1695, %v1699
    %v3545 = vcombine.low %v1703, %v1707
    %v3546 = vcombine.low %v1711, %v1715
    %v3548 = vunpack.c.l.s4 1966171168
    %v3549 = vunpack.c.0.s8 %v3548
    %v3550 = vlaneseq
    %v3551 = vshrl.u32 %v3550, 7
    %v3552 = vsub.s32 %v3549, %v3551
    %v3553 = vrot.slane %v3543, %v3552
    %v3555 = vunpack.c.l.s4 1966171168
    %v3556 = vunpack.c.0.s8 %v3555
    %v3557 = vlaneseq
    %v3558 = vshrl.u32 %v3557, 7
    %v3559 = vsub.s32 %v3556, %v3558
    %v3560 = vrot.slane %v3544, %v3559
    %v3562 = vunpack.c.l.s4 1966171168
    %v3563 = vunpack.c.0.s8 %v3562
    %v3564 = vlaneseq
    %v3565 = vshrl.u32 %v3564, 7
    %v3566 = vsub.s32 %v3563, %v3565
    %v3567 = vrot.slane %v3545, %v3566
    %v3569 = vunpack.c.l.s4 1966171168
    %v3570 = vunpack.c.0.s8 %v3569
    %v3571 = vlaneseq
    %v3572 = vshrl.u32 %v3571, 7
    %v3573 = vsub.s32 %v3570, %v3572
    %v3574 = vrot.slane %v3546, %v3573
    %v3575 = vcombine.low %v3553, %v3560
    %v3576 = vcombine.low %v3567, %v3574
    %v3578 = vunpack.c.l.s4 1966171168
    %v3579 = vunpack.c.0.s8 %v3578
    %v3580 = vlaneseq
    %v3581 = vshrl.u32 %v3580, 7
    %v3582 = vsub.s32 %v3579, %v3581
    %v3583 = vrot.slane %v3575, %v3582
    %v3585 = vunpack.c.l.s4 1966171168
    %v3586 = vunpack.c.0.s8 %v3585
    %v3587 = vlaneseq
    %v3588 = vshrl.u32 %v3587, 7
    %v3589 = vsub.s32 %v3586, %v3588
    %v3590 = vrot.slane %v3576, %v3589
    %v3591 = vcombine.low %v3583, %v3590
    %v3592 = vcombine.low %v1719, %v1723
    %v3593 = vcombine.low %v1727, %v1731
    %v3594 = vcombine.low %v1735, %v1739
    %v3595 = vcombine.low %v1743, %v1747
    %v3597 = vunpack.c.l.s4 1966171168
    %v3598 = vunpack.c.0.s8 %v3597
    %v3599 = vlaneseq
    %v3600 = vshrl.u32 %v3599, 7
    %v3601 = vsub.s32 %v3598, %v3600
    %v3602 = vrot.slane %v3592, %v3601
    %v3604 = vunpack.c.l.s4 1966171168
    %v3605 = vunpack.c.0.s8 %v3604
    %v3606 = vlaneseq
    %v3607 = vshrl.u32 %v3606, 7
    %v3608 = vsub.s32 %v3605, %v3607
    %v3609 = vrot.slane %v3593, %v3608
    %v3611 = vunpack.c.l.s4 1966171168
    %v3612 = vunpack.c.0.s8 %v3611
    %v3613 = vlaneseq
    %v3614 = vshrl.u32 %v3613, 7
    %v3615 = vsub.s32 %v3612, %v3614
    %v3616 = vrot.slane %v3594, %v3615
    %v3618 = vunpack.c.l.s4 1966171168
    %v3619 = vunpack.c.0.s8 %v3618
    %v3620 = vlaneseq
    %v3621 = vshrl.u32 %v3620, 7
    %v3622 = vsub.s32 %v3619, %v3621
    %v3623 = vrot.slane %v3595, %v3622
    %v3624 = vcombine.low %v3602, %v3609
    %v3625 = vcombine.low %v3616, %v3623
    %v3627 = vunpack.c.l.s4 1966171168
    %v3628 = vunpack.c.0.s8 %v3627
    %v3629 = vlaneseq
    %v3630 = vshrl.u32 %v3629, 7
    %v3631 = vsub.s32 %v3628, %v3630
    %v3632 = vrot.slane %v3624, %v3631
    %v3634 = vunpack.c.l.s4 1966171168
    %v3635 = vunpack.c.0.s8 %v3634
    %v3636 = vlaneseq
    %v3637 = vshrl.u32 %v3636, 7
    %v3638 = vsub.s32 %v3635, %v3637
    %v3639 = vrot.slane %v3625, %v3638
    %v3640 = vcombine.low %v3632, %v3639
    %v3641 = vcombine.low %v1751, %v1755
    %v3642 = vcombine.low %v1759, %v1763
    %v3643 = vcombine.low %v1767, %v1771
    %v3644 = vcombine.low %v1775, %v1779
    %v3646 = vunpack.c.l.s4 1966171168
    %v3647 = vunpack.c.0.s8 %v3646
    %v3648 = vlaneseq
    %v3649 = vshrl.u32 %v3648, 7
    %v3650 = vsub.s32 %v3647, %v3649
    %v3651 = vrot.slane %v3641, %v3650
    %v3653 = vunpack.c.l.s4 1966171168
    %v3654 = vunpack.c.0.s8 %v3653
    %v3655 = vlaneseq
    %v3656 = vshrl.u32 %v3655, 7
    %v3657 = vsub.s32 %v3654, %v3656
    %v3658 = vrot.slane %v3642, %v3657
    %v3660 = vunpack.c.l.s4 1966171168
    %v3661 = vunpack.c.0.s8 %v3660
    %v3662 = vlaneseq
    %v3663 = vshrl.u32 %v3662, 7
    %v3664 = vsub.s32 %v3661, %v3663
    %v3665 = vrot.slane %v3643, %v3664
    %v3667 = vunpack.c.l.s4 1966171168
    %v3668 = vunpack.c.0.s8 %v3667
    %v3669 = vlaneseq
    %v3670 = vshrl.u32 %v3669, 7
    %v3671 = vsub.s32 %v3668, %v3670
    %v3672 = vrot.slane %v3644, %v3671
    %v3673 = vcombine.low %v3651, %v3658
    %v3674 = vcombine.low %v3665, %v3672
    %v3676 = vunpack.c.l.s4 1966171168
    %v3677 = vunpack.c.0.s8 %v3676
    %v3678 = vlaneseq
    %v3679 = vshrl.u32 %v3678, 7
    %v3680 = vsub.s32 %v3677, %v3679
    %v3681 = vrot.slane %v3673, %v3680
    %v3683 = vunpack.c.l.s4 1966171168
    %v3684 = vunpack.c.0.s8 %v3683
    %v3685 = vlaneseq
    %v3686 = vshrl.u32 %v3685, 7
    %v3687 = vsub.s32 %v3684, %v3686
    %v3688 = vrot.slane %v3674, %v3687
    %v3689 = vcombine.low %v3681, %v3688
    %v3690 = vcombine.low %v1783, %v1787
    %v3691 = vcombine.low %v1791, %v1795
    %v3692 = vcombine.low %v1799, %v1803
    %v3693 = vcombine.low %v1807, %v1811
    %v3695 = vunpack.c.l.s4 1966171168
    %v3696 = vunpack.c.0.s8 %v3695
    %v3697 = vlaneseq
    %v3698 = vshrl.u32 %v3697, 7
    %v3699 = vsub.s32 %v3696, %v3698
    %v3700 = vrot.slane %v3690, %v3699
    %v3702 = vunpack.c.l.s4 1966171168
    %v3703 = vunpack.c.0.s8 %v3702
    %v3704 = vlaneseq
    %v3705 = vshrl.u32 %v3704, 7
    %v3706 = vsub.s32 %v3703, %v3705
    %v3707 = vrot.slane %v3691, %v3706
    %v3709 = vunpack.c.l.s4 1966171168
    %v3710 = vunpack.c.0.s8 %v3709
    %v3711 = vlaneseq
    %v3712 = vshrl.u32 %v3711, 7
    %v3713 = vsub.s32 %v3710, %v3712
    %v3714 = vrot.slane %v3692, %v3713
    %v3716 = vunpack.c.l.s4 1966171168
    %v3717 = vunpack.c.0.s8 %v3716
    %v3718 = vlaneseq
    %v3719 = vshrl.u32 %v3718, 7
    %v3720 = vsub.s32 %v3717, %v3719
    %v3721 = vrot.slane %v3693, %v3720
    %v3722 = vcombine.low %v3700, %v3707
    %v3723 = vcombine.low %v3714, %v3721
    %v3725 = vunpack.c.l.s4 1966171168
    %v3726 = vunpack.c.0.s8 %v3725
    %v3727 = vlaneseq
    %v3728 = vshrl.u32 %v3727, 7
    %v3729 = vsub.s32 %v3726, %v3728
    %v3730 = vrot.slane %v3722, %v3729
    %v3732 = vunpack.c.l.s4 1966171168
    %v3733 = vunpack.c.0.s8 %v3732
    %v3734 = vlaneseq
    %v3735 = vshrl.u32 %v3734, 7
    %v3736 = vsub.s32 %v3733, %v3735
    %v3737 = vrot.slane %v3723, %v3736
    %v3738 = vcombine.low %v3730, %v3737
    %v3739 = vcombine.low %v1815, %v1819
    %v3740 = vcombine.low %v1823, %v1827
    %v3741 = vcombine.low %v1831, %v1835
    %v3742 = vcombine.low %v1839, %v1843
    %v3744 = vunpack.c.l.s4 1966171168
    %v3745 = vunpack.c.0.s8 %v3744
    %v3746 = vlaneseq
    %v3747 = vshrl.u32 %v3746, 7
    %v3748 = vsub.s32 %v3745, %v3747
    %v3749 = vrot.slane %v3739, %v3748
    %v3751 = vunpack.c.l.s4 1966171168
    %v3752 = vunpack.c.0.s8 %v3751
    %v3753 = vlaneseq
    %v3754 = vshrl.u32 %v3753, 7
    %v3755 = vsub.s32 %v3752, %v3754
    %v3756 = vrot.slane %v3740, %v3755
    %v3758 = vunpack.c.l.s4 1966171168
    %v3759 = vunpack.c.0.s8 %v3758
    %v3760 = vlaneseq
    %v3761 = vshrl.u32 %v3760, 7
    %v3762 = vsub.s32 %v3759, %v3761
    %v3763 = vrot.slane %v3741, %v3762
    %v3765 = vunpack.c.l.s4 1966171168
    %v3766 = vunpack.c.0.s8 %v3765
    %v3767 = vlaneseq
    %v3768 = vshrl.u32 %v3767, 7
    %v3769 = vsub.s32 %v3766, %v3768
    %v3770 = vrot.slane %v3742, %v3769
    %v3771 = vcombine.low %v3749, %v3756
    %v3772 = vcombine.low %v3763, %v3770
    %v3774 = vunpack.c.l.s4 1966171168
    %v3775 = vunpack.c.0.s8 %v3774
    %v3776 = vlaneseq
    %v3777 = vshrl.u32 %v3776, 7
    %v3778 = vsub.s32 %v3775, %v3777
    %v3779 = vrot.slane %v3771, %v3778
    %v3781 = vunpack.c.l.s4 1966171168
    %v3782 = vunpack.c.0.s8 %v3781
    %v3783 = vlaneseq
    %v3784 = vshrl.u32 %v3783, 7
    %v3785 = vsub.s32 %v3782, %v3784
    %v3786 = vrot.slane %v3772, %v3785
    %v3787 = vcombine.low %v3779, %v3786
    %v3788 = vcombine.low %v1847, %v1851
    %v3789 = vcombine.low %v1855, %v1859
    %v3790 = vcombine.low %v1863, %v1867
    %v3791 = vcombine.low %v1871, %v1875
    %v3793 = vunpack.c.l.s4 1966171168
    %v3794 = vunpack.c.0.s8 %v3793
    %v3795 = vlaneseq
    %v3796 = vshrl.u32 %v3795, 7
    %v3797 = vsub.s32 %v3794, %v3796
    %v3798 = vrot.slane %v3788, %v3797
    %v3800 = vunpack.c.l.s4 1966171168
    %v3801 = vunpack.c.0.s8 %v3800
    %v3802 = vlaneseq
    %v3803 = vshrl.u32 %v3802, 7
    %v3804 = vsub.s32 %v3801, %v3803
    %v3805 = vrot.slane %v3789, %v3804
    %v3807 = vunpack.c.l.s4 1966171168
    %v3808 = vunpack.c.0.s8 %v3807
    %v3809 = vlaneseq
    %v3810 = vshrl.u32 %v3809, 7
    %v3811 = vsub.s32 %v3808, %v3810
    %v3812 = vrot.slane %v3790, %v3811
    %v3814 = vunpack.c.l.s4 1966171168
    %v3815 = vunpack.c.0.s8 %v3814
    %v3816 = vlaneseq
    %v3817 = vshrl.u32 %v3816, 7
    %v3818 = vsub.s32 %v3815, %v3817
    %v3819 = vrot.slane %v3791, %v3818
    %v3820 = vcombine.low %v3798, %v3805
    %v3821 = vcombine.low %v3812, %v3819
    %v3823 = vunpack.c.l.s4 1966171168
    %v3824 = vunpack.c.0.s8 %v3823
    %v3825 = vlaneseq
    %v3826 = vshrl.u32 %v3825, 7
    %v3827 = vsub.s32 %v3824, %v3826
    %v3828 = vrot.slane %v3820, %v3827
    %v3830 = vunpack.c.l.s4 1966171168
    %v3831 = vunpack.c.0.s8 %v3830
    %v3832 = vlaneseq
    %v3833 = vshrl.u32 %v3832, 7
    %v3834 = vsub.s32 %v3831, %v3833
    %v3835 = vrot.slane %v3821, %v3834
    %v3836 = vcombine.low %v3828, %v3835
    %v3837 = vcombine.low %v1879, %v1883
    %v3838 = vcombine.low %v1887, %v1891
    %v3839 = vcombine.low %v1895, %v1899
    %v3840 = vcombine.low %v1903, %v1907
    %v3842 = vunpack.c.l.s4 1966171168
    %v3843 = vunpack.c.0.s8 %v3842
    %v3844 = vlaneseq
    %v3845 = vshrl.u32 %v3844, 7
    %v3846 = vsub.s32 %v3843, %v3845
    %v3847 = vrot.slane %v3837, %v3846
    %v3849 = vunpack.c.l.s4 1966171168
    %v3850 = vunpack.c.0.s8 %v3849
    %v3851 = vlaneseq
    %v3852 = vshrl.u32 %v3851, 7
    %v3853 = vsub.s32 %v3850, %v3852
    %v3854 = vrot.slane %v3838, %v3853
    %v3856 = vunpack.c.l.s4 1966171168
    %v3857 = vunpack.c.0.s8 %v3856
    %v3858 = vlaneseq
    %v3859 = vshrl.u32 %v3858, 7
    %v3860 = vsub.s32 %v3857, %v3859
    %v3861 = vrot.slane %v3839, %v3860
    %v3863 = vunpack.c.l.s4 1966171168
    %v3864 = vunpack.c.0.s8 %v3863
    %v3865 = vlaneseq
    %v3866 = vshrl.u32 %v3865, 7
    %v3867 = vsub.s32 %v3864, %v3866
    %v3868 = vrot.slane %v3840, %v3867
    %v3869 = vcombine.low %v3847, %v3854
    %v3870 = vcombine.low %v3861, %v3868
    %v3872 = vunpack.c.l.s4 1966171168
    %v3873 = vunpack.c.0.s8 %v3872
    %v3874 = vlaneseq
    %v3875 = vshrl.u32 %v3874, 7
    %v3876 = vsub.s32 %v3873, %v3875
    %v3877 = vrot.slane %v3869, %v3876
    %v3879 = vunpack.c.l.s4 1966171168
    %v3880 = vunpack.c.0.s8 %v3879
    %v3881 = vlaneseq
    %v3882 = vshrl.u32 %v3881, 7
    %v3883 = vsub.s32 %v3880, %v3882
    %v3884 = vrot.slane %v3870, %v3883
    %v3885 = vcombine.low %v3877, %v3884
    %v3886 = vcombine.low %v1911, %v1915
    %v3887 = vcombine.low %v1919, %v1923
    %v3888 = vcombine.low %v1927, %v1931
    %v3889 = vcombine.low %v1935, %v1939
    %v3891 = vunpack.c.l.s4 1966171168
    %v3892 = vunpack.c.0.s8 %v3891
    %v3893 = vlaneseq
    %v3894 = vshrl.u32 %v3893, 7
    %v3895 = vsub.s32 %v3892, %v3894
    %v3896 = vrot.slane %v3886, %v3895
    %v3898 = vunpack.c.l.s4 1966171168
    %v3899 = vunpack.c.0.s8 %v3898
    %v3900 = vlaneseq
    %v3901 = vshrl.u32 %v3900, 7
    %v3902 = vsub.s32 %v3899, %v3901
    %v3903 = vrot.slane %v3887, %v3902
    %v3905 = vunpack.c.l.s4 1966171168
    %v3906 = vunpack.c.0.s8 %v3905
    %v3907 = vlaneseq
    %v3908 = vshrl.u32 %v3907, 7
    %v3909 = vsub.s32 %v3906, %v3908
    %v3910 = vrot.slane %v3888, %v3909
    %v3912 = vunpack.c.l.s4 1966171168
    %v3913 = vunpack.c.0.s8 %v3912
    %v3914 = vlaneseq
    %v3915 = vshrl.u32 %v3914, 7
    %v3916 = vsub.s32 %v3913, %v3915
    %v3917 = vrot.slane %v3889, %v3916
    %v3918 = vcombine.low %v3896, %v3903
    %v3919 = vcombine.low %v3910, %v3917
    %v3921 = vunpack.c.l.s4 1966171168
    %v3922 = vunpack.c.0.s8 %v3921
    %v3923 = vlaneseq
    %v3924 = vshrl.u32 %v3923, 7
    %v3925 = vsub.s32 %v3922, %v3924
    %v3926 = vrot.slane %v3918, %v3925
    %v3928 = vunpack.c.l.s4 1966171168
    %v3929 = vunpack.c.0.s8 %v3928
    %v3930 = vlaneseq
    %v3931 = vshrl.u32 %v3930, 7
    %v3932 = vsub.s32 %v3929, %v3931
    %v3933 = vrot.slane %v3919, %v3932
    %v3934 = vcombine.low %v3926, %v3933
    %v3935 = vcombine.low %v1943, %v1947
    %v3936 = vcombine.low %v1951, %v1955
    %v3937 = vcombine.low %v1959, %v1963
    %v3938 = vcombine.low %v1967, %v1971
    %v3940 = vunpack.c.l.s4 1966171168
    %v3941 = vunpack.c.0.s8 %v3940
    %v3942 = vlaneseq
    %v3943 = vshrl.u32 %v3942, 7
    %v3944 = vsub.s32 %v3941, %v3943
    %v3945 = vrot.slane %v3935, %v3944
    %v3947 = vunpack.c.l.s4 1966171168
    %v3948 = vunpack.c.0.s8 %v3947
    %v3949 = vlaneseq
    %v3950 = vshrl.u32 %v3949, 7
    %v3951 = vsub.s32 %v3948, %v3950
    %v3952 = vrot.slane %v3936, %v3951
    %v3954 = vunpack.c.l.s4 1966171168
    %v3955 = vunpack.c.0.s8 %v3954
    %v3956 = vlaneseq
    %v3957 = vshrl.u32 %v3956, 7
    %v3958 = vsub.s32 %v3955, %v3957
    %v3959 = vrot.slane %v3937, %v3958
    %v3961 = vunpack.c.l.s4 1966171168
    %v3962 = vunpack.c.0.s8 %v3961
    %v3963 = vlaneseq
    %v3964 = vshrl.u32 %v3963, 7
    %v3965 = vsub.s32 %v3962, %v3964
    %v3966 = vrot.slane %v3938, %v3965
    %v3967 = vcombine.low %v3945, %v3952
    %v3968 = vcombine.low %v3959, %v3966
    %v3970 = vunpack.c.l.s4 1966171168
    %v3971 = vunpack.c.0.s8 %v3970
    %v3972 = vlaneseq
    %v3973 = vshrl.u32 %v3972, 7
    %v3974 = vsub.s32 %v3971, %v3973
    %v3975 = vrot.slane %v3967, %v3974
    %v3977 = vunpack.c.l.s4 1966171168
    %v3978 = vunpack.c.0.s8 %v3977
    %v3979 = vlaneseq
    %v3980 = vshrl.u32 %v3979, 7
    %v3981 = vsub.s32 %v3978, %v3980
    %v3982 = vrot.slane %v3968, %v3981
    %v3983 = vcombine.low %v3975, %v3982
    %v3984 = vcombine.low %v1975, %v1979
    %v3985 = vcombine.low %v1983, %v1987
    %v3986 = vcombine.low %v1991, %v1995
    %v3987 = vcombine.low %v1999, %v2003
    %v3989 = vunpack.c.l.s4 1966171168
    %v3990 = vunpack.c.0.s8 %v3989
    %v3991 = vlaneseq
    %v3992 = vshrl.u32 %v3991, 7
    %v3993 = vsub.s32 %v3990, %v3992
    %v3994 = vrot.slane %v3984, %v3993
    %v3996 = vunpack.c.l.s4 1966171168
    %v3997 = vunpack.c.0.s8 %v3996
    %v3998 = vlaneseq
    %v3999 = vshrl.u32 %v3998, 7
    %v4000 = vsub.s32 %v3997, %v3999
    %v4001 = vrot.slane %v3985, %v4000
    %v4003 = vunpack.c.l.s4 1966171168
    %v4004 = vunpack.c.0.s8 %v4003
    %v4005 = vlaneseq
    %v4006 = vshrl.u32 %v4005, 7
    %v4007 = vsub.s32 %v4004, %v4006
    %v4008 = vrot.slane %v3986, %v4007
    %v4010 = vunpack.c.l.s4 1966171168
    %v4011 = vunpack.c.0.s8 %v4010
    %v4012 = vlaneseq
    %v4013 = vshrl.u32 %v4012, 7
    %v4014 = vsub.s32 %v4011, %v4013
    %v4015 = vrot.slane %v3987, %v4014
    %v4016 = vcombine.low %v3994, %v4001
    %v4017 = vcombine.low %v4008, %v4015
    %v4019 = vunpack.c.l.s4 1966171168
    %v4020 = vunpack.c.0.s8 %v4019
    %v4021 = vlaneseq
    %v4022 = vshrl.u32 %v4021, 7
    %v4023 = vsub.s32 %v4020, %v4022
    %v4024 = vrot.slane %v4016, %v4023
    %v4026 = vunpack.c.l.s4 1966171168
    %v4027 = vunpack.c.0.s8 %v4026
    %v4028 = vlaneseq
    %v4029 = vshrl.u32 %v4028, 7
    %v4030 = vsub.s32 %v4027, %v4029
    %v4031 = vrot.slane %v4017, %v4030
    %v4032 = vcombine.low %v4024, %v4031
    %v4033 = vcombine.low %v2007, %v2011
    %v4034 = vcombine.low %v2015, %v2019
    %v4035 = vcombine.low %v2023, %v2027
    %v4036 = vcombine.low %v2031, %v2035
    %v4038 = vunpack.c.l.s4 1966171168
    %v4039 = vunpack.c.0.s8 %v4038
    %v4040 = vlaneseq
    %v4041 = vshrl.u32 %v4040, 7
    %v4042 = vsub.s32 %v4039, %v4041
    %v4043 = vrot.slane %v4033, %v4042
    %v4045 = vunpack.c.l.s4 1966171168
    %v4046 = vunpack.c.0.s8 %v4045
    %v4047 = vlaneseq
    %v4048 = vshrl.u32 %v4047, 7
    %v4049 = vsub.s32 %v4046, %v4048
    %v4050 = vrot.slane %v4034, %v4049
    %v4052 = vunpack.c.l.s4 1966171168
    %v4053 = vunpack.c.0.s8 %v4052
    %v4054 = vlaneseq
    %v4055 = vshrl.u32 %v4054, 7
    %v4056 = vsub.s32 %v4053, %v4055
    %v4057 = vrot.slane %v4035, %v4056
    %v4059 = vunpack.c.l.s4 1966171168
    %v4060 = vunpack.c.0.s8 %v4059
    %v4061 = vlaneseq
    %v4062 = vshrl.u32 %v4061, 7
    %v4063 = vsub.s32 %v4060, %v4062
    %v4064 = vrot.slane %v4036, %v4063
    %v4065 = vcombine.low %v4043, %v4050
    %v4066 = vcombine.low %v4057, %v4064
    %v4068 = vunpack.c.l.s4 1966171168
    %v4069 = vunpack.c.0.s8 %v4068
    %v4070 = vlaneseq
    %v4071 = vshrl.u32 %v4070, 7
    %v4072 = vsub.s32 %v4069, %v4071
    %v4073 = vrot.slane %v4065, %v4072
    %v4075 = vunpack.c.l.s4 1966171168
    %v4076 = vunpack.c.0.s8 %v4075
    %v4077 = vlaneseq
    %v4078 = vshrl.u32 %v4077, 7
    %v4079 = vsub.s32 %v4076, %v4078
    %v4080 = vrot.slane %v4066, %v4079
    %v4081 = vcombine.low %v4073, %v4080
    %v4082 = vcombine.low %v2039, %v2043
    %v4083 = vcombine.low %v2047, %v2051
    %v4084 = vcombine.low %v2055, %v2059
    %v4085 = vcombine.low %v2063, %v2067
    %v4087 = vunpack.c.l.s4 1966171168
    %v4088 = vunpack.c.0.s8 %v4087
    %v4089 = vlaneseq
    %v4090 = vshrl.u32 %v4089, 7
    %v4091 = vsub.s32 %v4088, %v4090
    %v4092 = vrot.slane %v4082, %v4091
    %v4094 = vunpack.c.l.s4 1966171168
    %v4095 = vunpack.c.0.s8 %v4094
    %v4096 = vlaneseq
    %v4097 = vshrl.u32 %v4096, 7
    %v4098 = vsub.s32 %v4095, %v4097
    %v4099 = vrot.slane %v4083, %v4098
    %v4101 = vunpack.c.l.s4 1966171168
    %v4102 = vunpack.c.0.s8 %v4101
    %v4103 = vlaneseq
    %v4104 = vshrl.u32 %v4103, 7
    %v4105 = vsub.s32 %v4102, %v4104
    %v4106 = vrot.slane %v4084, %v4105
    %v4108 = vunpack.c.l.s4 1966171168
    %v4109 = vunpack.c.0.s8 %v4108
    %v4110 = vlaneseq
    %v4111 = vshrl.u32 %v4110, 7
    %v4112 = vsub.s32 %v4109, %v4111
    %v4113 = vrot.slane %v4085, %v4112
    %v4114 = vcombine.low %v4092, %v4099
    %v4115 = vcombine.low %v4106, %v4113
    %v4117 = vunpack.c.l.s4 1966171168
    %v4118 = vunpack.c.0.s8 %v4117
    %v4119 = vlaneseq
    %v4120 = vshrl.u32 %v4119, 7
    %v4121 = vsub.s32 %v4118, %v4120
    %v4122 = vrot.slane %v4114, %v4121
    %v4124 = vunpack.c.l.s4 1966171168
    %v4125 = vunpack.c.0.s8 %v4124
    %v4126 = vlaneseq
    %v4127 = vshrl.u32 %v4126, 7
    %v4128 = vsub.s32 %v4125, %v4127
    %v4129 = vrot.slane %v4115, %v4128
    %v4130 = vcombine.low %v4122, %v4129
    %v4131 = vcombine.low %v2071, %v2075
    %v4132 = vcombine.low %v2079, %v2083
    %v4133 = vcombine.low %v2087, %v2091
    %v4134 = vcombine.low %v2095, %v2099
    %v4136 = vunpack.c.l.s4 1966171168
    %v4137 = vunpack.c.0.s8 %v4136
    %v4138 = vlaneseq
    %v4139 = vshrl.u32 %v4138, 7
    %v4140 = vsub.s32 %v4137, %v4139
    %v4141 = vrot.slane %v4131, %v4140
    %v4143 = vunpack.c.l.s4 1966171168
    %v4144 = vunpack.c.0.s8 %v4143
    %v4145 = vlaneseq
    %v4146 = vshrl.u32 %v4145, 7
    %v4147 = vsub.s32 %v4144, %v4146
    %v4148 = vrot.slane %v4132, %v4147
    %v4150 = vunpack.c.l.s4 1966171168
    %v4151 = vunpack.c.0.s8 %v4150
    %v4152 = vlaneseq
    %v4153 = vshrl.u32 %v4152, 7
    %v4154 = vsub.s32 %v4151, %v4153
    %v4155 = vrot.slane %v4133, %v4154
    %v4157 = vunpack.c.l.s4 1966171168
    %v4158 = vunpack.c.0.s8 %v4157
    %v4159 = vlaneseq
    %v4160 = vshrl.u32 %v4159, 7
    %v4161 = vsub.s32 %v4158, %v4160
    %v4162 = vrot.slane %v4134, %v4161
    %v4163 = vcombine.low %v4141, %v4148
    %v4164 = vcombine.low %v4155, %v4162
    %v4166 = vunpack.c.l.s4 1966171168
    %v4167 = vunpack.c.0.s8 %v4166
    %v4168 = vlaneseq
    %v4169 = vshrl.u32 %v4168, 7
    %v4170 = vsub.s32 %v4167, %v4169
    %v4171 = vrot.slane %v4163, %v4170
    %v4173 = vunpack.c.l.s4 1966171168
    %v4174 = vunpack.c.0.s8 %v4173
    %v4175 = vlaneseq
    %v4176 = vshrl.u32 %v4175, 7
    %v4177 = vsub.s32 %v4174, %v4176
    %v4178 = vrot.slane %v4164, %v4177
    %v4179 = vcombine.low %v4171, %v4178
    %v4180 = vcombine.low %v2103, %v2107
    %v4181 = vcombine.low %v2111, %v2115
    %v4182 = vcombine.low %v2119, %v2123
    %v4183 = vcombine.low %v2127, %v2131
    %v4185 = vunpack.c.l.s4 1966171168
    %v4186 = vunpack.c.0.s8 %v4185
    %v4187 = vlaneseq
    %v4188 = vshrl.u32 %v4187, 7
    %v4189 = vsub.s32 %v4186, %v4188
    %v4190 = vrot.slane %v4180, %v4189
    %v4192 = vunpack.c.l.s4 1966171168
    %v4193 = vunpack.c.0.s8 %v4192
    %v4194 = vlaneseq
    %v4195 = vshrl.u32 %v4194, 7
    %v4196 = vsub.s32 %v4193, %v4195
    %v4197 = vrot.slane %v4181, %v4196
    %v4199 = vunpack.c.l.s4 1966171168
    %v4200 = vunpack.c.0.s8 %v4199
    %v4201 = vlaneseq
    %v4202 = vshrl.u32 %v4201, 7
    %v4203 = vsub.s32 %v4200, %v4202
    %v4204 = vrot.slane %v4182, %v4203
    %v4206 = vunpack.c.l.s4 1966171168
    %v4207 = vunpack.c.0.s8 %v4206
    %v4208 = vlaneseq
    %v4209 = vshrl.u32 %v4208, 7
    %v4210 = vsub.s32 %v4207, %v4209
    %v4211 = vrot.slane %v4183, %v4210
    %v4212 = vcombine.low %v4190, %v4197
    %v4213 = vcombine.low %v4204, %v4211
    %v4215 = vunpack.c.l.s4 1966171168
    %v4216 = vunpack.c.0.s8 %v4215
    %v4217 = vlaneseq
    %v4218 = vshrl.u32 %v4217, 7
    %v4219 = vsub.s32 %v4216, %v4218
    %v4220 = vrot.slane %v4212, %v4219
    %v4222 = vunpack.c.l.s4 1966171168
    %v4223 = vunpack.c.0.s8 %v4222
    %v4224 = vlaneseq
    %v4225 = vshrl.u32 %v4224, 7
    %v4226 = vsub.s32 %v4223, %v4225
    %v4227 = vrot.slane %v4213, %v4226
    %v4228 = vcombine.low %v4220, %v4227
    %v4229 = vcombine.low %v2135, %v2139
    %v4230 = vcombine.low %v2143, %v2147
    %v4231 = vcombine.low %v2151, %v2155
    %v4232 = vcombine.low %v2159, %v2163
    %v4234 = vunpack.c.l.s4 1966171168
    %v4235 = vunpack.c.0.s8 %v4234
    %v4236 = vlaneseq
    %v4237 = vshrl.u32 %v4236, 7
    %v4238 = vsub.s32 %v4235, %v4237
    %v4239 = vrot.slane %v4229, %v4238
    %v4241 = vunpack.c.l.s4 1966171168
    %v4242 = vunpack.c.0.s8 %v4241
    %v4243 = vlaneseq
    %v4244 = vshrl.u32 %v4243, 7
    %v4245 = vsub.s32 %v4242, %v4244
    %v4246 = vrot.slane %v4230, %v4245
    %v4248 = vunpack.c.l.s4 1966171168
    %v4249 = vunpack.c.0.s8 %v4248
    %v4250 = vlaneseq
    %v4251 = vshrl.u32 %v4250, 7
    %v4252 = vsub.s32 %v4249, %v4251
    %v4253 = vrot.slane %v4231, %v4252
    %v4255 = vunpack.c.l.s4 1966171168
    %v4256 = vunpack.c.0.s8 %v4255
    %v4257 = vlaneseq
    %v4258 = vshrl.u32 %v4257, 7
    %v4259 = vsub.s32 %v4256, %v4258
    %v4260 = vrot.slane %v4232, %v4259
    %v4261 = vcombine.low %v4239, %v4246
    %v4262 = vcombine.low %v4253, %v4260
    %v4264 = vunpack.c.l.s4 1966171168
    %v4265 = vunpack.c.0.s8 %v4264
    %v4266 = vlaneseq
    %v4267 = vshrl.u32 %v4266, 7
    %v4268 = vsub.s32 %v4265, %v4267
    %v4269 = vrot.slane %v4261, %v4268
    %v4271 = vunpack.c.l.s4 1966171168
    %v4272 = vunpack.c.0.s8 %v4271
    %v4273 = vlaneseq
    %v4274 = vshrl.u32 %v4273, 7
    %v4275 = vsub.s32 %v4272, %v4274
    %v4276 = vrot.slane %v4262, %v4275
    %v4277 = vcombine.low %v4269, %v4276
    %v4278 = vcombine.low %v2167, %v2171
    %v4279 = vcombine.low %v2175, %v2179
    %v4280 = vcombine.low %v2183, %v2187
    %v4281 = vcombine.low %v2191, %v2195
    %v4283 = vunpack.c.l.s4 1966171168
    %v4284 = vunpack.c.0.s8 %v4283
    %v4285 = vlaneseq
    %v4286 = vshrl.u32 %v4285, 7
    %v4287 = vsub.s32 %v4284, %v4286
    %v4288 = vrot.slane %v4278, %v4287
    %v4290 = vunpack.c.l.s4 1966171168
    %v4291 = vunpack.c.0.s8 %v4290
    %v4292 = vlaneseq
    %v4293 = vshrl.u32 %v4292, 7
    %v4294 = vsub.s32 %v4291, %v4293
    %v4295 = vrot.slane %v4279, %v4294
    %v4297 = vunpack.c.l.s4 1966171168
    %v4298 = vunpack.c.0.s8 %v4297
    %v4299 = vlaneseq
    %v4300 = vshrl.u32 %v4299, 7
    %v4301 = vsub.s32 %v4298, %v4300
    %v4302 = vrot.slane %v4280, %v4301
    %v4304 = vunpack.c.l.s4 1966171168
    %v4305 = vunpack.c.0.s8 %v4304
    %v4306 = vlaneseq
    %v4307 = vshrl.u32 %v4306, 7
    %v4308 = vsub.s32 %v4305, %v4307
    %v4309 = vrot.slane %v4281, %v4308
    %v4310 = vcombine.low %v4288, %v4295
    %v4311 = vcombine.low %v4302, %v4309
    %v4313 = vunpack.c.l.s4 1966171168
    %v4314 = vunpack.c.0.s8 %v4313
    %v4315 = vlaneseq
    %v4316 = vshrl.u32 %v4315, 7
    %v4317 = vsub.s32 %v4314, %v4316
    %v4318 = vrot.slane %v4310, %v4317
    %v4320 = vunpack.c.l.s4 1966171168
    %v4321 = vunpack.c.0.s8 %v4320
    %v4322 = vlaneseq
    %v4323 = vshrl.u32 %v4322, 7
    %v4324 = vsub.s32 %v4321, %v4323
    %v4325 = vrot.slane %v4311, %v4324
    %v4326 = vcombine.low %v4318, %v4325
    %v4327 = vcombine.low %v2199, %v2203
    %v4328 = vcombine.low %v2207, %v2211
    %v4329 = vcombine.low %v2215, %v2219
    %v4330 = vcombine.low %v2223, %v2227
    %v4332 = vunpack.c.l.s4 1966171168
    %v4333 = vunpack.c.0.s8 %v4332
    %v4334 = vlaneseq
    %v4335 = vshrl.u32 %v4334, 7
    %v4336 = vsub.s32 %v4333, %v4335
    %v4337 = vrot.slane %v4327, %v4336
    %v4339 = vunpack.c.l.s4 1966171168
    %v4340 = vunpack.c.0.s8 %v4339
    %v4341 = vlaneseq
    %v4342 = vshrl.u32 %v4341, 7
    %v4343 = vsub.s32 %v4340, %v4342
    %v4344 = vrot.slane %v4328, %v4343
    %v4346 = vunpack.c.l.s4 1966171168
    %v4347 = vunpack.c.0.s8 %v4346
    %v4348 = vlaneseq
    %v4349 = vshrl.u32 %v4348, 7
    %v4350 = vsub.s32 %v4347, %v4349
    %v4351 = vrot.slane %v4329, %v4350
    %v4353 = vunpack.c.l.s4 1966171168
    %v4354 = vunpack.c.0.s8 %v4353
    %v4355 = vlaneseq
    %v4356 = vshrl.u32 %v4355, 7
    %v4357 = vsub.s32 %v4354, %v4356
    %v4358 = vrot.slane %v4330, %v4357
    %v4359 = vcombine.low %v4337, %v4344
    %v4360 = vcombine.low %v4351, %v4358
    %v4362 = vunpack.c.l.s4 1966171168
    %v4363 = vunpack.c.0.s8 %v4362
    %v4364 = vlaneseq
    %v4365 = vshrl.u32 %v4364, 7
    %v4366 = vsub.s32 %v4363, %v4365
    %v4367 = vrot.slane %v4359, %v4366
    %v4369 = vunpack.c.l.s4 1966171168
    %v4370 = vunpack.c.0.s8 %v4369
    %v4371 = vlaneseq
    %v4372 = vshrl.u32 %v4371, 7
    %v4373 = vsub.s32 %v4370, %v4372
    %v4374 = vrot.slane %v4360, %v4373
    %v4375 = vcombine.low %v4367, %v4374
    %v4376 = vcombine.low %v2231, %v2235
    %v4377 = vcombine.low %v2239, %v2243
    %v4378 = vcombine.low %v2247, %v2251
    %v4379 = vcombine.low %v2255, %v2259
    %v4381 = vunpack.c.l.s4 1966171168
    %v4382 = vunpack.c.0.s8 %v4381
    %v4383 = vlaneseq
    %v4384 = vshrl.u32 %v4383, 7
    %v4385 = vsub.s32 %v4382, %v4384
    %v4386 = vrot.slane %v4376, %v4385
    %v4388 = vunpack.c.l.s4 1966171168
    %v4389 = vunpack.c.0.s8 %v4388
    %v4390 = vlaneseq
    %v4391 = vshrl.u32 %v4390, 7
    %v4392 = vsub.s32 %v4389, %v4391
    %v4393 = vrot.slane %v4377, %v4392
    %v4395 = vunpack.c.l.s4 1966171168
    %v4396 = vunpack.c.0.s8 %v4395
    %v4397 = vlaneseq
    %v4398 = vshrl.u32 %v4397, 7
    %v4399 = vsub.s32 %v4396, %v4398
    %v4400 = vrot.slane %v4378, %v4399
    %v4402 = vunpack.c.l.s4 1966171168
    %v4403 = vunpack.c.0.s8 %v4402
    %v4404 = vlaneseq
    %v4405 = vshrl.u32 %v4404, 7
    %v4406 = vsub.s32 %v4403, %v4405
    %v4407 = vrot.slane %v4379, %v4406
    %v4408 = vcombine.low %v4386, %v4393
    %v4409 = vcombine.low %v4400, %v4407
    %v4411 = vunpack.c.l.s4 1966171168
    %v4412 = vunpack.c.0.s8 %v4411
    %v4413 = vlaneseq
    %v4414 = vshrl.u32 %v4413, 7
    %v4415 = vsub.s32 %v4412, %v4414
    %v4416 = vrot.slane %v4408, %v4415
    %v4418 = vunpack.c.l.s4 1966171168
    %v4419 = vunpack.c.0.s8 %v4418
    %v4420 = vlaneseq
    %v4421 = vshrl.u32 %v4420, 7
    %v4422 = vsub.s32 %v4419, %v4421
    %v4423 = vrot.slane %v4409, %v4422
    %v4424 = vcombine.low %v4416, %v4423
    %v4425 = vcombine.low %v2263, %v2267
    %v4426 = vcombine.low %v2271, %v2275
    %v4427 = vcombine.low %v2279, %v2283
    %v4428 = vcombine.low %v2287, %v2291
    %v4430 = vunpack.c.l.s4 1966171168
    %v4431 = vunpack.c.0.s8 %v4430
    %v4432 = vlaneseq
    %v4433 = vshrl.u32 %v4432, 7
    %v4434 = vsub.s32 %v4431, %v4433
    %v4435 = vrot.slane %v4425, %v4434
    %v4437 = vunpack.c.l.s4 1966171168
    %v4438 = vunpack.c.0.s8 %v4437
    %v4439 = vlaneseq
    %v4440 = vshrl.u32 %v4439, 7
    %v4441 = vsub.s32 %v4438, %v4440
    %v4442 = vrot.slane %v4426, %v4441
    %v4444 = vunpack.c.l.s4 1966171168
    %v4445 = vunpack.c.0.s8 %v4444
    %v4446 = vlaneseq
    %v4447 = vshrl.u32 %v4446, 7
    %v4448 = vsub.s32 %v4445, %v4447
    %v4449 = vrot.slane %v4427, %v4448
    %v4451 = vunpack.c.l.s4 1966171168
    %v4452 = vunpack.c.0.s8 %v4451
    %v4453 = vlaneseq
    %v4454 = vshrl.u32 %v4453, 7
    %v4455 = vsub.s32 %v4452, %v4454
    %v4456 = vrot.slane %v4428, %v4455
    %v4457 = vcombine.low %v4435, %v4442
    %v4458 = vcombine.low %v4449, %v4456
    %v4460 = vunpack.c.l.s4 1966171168
    %v4461 = vunpack.c.0.s8 %v4460
    %v4462 = vlaneseq
    %v4463 = vshrl.u32 %v4462, 7
    %v4464 = vsub.s32 %v4461, %v4463
    %v4465 = vrot.slane %v4457, %v4464
    %v4467 = vunpack.c.l.s4 1966171168
    %v4468 = vunpack.c.0.s8 %v4467
    %v4469 = vlaneseq
    %v4470 = vshrl.u32 %v4469, 7
    %v4471 = vsub.s32 %v4468, %v4470
    %v4472 = vrot.slane %v4458, %v4471
    %v4473 = vcombine.low %v4465, %v4472
    %v4474 = vcombine.low %v2295, %v2299
    %v4475 = vcombine.low %v2303, %v2307
    %v4476 = vcombine.low %v2311, %v2315
    %v4477 = vcombine.low %v2319, %v2323
    %v4479 = vunpack.c.l.s4 1966171168
    %v4480 = vunpack.c.0.s8 %v4479
    %v4481 = vlaneseq
    %v4482 = vshrl.u32 %v4481, 7
    %v4483 = vsub.s32 %v4480, %v4482
    %v4484 = vrot.slane %v4474, %v4483
    %v4486 = vunpack.c.l.s4 1966171168
    %v4487 = vunpack.c.0.s8 %v4486
    %v4488 = vlaneseq
    %v4489 = vshrl.u32 %v4488, 7
    %v4490 = vsub.s32 %v4487, %v4489
    %v4491 = vrot.slane %v4475, %v4490
    %v4493 = vunpack.c.l.s4 1966171168
    %v4494 = vunpack.c.0.s8 %v4493
    %v4495 = vlaneseq
    %v4496 = vshrl.u32 %v4495, 7
    %v4497 = vsub.s32 %v4494, %v4496
    %v4498 = vrot.slane %v4476, %v4497
    %v4500 = vunpack.c.l.s4 1966171168
    %v4501 = vunpack.c.0.s8 %v4500
    %v4502 = vlaneseq
    %v4503 = vshrl.u32 %v4502, 7
    %v4504 = vsub.s32 %v4501, %v4503
    %v4505 = vrot.slane %v4477, %v4504
    %v4506 = vcombine.low %v4484, %v4491
    %v4507 = vcombine.low %v4498, %v4505
    %v4509 = vunpack.c.l.s4 1966171168
    %v4510 = vunpack.c.0.s8 %v4509
    %v4511 = vlaneseq
    %v4512 = vshrl.u32 %v4511, 7
    %v4513 = vsub.s32 %v4510, %v4512
    %v4514 = vrot.slane %v4506, %v4513
    %v4516 = vunpack.c.l.s4 1966171168
    %v4517 = vunpack.c.0.s8 %v4516
    %v4518 = vlaneseq
    %v4519 = vshrl.u32 %v4518, 7
    %v4520 = vsub.s32 %v4517, %v4519
    %v4521 = vrot.slane %v4507, %v4520
    %v4522 = vcombine.low %v4514, %v4521
    %v4523 = vcombine.low %v2327, %v2331
    %v4524 = vcombine.low %v2335, %v2339
    %v4525 = vcombine.low %v2343, %v2347
    %v4526 = vcombine.low %v2351, %v2355
    %v4528 = vunpack.c.l.s4 1966171168
    %v4529 = vunpack.c.0.s8 %v4528
    %v4530 = vlaneseq
    %v4531 = vshrl.u32 %v4530, 7
    %v4532 = vsub.s32 %v4529, %v4531
    %v4533 = vrot.slane %v4523, %v4532
    %v4535 = vunpack.c.l.s4 1966171168
    %v4536 = vunpack.c.0.s8 %v4535
    %v4537 = vlaneseq
    %v4538 = vshrl.u32 %v4537, 7
    %v4539 = vsub.s32 %v4536, %v4538
    %v4540 = vrot.slane %v4524, %v4539
    %v4542 = vunpack.c.l.s4 1966171168
    %v4543 = vunpack.c.0.s8 %v4542
    %v4544 = vlaneseq
    %v4545 = vshrl.u32 %v4544, 7
    %v4546 = vsub.s32 %v4543, %v4545
    %v4547 = vrot.slane %v4525, %v4546
    %v4549 = vunpack.c.l.s4 1966171168
    %v4550 = vunpack.c.0.s8 %v4549
    %v4551 = vlaneseq
    %v4552 = vshrl.u32 %v4551, 7
    %v4553 = vsub.s32 %v4550, %v4552
    %v4554 = vrot.slane %v4526, %v4553
    %v4555 = vcombine.low %v4533, %v4540
    %v4556 = vcombine.low %v4547, %v4554
    %v4558 = vunpack.c.l.s4 1966171168
    %v4559 = vunpack.c.0.s8 %v4558
    %v4560 = vlaneseq
    %v4561 = vshrl.u32 %v4560, 7
    %v4562 = vsub.s32 %v4559, %v4561
    %v4563 = vrot.slane %v4555, %v4562
    %v4565 = vunpack.c.l.s4 1966171168
    %v4566 = vunpack.c.0.s8 %v4565
    %v4567 = vlaneseq
    %v4568 = vshrl.u32 %v4567, 7
    %v4569 = vsub.s32 %v4566, %v4568
    %v4570 = vrot.slane %v4556, %v4569
    %v4571 = vcombine.low %v4563, %v4570
    %v4572 = vcombine.low %v2359, %v2363
    %v4573 = vcombine.low %v2367, %v2371
    %v4574 = vcombine.low %v2375, %v2379
    %v4575 = vcombine.low %v2383, %v2387
    %v4577 = vunpack.c.l.s4 1966171168
    %v4578 = vunpack.c.0.s8 %v4577
    %v4579 = vlaneseq
    %v4580 = vshrl.u32 %v4579, 7
    %v4581 = vsub.s32 %v4578, %v4580
    %v4582 = vrot.slane %v4572, %v4581
    %v4584 = vunpack.c.l.s4 1966171168
    %v4585 = vunpack.c.0.s8 %v4584
    %v4586 = vlaneseq
    %v4587 = vshrl.u32 %v4586, 7
    %v4588 = vsub.s32 %v4585, %v4587
    %v4589 = vrot.slane %v4573, %v4588
    %v4591 = vunpack.c.l.s4 1966171168
    %v4592 = vunpack.c.0.s8 %v4591
    %v4593 = vlaneseq
    %v4594 = vshrl.u32 %v4593, 7
    %v4595 = vsub.s32 %v4592, %v4594
    %v4596 = vrot.slane %v4574, %v4595
    %v4598 = vunpack.c.l.s4 1966171168
    %v4599 = vunpack.c.0.s8 %v4598
    %v4600 = vlaneseq
    %v4601 = vshrl.u32 %v4600, 7
    %v4602 = vsub.s32 %v4599, %v4601
    %v4603 = vrot.slane %v4575, %v4602
    %v4604 = vcombine.low %v4582, %v4589
    %v4605 = vcombine.low %v4596, %v4603
    %v4607 = vunpack.c.l.s4 1966171168
    %v4608 = vunpack.c.0.s8 %v4607
    %v4609 = vlaneseq
    %v4610 = vshrl.u32 %v4609, 7
    %v4611 = vsub.s32 %v4608, %v4610
    %v4612 = vrot.slane %v4604, %v4611
    %v4614 = vunpack.c.l.s4 1966171168
    %v4615 = vunpack.c.0.s8 %v4614
    %v4616 = vlaneseq
    %v4617 = vshrl.u32 %v4616, 7
    %v4618 = vsub.s32 %v4615, %v4617
    %v4619 = vrot.slane %v4605, %v4618
    %v4620 = vcombine.low %v4612, %v4619
    %v4621 = vcombine.low %v2391, %v2395
    %v4622 = vcombine.low %v2399, %v2403
    %v4623 = vcombine.low %v2407, %v2411
    %v4624 = vcombine.low %v2415, %v2419
    %v4626 = vunpack.c.l.s4 1966171168
    %v4627 = vunpack.c.0.s8 %v4626
    %v4628 = vlaneseq
    %v4629 = vshrl.u32 %v4628, 7
    %v4630 = vsub.s32 %v4627, %v4629
    %v4631 = vrot.slane %v4621, %v4630
    %v4633 = vunpack.c.l.s4 1966171168
    %v4634 = vunpack.c.0.s8 %v4633
    %v4635 = vlaneseq
    %v4636 = vshrl.u32 %v4635, 7
    %v4637 = vsub.s32 %v4634, %v4636
    %v4638 = vrot.slane %v4622, %v4637
    %v4640 = vunpack.c.l.s4 1966171168
    %v4641 = vunpack.c.0.s8 %v4640
    %v4642 = vlaneseq
    %v4643 = vshrl.u32 %v4642, 7
    %v4644 = vsub.s32 %v4641, %v4643
    %v4645 = vrot.slane %v4623, %v4644
    %v4647 = vunpack.c.l.s4 1966171168
    %v4648 = vunpack.c.0.s8 %v4647
    %v4649 = vlaneseq
    %v4650 = vshrl.u32 %v4649, 7
    %v4651 = vsub.s32 %v4648, %v4650
    %v4652 = vrot.slane %v4624, %v4651
    %v4653 = vcombine.low %v4631, %v4638
    %v4654 = vcombine.low %v4645, %v4652
    %v4656 = vunpack.c.l.s4 1966171168
    %v4657 = vunpack.c.0.s8 %v4656
    %v4658 = vlaneseq
    %v4659 = vshrl.u32 %v4658, 7
    %v4660 = vsub.s32 %v4657, %v4659
    %v4661 = vrot.slane %v4653, %v4660
    %v4663 = vunpack.c.l.s4 1966171168
    %v4664 = vunpack.c.0.s8 %v4663
    %v4665 = vlaneseq
    %v4666 = vshrl.u32 %v4665, 7
    %v4667 = vsub.s32 %v4664, %v4666
    %v4668 = vrot.slane %v4654, %v4667
    %v4669 = vcombine.low %v4661, %v4668
    %v4670 = vcombine.low %v2423, %v2427
    %v4671 = vcombine.low %v2431, %v2435
    %v4672 = vcombine.low %v2439, %v2443
    %v4673 = vcombine.low %v2447, %v2451
    %v4675 = vunpack.c.l.s4 1966171168
    %v4676 = vunpack.c.0.s8 %v4675
    %v4677 = vlaneseq
    %v4678 = vshrl.u32 %v4677, 7
    %v4679 = vsub.s32 %v4676, %v4678
    %v4680 = vrot.slane %v4670, %v4679
    %v4682 = vunpack.c.l.s4 1966171168
    %v4683 = vunpack.c.0.s8 %v4682
    %v4684 = vlaneseq
    %v4685 = vshrl.u32 %v4684, 7
    %v4686 = vsub.s32 %v4683, %v4685
    %v4687 = vrot.slane %v4671, %v4686
    %v4689 = vunpack.c.l.s4 1966171168
    %v4690 = vunpack.c.0.s8 %v4689
    %v4691 = vlaneseq
    %v4692 = vshrl.u32 %v4691, 7
    %v4693 = vsub.s32 %v4690, %v4692
    %v4694 = vrot.slane %v4672, %v4693
    %v4696 = vunpack.c.l.s4 1966171168
    %v4697 = vunpack.c.0.s8 %v4696
    %v4698 = vlaneseq
    %v4699 = vshrl.u32 %v4698, 7
    %v4700 = vsub.s32 %v4697, %v4699
    %v4701 = vrot.slane %v4673, %v4700
    %v4702 = vcombine.low %v4680, %v4687
    %v4703 = vcombine.low %v4694, %v4701
    %v4705 = vunpack.c.l.s4 1966171168
    %v4706 = vunpack.c.0.s8 %v4705
    %v4707 = vlaneseq
    %v4708 = vshrl.u32 %v4707, 7
    %v4709 = vsub.s32 %v4706, %v4708
    %v4710 = vrot.slane %v4702, %v4709
    %v4712 = vunpack.c.l.s4 1966171168
    %v4713 = vunpack.c.0.s8 %v4712
    %v4714 = vlaneseq
    %v4715 = vshrl.u32 %v4714, 7
    %v4716 = vsub.s32 %v4713, %v4715
    %v4717 = vrot.slane %v4703, %v4716
    %v4718 = vcombine.low %v4710, %v4717
    %v4719 = vcombine.low %v2455, %v2459
    %v4720 = vcombine.low %v2463, %v2467
    %v4721 = vcombine.low %v2471, %v2475
    %v4722 = vcombine.low %v2479, %v2483
    %v4724 = vunpack.c.l.s4 1966171168
    %v4725 = vunpack.c.0.s8 %v4724
    %v4726 = vlaneseq
    %v4727 = vshrl.u32 %v4726, 7
    %v4728 = vsub.s32 %v4725, %v4727
    %v4729 = vrot.slane %v4719, %v4728
    %v4731 = vunpack.c.l.s4 1966171168
    %v4732 = vunpack.c.0.s8 %v4731
    %v4733 = vlaneseq
    %v4734 = vshrl.u32 %v4733, 7
    %v4735 = vsub.s32 %v4732, %v4734
    %v4736 = vrot.slane %v4720, %v4735
    %v4738 = vunpack.c.l.s4 1966171168
    %v4739 = vunpack.c.0.s8 %v4738
    %v4740 = vlaneseq
    %v4741 = vshrl.u32 %v4740, 7
    %v4742 = vsub.s32 %v4739, %v4741
    %v4743 = vrot.slane %v4721, %v4742
    %v4745 = vunpack.c.l.s4 1966171168
    %v4746 = vunpack.c.0.s8 %v4745
    %v4747 = vlaneseq
    %v4748 = vshrl.u32 %v4747, 7
    %v4749 = vsub.s32 %v4746, %v4748
    %v4750 = vrot.slane %v4722, %v4749
    %v4751 = vcombine.low %v4729, %v4736
    %v4752 = vcombine.low %v4743, %v4750
    %v4754 = vunpack.c.l.s4 1966171168
    %v4755 = vunpack.c.0.s8 %v4754
    %v4756 = vlaneseq
    %v4757 = vshrl.u32 %v4756, 7
    %v4758 = vsub.s32 %v4755, %v4757
    %v4759 = vrot.slane %v4751, %v4758
    %v4761 = vunpack.c.l.s4 1966171168
    %v4762 = vunpack.c.0.s8 %v4761
    %v4763 = vlaneseq
    %v4764 = vshrl.u32 %v4763, 7
    %v4765 = vsub.s32 %v4762, %v4764
    %v4766 = vrot.slane %v4752, %v4765
    %v4767 = vcombine.low %v4759, %v4766
    %v4768 = vcombine.low %v2487, %v2491
    %v4769 = vcombine.low %v2495, %v2499
    %v4770 = vcombine.low %v2503, %v2507
    %v4771 = vcombine.low %v2511, %v2515
    %v4773 = vunpack.c.l.s4 1966171168
    %v4774 = vunpack.c.0.s8 %v4773
    %v4775 = vlaneseq
    %v4776 = vshrl.u32 %v4775, 7
    %v4777 = vsub.s32 %v4774, %v4776
    %v4778 = vrot.slane %v4768, %v4777
    %v4780 = vunpack.c.l.s4 1966171168
    %v4781 = vunpack.c.0.s8 %v4780
    %v4782 = vlaneseq
    %v4783 = vshrl.u32 %v4782, 7
    %v4784 = vsub.s32 %v4781, %v4783
    %v4785 = vrot.slane %v4769, %v4784
    %v4787 = vunpack.c.l.s4 1966171168
    %v4788 = vunpack.c.0.s8 %v4787
    %v4789 = vlaneseq
    %v4790 = vshrl.u32 %v4789, 7
    %v4791 = vsub.s32 %v4788, %v4790
    %v4792 = vrot.slane %v4770, %v4791
    %v4794 = vunpack.c.l.s4 1966171168
    %v4795 = vunpack.c.0.s8 %v4794
    %v4796 = vlaneseq
    %v4797 = vshrl.u32 %v4796, 7
    %v4798 = vsub.s32 %v4795, %v4797
    %v4799 = vrot.slane %v4771, %v4798
    %v4800 = vcombine.low %v4778, %v4785
    %v4801 = vcombine.low %v4792, %v4799
    %v4803 = vunpack.c.l.s4 1966171168
    %v4804 = vunpack.c.0.s8 %v4803
    %v4805 = vlaneseq
    %v4806 = vshrl.u32 %v4805, 7
    %v4807 = vsub.s32 %v4804, %v4806
    %v4808 = vrot.slane %v4800, %v4807
    %v4810 = vunpack.c.l.s4 1966171168
    %v4811 = vunpack.c.0.s8 %v4810
    %v4812 = vlaneseq
    %v4813 = vshrl.u32 %v4812, 7
    %v4814 = vsub.s32 %v4811, %v4813
    %v4815 = vrot.slane %v4801, %v4814
    %v4816 = vcombine.low %v4808, %v4815
    %v4817 = vcombine.low %v2519, %v2523
    %v4818 = vcombine.low %v2527, %v2531
    %v4819 = vcombine.low %v2535, %v2539
    %v4820 = vcombine.low %v2543, %v2547
    %v4822 = vunpack.c.l.s4 1966171168
    %v4823 = vunpack.c.0.s8 %v4822
    %v4824 = vlaneseq
    %v4825 = vshrl.u32 %v4824, 7
    %v4826 = vsub.s32 %v4823, %v4825
    %v4827 = vrot.slane %v4817, %v4826
    %v4829 = vunpack.c.l.s4 1966171168
    %v4830 = vunpack.c.0.s8 %v4829
    %v4831 = vlaneseq
    %v4832 = vshrl.u32 %v4831, 7
    %v4833 = vsub.s32 %v4830, %v4832
    %v4834 = vrot.slane %v4818, %v4833
    %v4836 = vunpack.c.l.s4 1966171168
    %v4837 = vunpack.c.0.s8 %v4836
    %v4838 = vlaneseq
    %v4839 = vshrl.u32 %v4838, 7
    %v4840 = vsub.s32 %v4837, %v4839
    %v4841 = vrot.slane %v4819, %v4840
    %v4843 = vunpack.c.l.s4 1966171168
    %v4844 = vunpack.c.0.s8 %v4843
    %v4845 = vlaneseq
    %v4846 = vshrl.u32 %v4845, 7
    %v4847 = vsub.s32 %v4844, %v4846
    %v4848 = vrot.slane %v4820, %v4847
    %v4849 = vcombine.low %v4827, %v4834
    %v4850 = vcombine.low %v4841, %v4848
    %v4852 = vunpack.c.l.s4 1966171168
    %v4853 = vunpack.c.0.s8 %v4852
    %v4854 = vlaneseq
    %v4855 = vshrl.u32 %v4854, 7
    %v4856 = vsub.s32 %v4853, %v4855
    %v4857 = vrot.slane %v4849, %v4856
    %v4859 = vunpack.c.l.s4 1966171168
    %v4860 = vunpack.c.0.s8 %v4859
    %v4861 = vlaneseq
    %v4862 = vshrl.u32 %v4861, 7
    %v4863 = vsub.s32 %v4860, %v4862
    %v4864 = vrot.slane %v4850, %v4863
    %v4865 = vcombine.low %v4857, %v4864
    %v4866 = vcombine.low %v2551, %v2555
    %v4867 = vcombine.low %v2559, %v2563
    %v4868 = vcombine.low %v2567, %v2571
    %v4869 = vcombine.low %v2575, %v2579
    %v4871 = vunpack.c.l.s4 1966171168
    %v4872 = vunpack.c.0.s8 %v4871
    %v4873 = vlaneseq
    %v4874 = vshrl.u32 %v4873, 7
    %v4875 = vsub.s32 %v4872, %v4874
    %v4876 = vrot.slane %v4866, %v4875
    %v4878 = vunpack.c.l.s4 1966171168
    %v4879 = vunpack.c.0.s8 %v4878
    %v4880 = vlaneseq
    %v4881 = vshrl.u32 %v4880, 7
    %v4882 = vsub.s32 %v4879, %v4881
    %v4883 = vrot.slane %v4867, %v4882
    %v4885 = vunpack.c.l.s4 1966171168
    %v4886 = vunpack.c.0.s8 %v4885
    %v4887 = vlaneseq
    %v4888 = vshrl.u32 %v4887, 7
    %v4889 = vsub.s32 %v4886, %v4888
    %v4890 = vrot.slane %v4868, %v4889
    %v4892 = vunpack.c.l.s4 1966171168
    %v4893 = vunpack.c.0.s8 %v4892
    %v4894 = vlaneseq
    %v4895 = vshrl.u32 %v4894, 7
    %v4896 = vsub.s32 %v4893, %v4895
    %v4897 = vrot.slane %v4869, %v4896
    %v4898 = vcombine.low %v4876, %v4883
    %v4899 = vcombine.low %v4890, %v4897
    %v4901 = vunpack.c.l.s4 1966171168
    %v4902 = vunpack.c.0.s8 %v4901
    %v4903 = vlaneseq
    %v4904 = vshrl.u32 %v4903, 7
    %v4905 = vsub.s32 %v4902, %v4904
    %v4906 = vrot.slane %v4898, %v4905
    %v4908 = vunpack.c.l.s4 1966171168
    %v4909 = vunpack.c.0.s8 %v4908
    %v4910 = vlaneseq
    %v4911 = vshrl.u32 %v4910, 7
    %v4912 = vsub.s32 %v4909, %v4911
    %v4913 = vrot.slane %v4899, %v4912
    %v4914 = vcombine.low %v4906, %v4913
    %v4915 = vcombine.low %v2583, %v2587
    %v4916 = vcombine.low %v2591, %v2595
    %v4917 = vcombine.low %v2599, %v2603
    %v4918 = vcombine.low %v2607, %v2611
    %v4920 = vunpack.c.l.s4 1966171168
    %v4921 = vunpack.c.0.s8 %v4920
    %v4922 = vlaneseq
    %v4923 = vshrl.u32 %v4922, 7
    %v4924 = vsub.s32 %v4921, %v4923
    %v4925 = vrot.slane %v4915, %v4924
    %v4927 = vunpack.c.l.s4 1966171168
    %v4928 = vunpack.c.0.s8 %v4927
    %v4929 = vlaneseq
    %v4930 = vshrl.u32 %v4929, 7
    %v4931 = vsub.s32 %v4928, %v4930
    %v4932 = vrot.slane %v4916, %v4931
    %v4934 = vunpack.c.l.s4 1966171168
    %v4935 = vunpack.c.0.s8 %v4934
    %v4936 = vlaneseq
    %v4937 = vshrl.u32 %v4936, 7
    %v4938 = vsub.s32 %v4935, %v4937
    %v4939 = vrot.slane %v4917, %v4938
    %v4941 = vunpack.c.l.s4 1966171168
    %v4942 = vunpack.c.0.s8 %v4941
    %v4943 = vlaneseq
    %v4944 = vshrl.u32 %v4943, 7
    %v4945 = vsub.s32 %v4942, %v4944
    %v4946 = vrot.slane %v4918, %v4945
    %v4947 = vcombine.low %v4925, %v4932
    %v4948 = vcombine.low %v4939, %v4946
    %v4950 = vunpack.c.l.s4 1966171168
    %v4951 = vunpack.c.0.s8 %v4950
    %v4952 = vlaneseq
    %v4953 = vshrl.u32 %v4952, 7
    %v4954 = vsub.s32 %v4951, %v4953
    %v4955 = vrot.slane %v4947, %v4954
    %v4957 = vunpack.c.l.s4 1966171168
    %v4958 = vunpack.c.0.s8 %v4957
    %v4959 = vlaneseq
    %v4960 = vshrl.u32 %v4959, 7
    %v4961 = vsub.s32 %v4958, %v4960
    %v4962 = vrot.slane %v4948, %v4961
    %v4963 = vcombine.low %v4955, %v4962
    %4964 = vset.pattern.permute.xlu0 0
    %4965 = vperm.xlu0 %4964, %v2660
    %v4966 = vpop.permute.xlu0 %4965
    %4967 = vset.pattern.permute.xlu0 0
    %4968 = vperm.xlu0 %4967, %v2709
    %v4969 = vpop.permute.xlu0 %4968
    %4970 = vset.pattern.permute.xlu0 0
    %4971 = vperm.xlu0 %4970, %v2758
    %v4972 = vpop.permute.xlu0 %4971
    %4973 = vset.pattern.permute.xlu0 0
    %4974 = vperm.xlu0 %4973, %v2807
    %v4975 = vpop.permute.xlu0 %4974
    %4976 = vset.pattern.permute.xlu0 0
    %4977 = vperm.xlu0 %4976, %v2856
    %v4978 = vpop.permute.xlu0 %4977
    %4979 = vset.pattern.permute.xlu0 0
    %4980 = vperm.xlu0 %4979, %v2905
    %v4981 = vpop.permute.xlu0 %4980
    %4982 = vset.pattern.permute.xlu0 0
    %4983 = vperm.xlu0 %4982, %v2954
    %v4984 = vpop.permute.xlu0 %4983
    %4985 = vset.pattern.permute.xlu0 0
    %4986 = vperm.xlu0 %4985, %v3003
    %v4987 = vpop.permute.xlu0 %4986
    %4988 = vset.pattern.permute.xlu0 0
    %4989 = vperm.xlu0 %4988, %v3052
    %v4990 = vpop.permute.xlu0 %4989
    %4991 = vset.pattern.permute.xlu0 0
    %4992 = vperm.xlu0 %4991, %v3101
    %v4993 = vpop.permute.xlu0 %4992
    %4994 = vset.pattern.permute.xlu0 0
    %4995 = vperm.xlu0 %4994, %v3150
    %v4996 = vpop.permute.xlu0 %4995
    %4997 = vset.pattern.permute.xlu0 0
    %4998 = vperm.xlu0 %4997, %v3199
    %v4999 = vpop.permute.xlu0 %4998
    %5000 = vset.pattern.permute.xlu0 0
    %5001 = vperm.xlu0 %5000, %v3248
    %v5002 = vpop.permute.xlu0 %5001
    %5003 = vset.pattern.permute.xlu0 0
    %5004 = vperm.xlu0 %5003, %v3297
    %v5005 = vpop.permute.xlu0 %5004
    %5006 = vset.pattern.permute.xlu0 0
    %5007 = vperm.xlu0 %5006, %v3346
    %v5008 = vpop.permute.xlu0 %5007
    %5009 = vset.pattern.permute.xlu0 0
    %5010 = vperm.xlu0 %5009, %v3395
    %v5011 = vpop.permute.xlu0 %5010
    %5012 = vset.pattern.permute.xlu0 0
    %5013 = vperm.xlu0 %5012, %v3444
    %v5014 = vpop.permute.xlu0 %5013
    %5015 = vset.pattern.permute.xlu0 0
    %5016 = vperm.xlu0 %5015, %v3493
    %v5017 = vpop.permute.xlu0 %5016
    %5018 = vset.pattern.permute.xlu0 0
    %5019 = vperm.xlu0 %5018, %v3542
    %v5020 = vpop.permute.xlu0 %5019
    %5021 = vset.pattern.permute.xlu0 0
    %5022 = vperm.xlu0 %5021, %v3591
    %v5023 = vpop.permute.xlu0 %5022
    %5024 = vset.pattern.permute.xlu0 0
    %5025 = vperm.xlu0 %5024, %v3640
    %v5026 = vpop.permute.xlu0 %5025
    %5027 = vset.pattern.permute.xlu0 0
    %5028 = vperm.xlu0 %5027, %v3689
    %v5029 = vpop.permute.xlu0 %5028
    %5030 = vset.pattern.permute.xlu0 0
    %5031 = vperm.xlu0 %5030, %v3738
    %v5032 = vpop.permute.xlu0 %5031
    %5033 = vset.pattern.permute.xlu0 0
    %5034 = vperm.xlu0 %5033, %v3787
    %v5035 = vpop.permute.xlu0 %5034
    %5036 = vset.pattern.permute.xlu0 0
    %5037 = vperm.xlu0 %5036, %v3836
    %v5038 = vpop.permute.xlu0 %5037
    %5039 = vset.pattern.permute.xlu0 0
    %5040 = vperm.xlu0 %5039, %v3885
    %v5041 = vpop.permute.xlu0 %5040
    %5042 = vset.pattern.permute.xlu0 0
    %5043 = vperm.xlu0 %5042, %v3934
    %v5044 = vpop.permute.xlu0 %5043
    %5045 = vset.pattern.permute.xlu0 0
    %5046 = vperm.xlu0 %5045, %v3983
    %v5047 = vpop.permute.xlu0 %5046
    %5048 = vset.pattern.permute.xlu0 0
    %5049 = vperm.xlu0 %5048, %v4032
    %v5050 = vpop.permute.xlu0 %5049
    %5051 = vset.pattern.permute.xlu0 0
    %5052 = vperm.xlu0 %5051, %v4081
    %v5053 = vpop.permute.xlu0 %5052
    %5054 = vset.pattern.permute.xlu0 0
    %5055 = vperm.xlu0 %5054, %v4130
    %v5056 = vpop.permute.xlu0 %5055
    %5057 = vset.pattern.permute.xlu0 0
    %5058 = vperm.xlu0 %5057, %v4179
    %v5059 = vpop.permute.xlu0 %5058
    %5060 = vset.pattern.permute.xlu0 0
    %5061 = vperm.xlu0 %5060, %v4228
    %v5062 = vpop.permute.xlu0 %5061
    %5063 = vset.pattern.permute.xlu0 0
    %5064 = vperm.xlu0 %5063, %v4277
    %v5065 = vpop.permute.xlu0 %5064
    %5066 = vset.pattern.permute.xlu0 0
    %5067 = vperm.xlu0 %5066, %v4326
    %v5068 = vpop.permute.xlu0 %5067
    %5069 = vset.pattern.permute.xlu0 0
    %5070 = vperm.xlu0 %5069, %v4375
    %v5071 = vpop.permute.xlu0 %5070
    %5072 = vset.pattern.permute.xlu0 0
    %5073 = vperm.xlu0 %5072, %v4424
    %v5074 = vpop.permute.xlu0 %5073
    %5075 = vset.pattern.permute.xlu0 0
    %5076 = vperm.xlu0 %5075, %v4473
    %v5077 = vpop.permute.xlu0 %5076
    %5078 = vset.pattern.permute.xlu0 0
    %5079 = vperm.xlu0 %5078, %v4522
    %v5080 = vpop.permute.xlu0 %5079
    %5081 = vset.pattern.permute.xlu0 0
    %5082 = vperm.xlu0 %5081, %v4571
    %v5083 = vpop.permute.xlu0 %5082
    %5084 = vset.pattern.permute.xlu0 0
    %5085 = vperm.xlu0 %5084, %v4620
    %v5086 = vpop.permute.xlu0 %5085
    %5087 = vset.pattern.permute.xlu0 0
    %5088 = vperm.xlu0 %5087, %v4669
    %v5089 = vpop.permute.xlu0 %5088
    %5090 = vset.pattern.permute.xlu0 0
    %5091 = vperm.xlu0 %5090, %v4718
    %v5092 = vpop.permute.xlu0 %5091
    %5093 = vset.pattern.permute.xlu0 0
    %5094 = vperm.xlu0 %5093, %v4767
    %v5095 = vpop.permute.xlu0 %5094
    %5096 = vset.pattern.permute.xlu0 0
    %5097 = vperm.xlu0 %5096, %v4816
    %v5098 = vpop.permute.xlu0 %5097
    %5099 = vset.pattern.permute.xlu0 0
    %5100 = vperm.xlu0 %5099, %v4865
    %v5101 = vpop.permute.xlu0 %5100
    %5102 = vset.pattern.permute.xlu0 0
    %5103 = vperm.xlu0 %5102, %v4914
    %v5104 = vpop.permute.xlu0 %5103
    %5105 = vset.pattern.permute.xlu0 0
    %5106 = vperm.xlu0 %5105, %v4963
    %v5107 = vpop.permute.xlu0 %5106
    %v5108 = vlaneseq
    %v5109 = vand.u32 %v5108, 127
    %v5110 = vlaneseq
    %v5111 = vshrl.u32 %v5110, 7
    %v5112 = vsub.s32 %v5109, %v5111
    %v5113 = vrot.slane %v4966, %v5112
    %v5114 = vadd.s32 %v5109, 4294967288
    %v5115 = vlaneseq
    %v5116 = vshrl.u32 %v5115, 7
    %v5117 = vsub.s32 %v5114, %v5116
    %v5118 = vrot.slane %v4969, %v5117
    %vm5119 = vcmask 130112
    %v5120 = vsel %vm5119, %v5118, %v5113
    %v5121 = vadd.s32 %v5109, 4294967280
    %v5122 = vlaneseq
    %v5123 = vshrl.u32 %v5122, 7
    %v5124 = vsub.s32 %v5121, %v5123
    %v5125 = vrot.slane %v4972, %v5124
    %vm5126 = vcmask 195712
    %v5127 = vsel %vm5126, %v5125, %v5120
    %v5128 = vadd.s32 %v5109, 4294967272
    %v5129 = vlaneseq
    %v5130 = vshrl.u32 %v5129, 7
    %v5131 = vsub.s32 %v5128, %v5130
    %v5132 = vrot.slane %v4975, %v5131
    %vm5133 = vcmask 261312
    %v5134 = vsel %vm5133, %v5132, %v5127
    %v5135 = vadd.s32 %v5109, 4294967264
    %v5136 = vlaneseq
    %v5137 = vshrl.u32 %v5136, 7
    %v5138 = vsub.s32 %v5135, %v5137
    %v5139 = vrot.slane %v4978, %v5138
    %vm5140 = vcmask 326912
    %v5141 = vsel %vm5140, %v5139, %v5134
    %v5142 = vadd.s32 %v5109, 4294967256
    %v5143 = vlaneseq
    %v5144 = vshrl.u32 %v5143, 7
    %v5145 = vsub.s32 %v5142, %v5144
    %v5146 = vrot.slane %v4981, %v5145
    %vm5147 = vcmask 392512
    %v5148 = vsel %vm5147, %v5146, %v5141
    %v5149 = vadd.s32 %v5109, 4294967248
    %v5150 = vlaneseq
    %v5151 = vshrl.u32 %v5150, 7
    %v5152 = vsub.s32 %v5149, %v5151
    %v5153 = vrot.slane %v4984, %v5152
    %vm5154 = vcmask 458112
    %v5155 = vsel %vm5154, %v5153, %v5148
    %v5156 = vadd.s32 %v5109, 4294967240
    %v5157 = vlaneseq
    %v5158 = vshrl.u32 %v5157, 7
    %v5159 = vsub.s32 %v5156, %v5158
    %v5160 = vrot.slane %v4987, %v5159
    %vm5161 = vcmask 523712
    %v5162 = vsel %vm5161, %v5160, %v5155
    %v5163 = vadd.s32 %v5109, 4294967232
    %v5164 = vlaneseq
    %v5165 = vshrl.u32 %v5164, 7
    %v5166 = vsub.s32 %v5163, %v5165
    %v5167 = vrot.slane %v4990, %v5166
    %vm5168 = vcmask 589312
    %v5169 = vsel %vm5168, %v5167, %v5162
    %v5170 = vadd.s32 %v5109, 4294967224
    %v5171 = vlaneseq
    %v5172 = vshrl.u32 %v5171, 7
    %v5173 = vsub.s32 %v5170, %v5172
    %v5174 = vrot.slane %v4993, %v5173
    %vm5175 = vcmask 654912
    %v5176 = vsel %vm5175, %v5174, %v5169
    %v5177 = vadd.s32 %v5109, 4294967216
    %v5178 = vlaneseq
    %v5179 = vshrl.u32 %v5178, 7
    %v5180 = vsub.s32 %v5177, %v5179
    %v5181 = vrot.slane %v4996, %v5180
    %vm5182 = vcmask 720512
    %v5183 = vsel %vm5182, %v5181, %v5176
    %v5184 = vadd.s32 %v5109, 4294967208
    %v5185 = vlaneseq
    %v5186 = vshrl.u32 %v5185, 7
    %v5187 = vsub.s32 %v5184, %v5186
    %v5188 = vrot.slane %v4999, %v5187
    %vm5189 = vcmask 786112
    %v5190 = vsel %vm5189, %v5188, %v5183
    %v5191 = vadd.s32 %v5109, 4294967200
    %v5192 = vlaneseq
    %v5193 = vshrl.u32 %v5192, 7
    %v5194 = vsub.s32 %v5191, %v5193
    %v5195 = vrot.slane %v5002, %v5194
    %vm5196 = vcmask 851712
    %v5197 = vsel %vm5196, %v5195, %v5190
    %v5198 = vadd.s32 %v5109, 4294967192
    %v5199 = vlaneseq
    %v5200 = vshrl.u32 %v5199, 7
    %v5201 = vsub.s32 %v5198, %v5200
    %v5202 = vrot.slane %v5005, %v5201
    %vm5203 = vcmask 917312
    %v5204 = vsel %vm5203, %v5202, %v5197
    %v5205 = vadd.s32 %v5109, 4294967184
    %v5206 = vlaneseq
    %v5207 = vshrl.u32 %v5206, 7
    %v5208 = vsub.s32 %v5205, %v5207
    %v5209 = vrot.slane %v5008, %v5208
    %vm5210 = vcmask 982912
    %v5211 = vsel %vm5210, %v5209, %v5204
    %v5212 = vadd.s32 %v5109, 4294967176
    %v5213 = vlaneseq
    %v5214 = vshrl.u32 %v5213, 7
    %v5215 = vsub.s32 %v5212, %v5214
    %v5216 = vrot.slane %v5011, %v5215
    %vm5217 = vcmask 1048512
    %v5218 = vsel %vm5217, %v5216, %v5211
    %v5219 = vlaneseq
    %v5220 = vshrl.u32 %v5219, 7
    %v5221 = vsub.s32 %v5109, %v5220
    %v5222 = vrot.slane %v5014, %v5221
    %v5223 = vlaneseq
    %v5224 = vshrl.u32 %v5223, 7
    %v5225 = vsub.s32 %v5114, %v5224
    %v5226 = vrot.slane %v5017, %v5225
    %v5227 = vsel %vm5119, %v5226, %v5222
    %v5228 = vlaneseq
    %v5229 = vshrl.u32 %v5228, 7
    %v5230 = vsub.s32 %v5121, %v5229
    %v5231 = vrot.slane %v5020, %v5230
    %v5232 = vsel %vm5126, %v5231, %v5227
    %v5233 = vlaneseq
    %v5234 = vshrl.u32 %v5233, 7
    %v5235 = vsub.s32 %v5128, %v5234
    %v5236 = vrot.slane %v5023, %v5235
    %v5237 = vsel %vm5133, %v5236, %v5232
    %v5238 = vlaneseq
    %v5239 = vshrl.u32 %v5238, 7
    %v5240 = vsub.s32 %v5135, %v5239
    %v5241 = vrot.slane %v5026, %v5240
    %v5242 = vsel %vm5140, %v5241, %v5237
    %v5243 = vlaneseq
    %v5244 = vshrl.u32 %v5243, 7
    %v5245 = vsub.s32 %v5142, %v5244
    %v5246 = vrot.slane %v5029, %v5245
    %v5247 = vsel %vm5147, %v5246, %v5242
    %v5248 = vlaneseq
    %v5249 = vshrl.u32 %v5248, 7
    %v5250 = vsub.s32 %v5149, %v5249
    %v5251 = vrot.slane %v5032, %v5250
    %v5252 = vsel %vm5154, %v5251, %v5247
    %v5253 = vlaneseq
    %v5254 = vshrl.u32 %v5253, 7
    %v5255 = vsub.s32 %v5156, %v5254
    %v5256 = vrot.slane %v5035, %v5255
    %v5257 = vsel %vm5161, %v5256, %v5252
    %v5258 = vlaneseq
    %v5259 = vshrl.u32 %v5258, 7
    %v5260 = vsub.s32 %v5163, %v5259
    %v5261 = vrot.slane %v5038, %v5260
    %v5262 = vsel %vm5168, %v5261, %v5257
    %v5263 = vlaneseq
    %v5264 = vshrl.u32 %v5263, 7
    %v5265 = vsub.s32 %v5170, %v5264
    %v5266 = vrot.slane %v5041, %v5265
    %v5267 = vsel %vm5175, %v5266, %v5262
    %v5268 = vlaneseq
    %v5269 = vshrl.u32 %v5268, 7
    %v5270 = vsub.s32 %v5177, %v5269
    %v5271 = vrot.slane %v5044, %v5270
    %v5272 = vsel %vm5182, %v5271, %v5267
    %v5273 = vlaneseq
    %v5274 = vshrl.u32 %v5273, 7
    %v5275 = vsub.s32 %v5184, %v5274
    %v5276 = vrot.slane %v5047, %v5275
    %v5277 = vsel %vm5189, %v5276, %v5272
    %v5278 = vlaneseq
    %v5279 = vshrl.u32 %v5278, 7
    %v5280 = vsub.s32 %v5191, %v5279
    %v5281 = vrot.slane %v5050, %v5280
    %v5282 = vsel %vm5196, %v5281, %v5277
    %v5283 = vlaneseq
    %v5284 = vshrl.u32 %v5283, 7
    %v5285 = vsub.s32 %v5198, %v5284
    %v5286 = vrot.slane %v5053, %v5285
    %v5287 = vsel %vm5203, %v5286, %v5282
    %v5288 = vlaneseq
    %v5289 = vshrl.u32 %v5288, 7
    %v5290 = vsub.s32 %v5205, %v5289
    %v5291 = vrot.slane %v5056, %v5290
    %v5292 = vsel %vm5210, %v5291, %v5287
    %v5293 = vlaneseq
    %v5294 = vshrl.u32 %v5293, 7
    %v5295 = vsub.s32 %v5212, %v5294
    %v5296 = vrot.slane %v5059, %v5295
    %v5297 = vsel %vm5217, %v5296, %v5292
    %v5298 = vlaneseq
    %v5299 = vshrl.u32 %v5298, 7
    %v5300 = vsub.s32 %v5109, %v5299
    %v5301 = vrot.slane %v5062, %v5300
    %v5302 = vlaneseq
    %v5303 = vshrl.u32 %v5302, 7
    %v5304 = vsub.s32 %v5114, %v5303
    %v5305 = vrot.slane %v5065, %v5304
    %v5306 = vsel %vm5119, %v5305, %v5301
    %v5307 = vlaneseq
    %v5308 = vshrl.u32 %v5307, 7
    %v5309 = vsub.s32 %v5121, %v5308
    %v5310 = vrot.slane %v5068, %v5309
    %v5311 = vsel %vm5126, %v5310, %v5306
    %v5312 = vlaneseq
    %v5313 = vshrl.u32 %v5312, 7
    %v5314 = vsub.s32 %v5128, %v5313
    %v5315 = vrot.slane %v5071, %v5314
    %v5316 = vsel %vm5133, %v5315, %v5311
    %v5317 = vlaneseq
    %v5318 = vshrl.u32 %v5317, 7
    %v5319 = vsub.s32 %v5135, %v5318
    %v5320 = vrot.slane %v5074, %v5319
    %v5321 = vsel %vm5140, %v5320, %v5316
    %v5322 = vlaneseq
    %v5323 = vshrl.u32 %v5322, 7
    %v5324 = vsub.s32 %v5142, %v5323
    %v5325 = vrot.slane %v5077, %v5324
    %v5326 = vsel %vm5147, %v5325, %v5321
    %v5327 = vlaneseq
    %v5328 = vshrl.u32 %v5327, 7
    %v5329 = vsub.s32 %v5149, %v5328
    %v5330 = vrot.slane %v5080, %v5329
    %v5331 = vsel %vm5154, %v5330, %v5326
    %v5332 = vlaneseq
    %v5333 = vshrl.u32 %v5332, 7
    %v5334 = vsub.s32 %v5156, %v5333
    %v5335 = vrot.slane %v5083, %v5334
    %v5336 = vsel %vm5161, %v5335, %v5331
    %v5337 = vlaneseq
    %v5338 = vshrl.u32 %v5337, 7
    %v5339 = vsub.s32 %v5163, %v5338
    %v5340 = vrot.slane %v5086, %v5339
    %v5341 = vsel %vm5168, %v5340, %v5336
    %v5342 = vlaneseq
    %v5343 = vshrl.u32 %v5342, 7
    %v5344 = vsub.s32 %v5170, %v5343
    %v5345 = vrot.slane %v5089, %v5344
    %v5346 = vsel %vm5175, %v5345, %v5341
    %v5347 = vlaneseq
    %v5348 = vshrl.u32 %v5347, 7
    %v5349 = vsub.s32 %v5177, %v5348
    %v5350 = vrot.slane %v5092, %v5349
    %v5351 = vsel %vm5182, %v5350, %v5346
    %v5352 = vlaneseq
    %v5353 = vshrl.u32 %v5352, 7
    %v5354 = vsub.s32 %v5184, %v5353
    %v5355 = vrot.slane %v5095, %v5354
    %v5356 = vsel %vm5189, %v5355, %v5351
    %v5357 = vlaneseq
    %v5358 = vshrl.u32 %v5357, 7
    %v5359 = vsub.s32 %v5191, %v5358
    %v5360 = vrot.slane %v5098, %v5359
    %v5361 = vsel %vm5196, %v5360, %v5356
    %v5362 = vlaneseq
    %v5363 = vshrl.u32 %v5362, 7
    %v5364 = vsub.s32 %v5198, %v5363
    %v5365 = vrot.slane %v5101, %v5364
    %v5366 = vsel %vm5203, %v5365, %v5361
    %v5367 = vlaneseq
    %v5368 = vshrl.u32 %v5367, 7
    %v5369 = vsub.s32 %v5205, %v5368
    %v5370 = vrot.slane %v5104, %v5369
    %v5371 = vsel %vm5210, %v5370, %v5366
    %v5372 = vlaneseq
    %v5373 = vshrl.u32 %v5372, 7
    %v5374 = vsub.s32 %v5212, %v5373
    %v5375 = vrot.slane %v5107, %v5374
    %v5376 = vsel %vm5217, %v5375, %v5371
    %v5377 = vcombine.low %v5218, %v5297
    %v5379 = vunpack.c.l.s4 1966171168
    %v5380 = vunpack.c.0.s8 %v5379
    %v5381 = vlaneseq
    %v5382 = vshrl.u32 %v5381, 7
    %v5383 = vsub.s32 %v5380, %v5382
    %v5384 = vrot.slane %v5377, %v5383
    %v5386 = vunpack.c.l.s4 1966171168
    %v5387 = vunpack.c.0.s8 %v5386
    %v5388 = vlaneseq
    %v5389 = vshrl.u32 %v5388, 7
    %v5390 = vsub.s32 %v5387, %v5389
    %v5391 = vrot.slane %v5376, %v5390
    %v5392 = vcombine.low %v5384, %v5391
    %v5394 = vunpack.c.l.s4 1966171168
    %v5395 = vunpack.c.0.s8 %v5394
    %v5396 = vlaneseq
    %v5397 = vshrl.u32 %v5396, 7
    %v5398 = vsub.s32 %v5395, %v5397
    %v5399 = vrot.slane %v5392, %v5398
    %v5401 = vlaneseq
    %vm5402 = vcmp.ge.s32.totalorder %v5401, 0
    %vm5403 = vcmp.lt.s32.totalorder %v5401, 384
    %vm5404 = vmand %vm5402, %vm5403
    %5405 = vst.msk [vmem:[#allocation3] sm:$0x7] %vm5404, %v5399
    // Predicated region
    $region30: #{tpu_custom_call.1} parent=1 // pred_check
      _
    $region31: #{tpu_custom_call.1} parent=1 // pred_check_branch
      %5407 = sbr.rel (0) target = $region33
    $region32: #{tpu_custom_call.1} parent=1 // pred_region
      %s5409 = ssub.s32 48, 48
      %5410 = vsyncadd [#allocation4], %s5409
      %s5412 = sshll.u32 [#allocation3], 4
      %s5413 = int_to_ptr.vmem [resolvable:$true] %s5412
      %5415 = dma.vmem_to_hbm [thread:$0]  %s5413, 48, %s7, [#allocation4]
    $region33: #{tpu_custom_call.1} parent=1 // pred_fallthru
      _
    // Predicated region
    $region34: #{tpu_custom_call.1} parent=1 // pred_check
      _
    $region35: #{tpu_custom_call.1} parent=1 // pred_check_branch
      %5417 = sbr.rel (0) target = $region37
    $region36: #{tpu_custom_call.1} parent=1 // pred_region
      %5418 = dma.done [#allocation4], 48
    $region37: #{tpu_custom_call.1} parent=1 // pred_fallthru
      _
    %5419 = vsyncpa [#allocation4], 1

</llo_original>
